<compile_context>
chip_gen: v6e
topology: v6e:2x2x1
jax: 0.10.0
libtpu: 0.0.40
codegen_flags: <defaults>
</compile_context>

<pallas_src>
import math

import jax
import jax.numpy as jnp
import numpy as np
from jax.experimental import pallas as pl
from jax.experimental.pallas import tpu as pltpu

NUM_HEADS = 4
LN_EPS = 1e-12


def _layer_norm(x, g, b):
    mu = jnp.mean(x, axis=-1, keepdims=True)
    var = jnp.mean((x - mu) ** 2, axis=-1, keepdims=True)
    return (x - mu) * jax.lax.rsqrt(var + LN_EPS) * g + b


def _gelu_exact(x):
    # HF BERT default activation is exact erf-GELU.
    # TODO(synk): on v5e, jax.nn.gelu(approximate=True) moves the transcendental
    # to the EUP slot if exact-erf matching is negotiable.
    return 0.5 * x * (1.0 + jax.lax.erf(x * (1.0 / math.sqrt(2.0))))


def _split_heads(t2d, n, dh_p):
    """(S, n*dh_p) -> (n, S, dh_p).

    dh_p is a multiple of 128, so every slice is lane-aligned: the stack is a
    pure copy onto a new major axis (no XLU lane relayout) and the batched
    attention einsums see an MXU-native K=dh_p contraction."""
    return jnp.stack([t2d[:, i * dh_p:(i + 1) * dh_p] for i in range(n)], axis=0)


def _merge_heads(t3d):
    """(nh, S, dh_p) -> (S, nh*dh_p): aligned lane concat (inverse of split)."""
    return jnp.concatenate([t3d[i] for i in range(t3d.shape[0])], axis=-1)


def _attention(qh, kh, vh, add_mask, probs_ref, wo, bo):
    """Multi-head attention on head-major bf16 q/k/v.

    qh: (nh, q, dh_p), kh/vh: (nh, k, dh_p) bf16; wo: (nh*dh_p, H) bf16;
    bo: (1, H) f32.  All heads go through single batched dot_generals; the
    probabilities are written with ONE lane-dense store; the head merge is
    folded into a single 2-D output-projection matmul (no (nh, S, H)
    intermediate, no per-head sum).  1/sqrt(dh) is pre-folded into Wq/bq."""
    s = jnp.einsum('hqd,hkd->hqk', qh, kh, preferred_element_type=jnp.float32)
    if add_mask is not None:
        s = s + add_mask                       # (1, Sk) additive mask, added once
    s = s - jnp.max(s, axis=-1, keepdims=True)
    p = jnp.exp(s)
    # EUP approx reciprocal (~free slot); rows sum to 1 only to ~1e-3 -- switch
    # to approx=False if bit-faithful HF attention probabilities are required.
    p = p * pl.reciprocal(jnp.sum(p, axis=-1, keepdims=True), approx=True)
    probs_ref[0] = p.astype(probs_ref.dtype)   # one store for all heads
    c = jnp.einsum('hqk,hkd->hqd', p.astype(jnp.bfloat16), vh,
                   preferred_element_type=jnp.float32)
    return jnp.dot(_merge_heads(c.astype(jnp.bfloat16)), wo,
                   preferred_element_type=jnp.float32) + bo


def fused_layer_kernel(
    # per-batch activations: q-tile of x, full x (self K/V), mask, encoder ctx
    xq_ref, xf_ref, mask_ref, ctx_ref,
    # self-attention (Q; fused K|V) + output dense + LN1
    wq_ref, bq_ref, wkv_ref, bkv_ref, wo_ref, bo_ref, g1_ref, b1_ref,
    # cross-attention (Q; fused K|V) + output dense + LN2
    cwq_ref, cbq_ref, cwkv_ref, cbkv_ref, cwo_ref, cbo_ref, g2_ref, b2_ref,
    # FFN (intermediate + output) + LN3
    wi_ref, bi_ref, wo2_ref, bo2_ref, g3_ref, b3_ref,
    # outputs
    out_ref, sprobs_ref, cprobs_ref,
    # per-batch K|V heads carried across the q-tile axis (VMEM scratch)
    kv_self_ref, kv_cross_ref,
):
    nh = NUM_HEADS
    dh_p = kv_self_ref.shape[-1]

    # ---- K/V for this batch element: projected once (first q tile) and kept in
    #      VMEM scratch for the remaining q tiles (q-tile axis is "arbitrary"). --
    @pl.when(pl.program_id(1) == 0)
    def _():
        xf_bf = xf_ref[0].astype(jnp.bfloat16)                  # (S, H)
        kv = jnp.dot(xf_bf, wkv_ref[...],
                     preferred_element_type=jnp.float32) + bkv_ref[...]
        kv_self_ref[...] = _split_heads(kv, 2 * nh, dh_p).astype(jnp.bfloat16)
        ctx_bf = ctx_ref[0].astype(jnp.bfloat16)                # (Sc, H)
        ckv = jnp.dot(ctx_bf, cwkv_ref[...],
                      preferred_element_type=jnp.float32) + cbkv_ref[...]
        kv_cross_ref[...] = _split_heads(ckv, 2 * nh, dh_p).astype(jnp.bfloat16)

    x = xq_ref[0]                      # (tS, H) f32
    x_bf = x.astype(jnp.bfloat16)      # cast once, reused below
    add_mask = mask_ref[0]             # (1, S)  additive

    # ---- self attention + BertSelfOutput (dense, residual, LayerNorm) ----
    q = jnp.dot(x_bf, wq_ref[...], preferred_element_type=jnp.float32) + bq_ref[...]
    qh = _split_heads(q, nh, dh_p).astype(jnp.bfloat16)
    kv_s = kv_self_ref[...]
    a1 = _attention(qh, kv_s[:nh], kv_s[nh:], add_mask, sprobs_ref,
                    wo_ref[...], bo_ref[...])
    a1 = _layer_norm(a1 + x, g1_ref[...], b1_ref[...])
    a1_bf = a1.astype(jnp.bfloat16)    # reused for the cross-attn Q projection

    # ---- cross attention (K/V from encoder context, no mask) ----
    q2 = jnp.dot(a1_bf, cwq_ref[...],
                 preferred_element_type=jnp.float32) + cbq_ref[...]
    q2h = _split_heads(q2, nh, dh_p).astype(jnp.bfloat16)
    kv_c = kv_cross_ref[...]
    a2 = _attention(q2h, kv_c[:nh], kv_c[nh:], None, cprobs_ref,
                    cwo_ref[...], cbo_ref[...])
    a2 = _layer_norm(a2 + a1, g2_ref[...], b2_ref[...])
    a2_bf = a2.astype(jnp.bfloat16)    # reused for the FFN input

    # ---- intermediate (Linear + exact GELU) + output (Linear, residual, LN) ----
    h1 = _gelu_exact(jnp.dot(a2_bf, wi_ref[...],
                             preferred_element_type=jnp.float32) + bi_ref[...])
    y = jnp.dot(h1.astype(jnp.bfloat16), wo2_ref[...],
                preferred_element_type=jnp.float32) + bo2_ref[...] + a2
    out_ref[0] = _layer_norm(y, g3_ref[...], b3_ref[...]).astype(out_ref.dtype)


def pack_params(params, *, head_pad=128):
    """Pack the 26 raw f32 layer parameters into kernel-friendly form:
       * each head's Q/K/V columns zero-padded to a 128-lane-aligned width dh_p
         (no XLU relayout when splitting/merging heads, MXU-native contraction),
       * K|V fused into one weight, 1/sqrt(dh) folded into the Q weight/bias,
       * output-dense weights row-padded to (nh*dh_p, H) with zero rows so the
         head merge is a single 2-D matmul,
       * weight matrices cast to bfloat16 (MXU-native, halves weight VMEM);
         biases / LayerNorm params stay f32.
    """
    (wq, bq, wk, bk, wv, bv, wo, bo, g1, b1,
     cwq, cbq, cwk, cbk, cwv, cbv, cwo, cbo, g2, b2,
     wi, bi, wo2, bo2, g3, b3) = params
    H = wq.shape[0]
    dh = H // NUM_HEADS
    dh_p = -(-dh // head_pad) * head_pad
    scale = 1.0 / math.sqrt(dh)
    bf = lambda a: a.astype(jnp.bfloat16)
    f32 = lambda a: a.astype(jnp.float32)

    def pad_cols(w):   # (H_in, nh*dh) -> (H_in, nh*dh_p), zero-pad per head
        w3 = w.reshape(w.shape[0], NUM_HEADS, dh)
        w3 = jnp.pad(w3, ((0, 0), (0, 0), (0, dh_p - dh)))
        return w3.reshape(w.shape[0], NUM_HEADS * dh_p)

    def pad_bias(b):   # (1, nh*dh) -> (1, nh*dh_p)
        b3 = b.reshape(1, NUM_HEADS, dh)
        b3 = jnp.pad(b3, ((0, 0), (0, 0), (0, dh_p - dh)))
        return b3.reshape(1, NUM_HEADS * dh_p)

    def pad_rows(w):   # (nh*dh, H) -> (nh*dh_p, H), zero-pad per head rows
        w3 = w.reshape(NUM_HEADS, dh, w.shape[1])
        w3 = jnp.pad(w3, ((0, 0), (0, dh_p - dh), (0, 0)))
        return w3.reshape(NUM_HEADS * dh_p, w.shape[1])

    return [
        # self attention: Wq (scaled), bq (scaled), fused K|V, fused K|V bias,
        # row-padded Wo, bo, LN1 gamma/beta
        bf(pad_cols(wq * scale)), f32(pad_bias(bq * scale)),
        bf(jnp.concatenate([pad_cols(wk), pad_cols(wv)], axis=1)),
        f32(jnp.concatenate([pad_bias(bk), pad_bias(bv)], axis=1)),
        bf(pad_rows(wo)), f32(bo), f32(g1), f32(b1),
        # cross attention
        bf(pad_cols(cwq * scale)), f32(pad_bias(cbq * scale)),
        bf(jnp.concatenate([pad_cols(cwk), pad_cols(cwv)], axis=1)),
        f32(jnp.concatenate([pad_bias(cbk), pad_bias(cbv)], axis=1)),
        bf(pad_rows(cwo)), f32(cbo), f32(g2), f32(b2),
        # FFN
        bf(wi), f32(bi), bf(wo2), f32(bo2), f32(g3), f32(b3),
    ]


def fused_transformer_layer(x, attention_mask, context, params, *,
                            q_tile=256, head_pad=128,
                            probs_dtype=jnp.bfloat16):
    """params: ordered list of 26 f32 arrays (see build_params).

    q_tile:   rows of x processed per grid step (bounds live activations /
              scores / FFN intermediates at real sequence lengths).
    head_pad: per-head lane padding; 128 suits v5e's 128-wide MXU, 256 matches
              the v6e/v7x 256-wide MXU.
    probs_dtype: dtype of the exported attention probabilities (bfloat16 halves
              the largest HBM writeback; float32 matches HF exactly).
    """
    B, S, H = x.shape
    Sc = context.shape[1]
    I = params[20].shape[1]
    dh = H // NUM_HEADS
    dh_p = -(-dh // head_pad) * head_pad
    Hp = NUM_HEADS * dh_p

    # q tile must divide S and keep the sublane dim a multiple of 8 (or == S).
    tS = min(q_tile, S)
    if S % tS != 0 or (tS != S and tS % 8 != 0):
        tS = S
    n_q = S // tS

    mask3 = attention_mask.reshape(B, 1, S).astype(jnp.float32)
    packed = pack_params(params, head_pad=head_pad)

    # Weights: constant block index -> fetched once; single-buffered so the
    # bf16 weights (~19 MB at BERT scale) are not duplicated by the pipeline.
    def w_spec(a):
        nd = a.ndim
        return pl.BlockSpec(a.shape, lambda b, q, _nd=nd: (0,) * _nd,
                            pipeline_mode=pl.Buffered(1))

    in_specs = [
        pl.BlockSpec((1, tS, H), lambda b, q: (b, q, 0)),   # x: q tile (Q / resid)
        pl.BlockSpec((1, S, H), lambda b, q: (b, 0, 0)),    # x: full (self K/V)
        pl.BlockSpec((1, 1, S), lambda b, q: (b, 0, 0)),    # additive mask
        pl.BlockSpec((1, Sc, H), lambda b, q: (b, 0, 0)),   # encoder context
    ] + [w_spec(p) for p in packed]

    out_shapes = (
        jax.ShapeDtypeStruct((B, S, H), jnp.float32),
        jax.ShapeDtypeStruct((B, NUM_HEADS, S, S), probs_dtype),
        jax.ShapeDtypeStruct((B, NUM_HEADS, S, Sc), probs_dtype),
    )
    # TODO(synk): if S / Sc are not multiples of 128 at real scale, pad the prob
    # outputs' last dim so the stores stay unmasked lane-dense `vst`.
    out_specs = (
        pl.BlockSpec((1, tS, H), lambda b, q: (b, q, 0)),
        pl.BlockSpec((1, NUM_HEADS, tS, S), lambda b, q: (b, 0, q, 0)),
        pl.BlockSpec((1, NUM_HEADS, tS, Sc), lambda b, q: (b, 0, q, 0)),
    )

    scratch_shapes = [
        pltpu.VMEM((2 * NUM_HEADS, S, dh_p), jnp.bfloat16),    # self  K|V heads
        pltpu.VMEM((2 * NUM_HEADS, Sc, dh_p), jnp.bfloat16),   # cross K|V heads
    ]

    # Never request the whole physical VMEM (v7x only has 64 MiB per TensorCore);
    # leave headroom for Mosaic internal scratch / semaphores.
    try:
        phys_vmem = int(pltpu.get_tpu_info().vmem_capacity_bytes)
    except Exception:  # query unavailable -> assume the smallest (v7x) budget
        phys_vmem = 64 * 1024 * 1024
    vmem_limit = min(int(phys_vmem * 0.8), 100 * 1024 * 1024)

    # Advisory cost estimate so XLA schedules sensibly around the fused call.
    mm_flops = 2 * B * (
        3 * S * H * Hp + 2 * S * S * Hp + S * Hp * H              # self attention
        + S * H * Hp + 2 * Sc * H * Hp + 2 * S * Sc * Hp + S * Hp * H  # cross attn
        + 2 * S * H * I)                                           # FFN
    transcendentals = B * (NUM_HEADS * S * (S + Sc) + S * I + 3 * S)
    bytes_accessed = int(
        sum(int(np.prod(a.shape)) * a.dtype.itemsize for a in packed)
        + (2 * B * S * H + B * S + B * Sc * H + B * S * H) * 4
        + B * NUM_HEADS * S * (S + Sc) * jnp.dtype(probs_dtype).itemsize)

    return pl.pallas_call(
        fused_layer_kernel,
        out_shape=out_shapes,
        grid_spec=pltpu.PrefetchScalarGridSpec(
            num_scalar_prefetch=0,
            grid=(B, n_q),
            in_specs=in_specs,
            out_specs=out_specs,
            scratch_shapes=scratch_shapes,
        ),
        compiler_params=pltpu.CompilerParams(
            # batch axis is megacore-shardable; the q-tile axis is serial so the
            # per-batch K/V scratch written at q == 0 is valid for later tiles.
            dimension_semantics=("parallel", "arbitrary"),
            vmem_limit_bytes=vmem_limit,
        ),
        cost_estimate=pl.CostEstimate(flops=int(mm_flops),
                                      transcendentals=int(transcendentals),
                                      bytes_accessed=bytes_accessed),
    )(x, x, mask3, context, *packed)


# ----------------------------- reference (plain JAX) -----------------------------
def reference(x, attention_mask, context, params):
    (wq, bq, wk, bk, wv, bv, wo, bo, g1, b1,
     cwq, cbq, cwk, cbk, cwv, cbv, cwo, cbo, g2, b2,
     wi, bi, wo2, bo2, g3, b3) = params
    B, S, H = x.shape
    dh = H // NUM_HEADS

    def mha(q_src, kv_src, wq, bq, wk, bk, wv, bv, mask):
        Sq, Skv = q_src.shape[1], kv_src.shape[1]
        q = (q_src @ wq + bq).reshape(B, Sq, NUM_HEADS, dh).transpose(0, 2, 1, 3)
        k = (kv_src @ wk + bk).reshape(B, Skv, NUM_HEADS, dh).transpose(0, 2, 1, 3)
        v = (kv_src @ wv + bv).reshape(B, Skv, NUM_HEADS, dh).transpose(0, 2, 1, 3)
        s = jnp.einsum('bhqd,bhkd->bhqk', q, k) / math.sqrt(dh)
        if mask is not None:
            s = s + mask
        p = jax.nn.softmax(s, axis=-1)
        ctx = jnp.einsum('bhqk,bhkd->bhqd', p, v).transpose(0, 2, 1, 3).reshape(B, Sq, H)
        return ctx, p

    c1, sp = mha(x, x, wq, bq, wk, bk, wv, bv, attention_mask)
    a1 = _layer_norm(c1 @ wo + bo + x, g1, b1)
    c2, cp = mha(a1, context, cwq, cbq, cwk, cbk, cwv, cbv, None)
    a2 = _layer_norm(c2 @ cwo + cbo + a1, g2, b2)
    h1 = _gelu_exact(a2 @ wi + bi)
    y = _layer_norm(h1 @ wo2 + bo2 + a2, g3, b3)
    return y, sp, cp


def build_params(key, H, I):
    ks = iter(jax.random.split(key, 20))
    n = lambda s: (0.02 * jax.random.normal(next(ks), s)).astype(jnp.float32)
    ones = lambda s: jnp.ones(s, jnp.float32)
    zeros = lambda s: jnp.zeros(s, jnp.float32)
    return [
        # self-attention: Wq, bq, Wk, bk, Wv, bv, Wo, bo, LN1 gamma/beta
        n((H, H)), n((1, H)), n((H, H)), n((1, H)), n((H, H)), n((1, H)),
        n((H, H)), n((1, H)), ones((1, H)), zeros((1, H)),
        # cross-attention: Wq, bq, Wk, bk, Wv, bv, Wo, bo, LN2 gamma/beta
        n((H, H)), n((1, H)), n((H, H)), n((1, H)), n((H, H)), n((1, H)),
        n((H, H)), n((1, H)), ones((1, H)), zeros((1, H)),
        # FFN: Wi, bi, Wo, bo, LN3 gamma/beta
        n((H, I)), n((1, I)), n((I, H)), n((1, H)), ones((1, H)), zeros((1, H)),
    ]


if __name__ == "__main__":
    B, S, Sc, H, I = 2, 8, 8, 32, 64

    key = jax.random.PRNGKey(0)
    kx, kc, kp = jax.random.split(key, 3)
    x = jax.random.normal(kx, (B, S, H), dtype=jnp.float32)
    context = jax.random.normal(kc, (B, Sc, H), dtype=jnp.float32)

    # additive attention mask [B, 1, 1, S]: batch 1 has its last 2 tokens masked out
    keep = jnp.ones((B, S), jnp.float32).at[1, S - 2:].set(0.0)
    attention_mask = ((1.0 - keep) * -1e9)[:, None, None, :]

    params = build_params(kp, H, I)

    out, sprobs, cprobs = fused_transformer_layer(x, attention_mask, context, params)
    jax.block_until_ready((out, sprobs, cprobs))

    ref_out, ref_sp, ref_cp = reference(x, attention_mask, context, params)
    np.testing.assert_allclose(np.asarray(out), np.asarray(ref_out),
                               rtol=5e-2, atol=5e-2)
    np.testing.assert_allclose(np.asarray(sprobs.astype(jnp.float32)),
                               np.asarray(ref_sp), rtol=5e-2, atol=5e-2)
    np.testing.assert_allclose(np.asarray(cprobs.astype(jnp.float32)),
                               np.asarray(ref_cp), rtol=5e-2, atol=5e-2)
    assert out.shape == (B, S, H)
    assert sprobs.shape == (B, NUM_HEADS, S, S)
    assert cprobs.shape == (B, NUM_HEADS, S, Sc)

    print("KERNEL_OK")
</pallas_src>

<mosaic_0001>
module attributes {stable_mosaic.version = 11 : i64} {
  func.func @fused_layer_kernel(%arg0: i32, %arg1: i32, %arg2: memref<1x8x32xf32, #tpu.memory_space<vmem>>, %arg3: memref<1x8x32xf32, #tpu.memory_space<vmem>>, %arg4: memref<1x1x8xf32, #tpu.memory_space<vmem>>, %arg5: memref<1x8x32xf32, #tpu.memory_space<vmem>>, %arg6: memref<32x512xbf16, #tpu.memory_space<vmem>>, %arg7: memref<1x512xf32, #tpu.memory_space<vmem>>, %arg8: memref<32x1024xbf16, #tpu.memory_space<vmem>>, %arg9: memref<1x1024xf32, #tpu.memory_space<vmem>>, %arg10: memref<512x32xbf16, #tpu.memory_space<vmem>>, %arg11: memref<1x32xf32, #tpu.memory_space<vmem>>, %arg12: memref<1x32xf32, #tpu.memory_space<vmem>>, %arg13: memref<1x32xf32, #tpu.memory_space<vmem>>, %arg14: memref<32x512xbf16, #tpu.memory_space<vmem>>, %arg15: memref<1x512xf32, #tpu.memory_space<vmem>>, %arg16: memref<32x1024xbf16, #tpu.memory_space<vmem>>, %arg17: memref<1x1024xf32, #tpu.memory_space<vmem>>, %arg18: memref<512x32xbf16, #tpu.memory_space<vmem>>, %arg19: memref<1x32xf32, #tpu.memory_space<vmem>>, %arg20: memref<1x32xf32, #tpu.memory_space<vmem>>, %arg21: memref<1x32xf32, #tpu.memory_space<vmem>>, %arg22: memref<32x64xbf16, #tpu.memory_space<vmem>>, %arg23: memref<1x64xf32, #tpu.memory_space<vmem>>, %arg24: memref<64x32xbf16, #tpu.memory_space<vmem>>, %arg25: memref<1x32xf32, #tpu.memory_space<vmem>>, %arg26: memref<1x32xf32, #tpu.memory_space<vmem>>, %arg27: memref<1x32xf32, #tpu.memory_space<vmem>>, %arg28: memref<1x8x32xf32, #tpu.memory_space<vmem>>, %arg29: memref<1x4x8x8xbf16, #tpu.memory_space<vmem>>, %arg30: memref<1x4x8x8xbf16, #tpu.memory_space<vmem>>, %arg31: memref<8x8x128xbf16, #tpu.memory_space<vmem>>, %arg32: memref<8x8x128xbf16, #tpu.memory_space<vmem>>) attributes {dimension_semantics = [#tpu.dimension_semantics<parallel>, #tpu.dimension_semantics<arbitrary>], iteration_bounds = array<i64: 2, 1>, scalar_prefetch = 0 : i64, scratch_operands = 2 : i64, tpu.core_type = #tpu.core_type<tc>, window_params = [{transform_indices = @transform_0, window_bounds = array<i64: 1, 8, 32>}, {transform_indices = @transform_1, window_bounds = array<i64: 1, 8, 32>}, {transform_indices = @transform_2, window_bounds = array<i64: 1, 1, 8>}, {transform_indices = @transform_3, window_bounds = array<i64: 1, 8, 32>}, {pipeline_mode = #tpu.pipeline_mode<synchronous>, transform_indices = @transform_4, window_bounds = array<i64: 32, 512>}, {pipeline_mode = #tpu.pipeline_mode<synchronous>, transform_indices = @transform_5, window_bounds = array<i64: 1, 512>}, {pipeline_mode = #tpu.pipeline_mode<synchronous>, transform_indices = @transform_6, window_bounds = array<i64: 32, 1024>}, {pipeline_mode = #tpu.pipeline_mode<synchronous>, transform_indices = @transform_7, window_bounds = array<i64: 1, 1024>}, {pipeline_mode = #tpu.pipeline_mode<synchronous>, transform_indices = @transform_8, window_bounds = array<i64: 512, 32>}, {pipeline_mode = #tpu.pipeline_mode<synchronous>, transform_indices = @transform_9, window_bounds = array<i64: 1, 32>}, {pipeline_mode = #tpu.pipeline_mode<synchronous>, transform_indices = @transform_10, window_bounds = array<i64: 1, 32>}, {pipeline_mode = #tpu.pipeline_mode<synchronous>, transform_indices = @transform_11, window_bounds = array<i64: 1, 32>}, {pipeline_mode = #tpu.pipeline_mode<synchronous>, transform_indices = @transform_12, window_bounds = array<i64: 32, 512>}, {pipeline_mode = #tpu.pipeline_mode<synchronous>, transform_indices = @transform_13, window_bounds = array<i64: 1, 512>}, {pipeline_mode = #tpu.pipeline_mode<synchronous>, transform_indices = @transform_14, window_bounds = array<i64: 32, 1024>}, {pipeline_mode = #tpu.pipeline_mode<synchronous>, transform_indices = @transform_15, window_bounds = array<i64: 1, 1024>}, {pipeline_mode = #tpu.pipeline_mode<synchronous>, transform_indices = @transform_16, window_bounds = array<i64: 512, 32>}, {pipeline_mode = #tpu.pipeline_mode<synchronous>, transform_indices = @transform_17, window_bounds = array<i64: 1, 32>}, {pipeline_mode = #tpu.pipeline_mode<synchronous>, transform_indices = @transform_18, window_bounds = array<i64: 1, 32>}, {pipeline_mode = #tpu.pipeline_mode<synchronous>, transform_indices = @transform_19, window_bounds = array<i64: 1, 32>}, {pipeline_mode = #tpu.pipeline_mode<synchronous>, transform_indices = @transform_20, window_bounds = array<i64: 32, 64>}, {pipeline_mode = #tpu.pipeline_mode<synchronous>, transform_indices = @transform_21, window_bounds = array<i64: 1, 64>}, {pipeline_mode = #tpu.pipeline_mode<synchronous>, transform_indices = @transform_22, window_bounds = array<i64: 64, 32>}, {pipeline_mode = #tpu.pipeline_mode<synchronous>, transform_indices = @transform_23, window_bounds = array<i64: 1, 32>}, {pipeline_mode = #tpu.pipeline_mode<synchronous>, transform_indices = @transform_24, window_bounds = array<i64: 1, 32>}, {pipeline_mode = #tpu.pipeline_mode<synchronous>, transform_indices = @transform_25, window_bounds = array<i64: 1, 32>}, {transform_indices = @transform_26, window_bounds = array<i64: 1, 8, 32>}, {transform_indices = @transform_27, window_bounds = array<i64: 1, 4, 8, 8>}, {transform_indices = @transform_28, window_bounds = array<i64: 1, 4, 8, 8>}]} {
    %c0_i32 = arith.constant 0 : i32
    %0 = arith.cmpi eq, %arg1, %c0_i32 : i32
    %1 = arith.extui %0 : i1 to i32
    %c0_i32_0 = arith.constant 0 : i32
    %2 = arith.cmpi ne, %1, %c0_i32_0 : i32
    scf.if %2 {
      %c0_90 = arith.constant 0 : index
      %c0_91 = arith.constant 0 : index
      %c0_92 = arith.constant 0 : index
      %210 = vector.load %arg3[%c0_90, %c0_91, %c0_92] : memref<1x8x32xf32, #tpu.memory_space<vmem>>, vector<1x8x32xf32>
      %211 = vector.shape_cast %210 : vector<1x8x32xf32> to vector<8x32xf32>
      %212 = arith.truncf %211 : vector<8x32xf32> to vector<8x32xbf16>
      %c0_93 = arith.constant 0 : index
      %c0_94 = arith.constant 0 : index
      %213 = vector.load %arg8[%c0_93, %c0_94] : memref<32x1024xbf16, #tpu.memory_space<vmem>>, vector<32x1024xbf16>
      %cst_95 = arith.constant dense<0.000000e+00> : vector<8x1024xf32>
      %214 = tpu.matmul %212, %213, %cst_95 {dimension_numbers = #tpu.dot_dimension_numbers<[1], [0], [0], [1], [0, 0, 1, 1], [], []>} : vector<8x32xbf16>, vector<32x1024xbf16>, vector<8x1024xf32> -> vector<8x1024xf32>
      %c0_96 = arith.constant 0 : index
      %c0_97 = arith.constant 0 : index
      %215 = vector.load %arg9[%c0_96, %c0_97] : memref<1x1024xf32, #tpu.memory_space<vmem>>, vector<1x1024xf32>
      %216 = vector.broadcast %215 : vector<1x1024xf32> to vector<8x1024xf32>
      %217 = arith.addf %214, %216 : vector<8x1024xf32>
      %218 = vector.extract_strided_slice %217 {offsets = [0, 0], sizes = [8, 128], strides = [1, 1]} : vector<8x1024xf32> to vector<8x128xf32>
      %219 = vector.extract_strided_slice %217 {offsets = [0, 128], sizes = [8, 128], strides = [1, 1]} : vector<8x1024xf32> to vector<8x128xf32>
      %220 = vector.extract_strided_slice %217 {offsets = [0, 256], sizes = [8, 128], strides = [1, 1]} : vector<8x1024xf32> to vector<8x128xf32>
      %221 = vector.extract_strided_slice %217 {offsets = [0, 384], sizes = [8, 128], strides = [1, 1]} : vector<8x1024xf32> to vector<8x128xf32>
      %222 = vector.extract_strided_slice %217 {offsets = [0, 512], sizes = [8, 128], strides = [1, 1]} : vector<8x1024xf32> to vector<8x128xf32>
      %223 = vector.extract_strided_slice %217 {offsets = [0, 640], sizes = [8, 128], strides = [1, 1]} : vector<8x1024xf32> to vector<8x128xf32>
      %224 = vector.extract_strided_slice %217 {offsets = [0, 768], sizes = [8, 128], strides = [1, 1]} : vector<8x1024xf32> to vector<8x128xf32>
      %225 = vector.extract_strided_slice %217 {offsets = [0, 896], sizes = [8, 128], strides = [1, 1]} : vector<8x1024xf32> to vector<8x128xf32>
      %226 = vector.shape_cast %218 : vector<8x128xf32> to vector<1x8x128xf32>
      %227 = vector.shape_cast %219 : vector<8x128xf32> to vector<1x8x128xf32>
      %228 = vector.shape_cast %220 : vector<8x128xf32> to vector<1x8x128xf32>
      %229 = vector.shape_cast %221 : vector<8x128xf32> to vector<1x8x128xf32>
      %230 = vector.shape_cast %222 : vector<8x128xf32> to vector<1x8x128xf32>
      %231 = vector.shape_cast %223 : vector<8x128xf32> to vector<1x8x128xf32>
      %232 = vector.shape_cast %224 : vector<8x128xf32> to vector<1x8x128xf32>
      %233 = vector.shape_cast %225 : vector<8x128xf32> to vector<1x8x128xf32>
      %234 = tpu.concatenate %226, %227, %228, %229, %230, %231, %232, %233 in 0 : vector<1x8x128xf32>, vector<1x8x128xf32>, vector<1x8x128xf32>, vector<1x8x128xf32>, vector<1x8x128xf32>, vector<1x8x128xf32>, vector<1x8x128xf32>, vector<1x8x128xf32> -> vector<8x8x128xf32>
      %235 = arith.truncf %234 : vector<8x8x128xf32> to vector<8x8x128xbf16>
      %c0_98 = arith.constant 0 : index
      %c0_99 = arith.constant 0 : index
      %c0_100 = arith.constant 0 : index
      %236 = vector.load %arg31[%c0_98, %c0_99, %c0_100] : memref<8x8x128xbf16, #tpu.memory_space<vmem>>, vector<8x8x128xbf16>
      tpu.vector_store %arg31[%c0_98, %c0_99, %c0_100], %235 {strides = array<i32>} : memref<8x8x128xbf16, #tpu.memory_space<vmem>>, vector<8x8x128xbf16>,
      %c0_101 = arith.constant 0 : index
      %c0_102 = arith.constant 0 : index
      %c0_103 = arith.constant 0 : index
      %237 = vector.load %arg5[%c0_101, %c0_102, %c0_103] : memref<1x8x32xf32, #tpu.memory_space<vmem>>, vector<1x8x32xf32>
      %238 = vector.shape_cast %237 : vector<1x8x32xf32> to vector<8x32xf32>
      %239 = arith.truncf %238 : vector<8x32xf32> to vector<8x32xbf16>
      %c0_104 = arith.constant 0 : index
      %c0_105 = arith.constant 0 : index
      %240 = vector.load %arg16[%c0_104, %c0_105] : memref<32x1024xbf16, #tpu.memory_space<vmem>>, vector<32x1024xbf16>
      %cst_106 = arith.constant dense<0.000000e+00> : vector<8x1024xf32>
      %241 = tpu.matmul %239, %240, %cst_106 {dimension_numbers = #tpu.dot_dimension_numbers<[1], [0], [0], [1], [0, 0, 1, 1], [], []>} : vector<8x32xbf16>, vector<32x1024xbf16>, vector<8x1024xf32> -> vector<8x1024xf32>
      %c0_107 = arith.constant 0 : index
      %c0_108 = arith.constant 0 : index
      %242 = vector.load %arg17[%c0_107, %c0_108] : memref<1x1024xf32, #tpu.memory_space<vmem>>, vector<1x1024xf32>
      %243 = vector.broadcast %242 : vector<1x1024xf32> to vector<8x1024xf32>
      %244 = arith.addf %241, %243 : vector<8x1024xf32>
      %245 = vector.extract_strided_slice %244 {offsets = [0, 0], sizes = [8, 128], strides = [1, 1]} : vector<8x1024xf32> to vector<8x128xf32>
      %246 = vector.extract_strided_slice %244 {offsets = [0, 128], sizes = [8, 128], strides = [1, 1]} : vector<8x1024xf32> to vector<8x128xf32>
      %247 = vector.extract_strided_slice %244 {offsets = [0, 256], sizes = [8, 128], strides = [1, 1]} : vector<8x1024xf32> to vector<8x128xf32>
      %248 = vector.extract_strided_slice %244 {offsets = [0, 384], sizes = [8, 128], strides = [1, 1]} : vector<8x1024xf32> to vector<8x128xf32>
      %249 = vector.extract_strided_slice %244 {offsets = [0, 512], sizes = [8, 128], strides = [1, 1]} : vector<8x1024xf32> to vector<8x128xf32>
      %250 = vector.extract_strided_slice %244 {offsets = [0, 640], sizes = [8, 128], strides = [1, 1]} : vector<8x1024xf32> to vector<8x128xf32>
      %251 = vector.extract_strided_slice %244 {offsets = [0, 768], sizes = [8, 128], strides = [1, 1]} : vector<8x1024xf32> to vector<8x128xf32>
      %252 = vector.extract_strided_slice %244 {offsets = [0, 896], sizes = [8, 128], strides = [1, 1]} : vector<8x1024xf32> to vector<8x128xf32>
      %253 = vector.shape_cast %245 : vector<8x128xf32> to vector<1x8x128xf32>
      %254 = vector.shape_cast %246 : vector<8x128xf32> to vector<1x8x128xf32>
      %255 = vector.shape_cast %247 : vector<8x128xf32> to vector<1x8x128xf32>
      %256 = vector.shape_cast %248 : vector<8x128xf32> to vector<1x8x128xf32>
      %257 = vector.shape_cast %249 : vector<8x128xf32> to vector<1x8x128xf32>
      %258 = vector.shape_cast %250 : vector<8x128xf32> to vector<1x8x128xf32>
      %259 = vector.shape_cast %251 : vector<8x128xf32> to vector<1x8x128xf32>
      %260 = vector.shape_cast %252 : vector<8x128xf32> to vector<1x8x128xf32>
      %261 = tpu.concatenate %253, %254, %255, %256, %257, %258, %259, %260 in 0 : vector<1x8x128xf32>, vector<1x8x128xf32>, vector<1x8x128xf32>, vector<1x8x128xf32>, vector<1x8x128xf32>, vector<1x8x128xf32>, vector<1x8x128xf32>, vector<1x8x128xf32> -> vector<8x8x128xf32>
      %262 = arith.truncf %261 : vector<8x8x128xf32> to vector<8x8x128xbf16>
      %c0_109 = arith.constant 0 : index
      %c0_110 = arith.constant 0 : index
      %c0_111 = arith.constant 0 : index
      %263 = vector.load %arg32[%c0_109, %c0_110, %c0_111] : memref<8x8x128xbf16, #tpu.memory_space<vmem>>, vector<8x8x128xbf16>
      tpu.vector_store %arg32[%c0_109, %c0_110, %c0_111], %262 {strides = array<i32>} : memref<8x8x128xbf16, #tpu.memory_space<vmem>>, vector<8x8x128xbf16>,
    } else {
    }
    %c0 = arith.constant 0 : index
    %c0_1 = arith.constant 0 : index
    %c0_2 = arith.constant 0 : index
    %3 = vector.load %arg2[%c0, %c0_1, %c0_2] : memref<1x8x32xf32, #tpu.memory_space<vmem>>, vector<1x8x32xf32>
    %4 = vector.shape_cast %3 : vector<1x8x32xf32> to vector<8x32xf32>
    %5 = arith.truncf %4 : vector<8x32xf32> to vector<8x32xbf16>
    %c0_3 = arith.constant 0 : index
    %c0_4 = arith.constant 0 : index
    %c0_5 = arith.constant 0 : index
    %6 = vector.load %arg4[%c0_3, %c0_4, %c0_5] : memref<1x1x8xf32, #tpu.memory_space<vmem>>, vector<1x1x8xf32>
    %7 = vector.shape_cast %6 : vector<1x1x8xf32> to vector<1x8xf32>
    %c0_6 = arith.constant 0 : index
    %c0_7 = arith.constant 0 : index
    %8 = vector.load %arg6[%c0_6, %c0_7] : memref<32x512xbf16, #tpu.memory_space<vmem>>, vector<32x512xbf16>
    %cst = arith.constant dense<0.000000e+00> : vector<8x512xf32>
    %9 = tpu.matmul %5, %8, %cst {dimension_numbers = #tpu.dot_dimension_numbers<[1], [0], [0], [1], [0, 0, 1, 1], [], []>} : vector<8x32xbf16>, vector<32x512xbf16>, vector<8x512xf32> -> vector<8x512xf32>
    %c0_8 = arith.constant 0 : index
    %c0_9 = arith.constant 0 : index
    %10 = vector.load %arg7[%c0_8, %c0_9] : memref<1x512xf32, #tpu.memory_space<vmem>>, vector<1x512xf32>
    %11 = vector.broadcast %10 : vector<1x512xf32> to vector<8x512xf32>
    %12 = arith.addf %9, %11 : vector<8x512xf32>
    %13 = vector.extract_strided_slice %12 {offsets = [0, 0], sizes = [8, 128], strides = [1, 1]} : vector<8x512xf32> to vector<8x128xf32>
    %14 = vector.extract_strided_slice %12 {offsets = [0, 128], sizes = [8, 128], strides = [1, 1]} : vector<8x512xf32> to vector<8x128xf32>
    %15 = vector.extract_strided_slice %12 {offsets = [0, 256], sizes = [8, 128], strides = [1, 1]} : vector<8x512xf32> to vector<8x128xf32>
    %16 = vector.extract_strided_slice %12 {offsets = [0, 384], sizes = [8, 128], strides = [1, 1]} : vector<8x512xf32> to vector<8x128xf32>
    %17 = vector.shape_cast %13 : vector<8x128xf32> to vector<1x8x128xf32>
    %18 = vector.shape_cast %14 : vector<8x128xf32> to vector<1x8x128xf32>
    %19 = vector.shape_cast %15 : vector<8x128xf32> to vector<1x8x128xf32>
    %20 = vector.shape_cast %16 : vector<8x128xf32> to vector<1x8x128xf32>
    %21 = tpu.concatenate %17, %18, %19, %20 in 0 : vector<1x8x128xf32>, vector<1x8x128xf32>, vector<1x8x128xf32>, vector<1x8x128xf32> -> vector<4x8x128xf32>
    %22 = arith.truncf %21 : vector<4x8x128xf32> to vector<4x8x128xbf16>
    %c0_10 = arith.constant 0 : index
    %c0_11 = arith.constant 0 : index
    %c0_12 = arith.constant 0 : index
    %23 = vector.load %arg31[%c0_10, %c0_11, %c0_12] : memref<8x8x128xbf16, #tpu.memory_space<vmem>>, vector<8x8x128xbf16>
    %24 = vector.extract_strided_slice %23 {offsets = [0, 0, 0], sizes = [4, 8, 128], strides = [1, 1, 1]} : vector<8x8x128xbf16> to vector<4x8x128xbf16>
    %25 = vector.extract_strided_slice %23 {offsets = [4, 0, 0], sizes = [4, 8, 128], strides = [1, 1, 1]} : vector<8x8x128xbf16> to vector<4x8x128xbf16>
    %c0_13 = arith.constant 0 : index
    %c0_14 = arith.constant 0 : index
    %26 = vector.load %arg10[%c0_13, %c0_14] : memref<512x32xbf16, #tpu.memory_space<vmem>>, vector<512x32xbf16>
    %c0_15 = arith.constant 0 : index
    %c0_16 = arith.constant 0 : index
    %27 = vector.load %arg11[%c0_15, %c0_16] : memref<1x32xf32, #tpu.memory_space<vmem>>, vector<1x32xf32>
    "tpu.trace_start"() <{level = 10 : i32, message = "hqd,hkd->hqk"}> : () -> ()
    %cst_17 = arith.constant dense<0.000000e+00> : vector<4x8x8xf32>
    %28 = tpu.matmul %22, %24, %cst_17 {dimension_numbers = #tpu.dot_dimension_numbers<[2], [2], [1], [1], [0, 0, 0, 1, 1, 1], [0], [0]>} : vector<4x8x128xbf16>, vector<4x8x128xbf16>, vector<4x8x8xf32> -> vector<4x8x8xf32>
    "tpu.trace_stop"() : () -> ()
    %29 = vector.shape_cast %7 : vector<1x8xf32> to vector<1x1x8xf32>
    %30 = vector.broadcast %29 : vector<1x1x8xf32> to vector<4x8x8xf32>
    %31 = arith.addf %28, %30 : vector<4x8x8xf32>
    %cst_18 = arith.constant dense<0xFF800000> : vector<4x8xf32>
    %32 = vector.multi_reduction <maximumf>, %31, %cst_18 [2] : vector<4x8x8xf32> to vector<4x8xf32>
    %33 = vector.shape_cast %32 : vector<4x8xf32> to vector<4x8x1xf32>
    %34 = vector.broadcast %33 : vector<4x8x1xf32> to vector<4x8x8xf32>
    %35 = arith.subf %31, %34 : vector<4x8x8xf32>
    %36 = math.exp %35 : vector<4x8x8xf32>
    %cst_19 = arith.constant dense<0.000000e+00> : vector<4x8xf32>
    %37 = vector.multi_reduction <add>, %36, %cst_19 [2] : vector<4x8x8xf32> to vector<4x8xf32>
    %38 = vector.shape_cast %37 : vector<4x8xf32> to vector<4x8x1xf32>
    %39 = tpu.reciprocal %38 {approx = true} : vector<4x8x1xf32> -> vector<4x8x1xf32>
    %40 = vector.broadcast %39 : vector<4x8x1xf32> to vector<4x8x8xf32>
    %41 = arith.mulf %36, %40 : vector<4x8x8xf32>
    %42 = arith.truncf %41 : vector<4x8x8xf32> to vector<4x8x8xbf16>
    %c0_20 = arith.constant 0 : index
    %c0_21 = arith.constant 0 : index
    %c0_22 = arith.constant 0 : index
    %c0_23 = arith.constant 0 : index
    %43 = vector.load %arg29[%c0_20, %c0_21, %c0_22, %c0_23] : memref<1x4x8x8xbf16, #tpu.memory_space<vmem>>, vector<1x4x8x8xbf16>
    %44 = vector.shape_cast %43 : vector<1x4x8x8xbf16> to vector<4x8x8xbf16>
    %45 = vector.shape_cast %42 : vector<4x8x8xbf16> to vector<1x4x8x8xbf16>
    tpu.vector_store %arg29[%c0_20, %c0_21, %c0_22, %c0_23], %45 {strides = array<i32>} : memref<1x4x8x8xbf16, #tpu.memory_space<vmem>>, vector<1x4x8x8xbf16>,
    %46 = arith.truncf %41 : vector<4x8x8xf32> to vector<4x8x8xbf16>
    "tpu.trace_start"() <{level = 10 : i32, message = "hqk,hkd->hqd"}> : () -> ()
    %cst_24 = arith.constant dense<0.000000e+00> : vector<4x8x128xf32>
    %47 = tpu.matmul %46, %25, %cst_24 {dimension_numbers = #tpu.dot_dimension_numbers<[2], [1], [1], [2], [0, 0, 0, 1, 1, 2], [0], [0]>} : vector<4x8x8xbf16>, vector<4x8x128xbf16>, vector<4x8x128xf32> -> vector<4x8x128xf32>
    "tpu.trace_stop"() : () -> ()
    %48 = arith.truncf %47 : vector<4x8x128xf32> to vector<4x8x128xbf16>
    %49 = vector.extract_strided_slice %48 {offsets = [0, 0, 0], sizes = [1, 8, 128], strides = [1, 1, 1]} : vector<4x8x128xbf16> to vector<1x8x128xbf16>
    %50 = vector.shape_cast %49 : vector<1x8x128xbf16> to vector<8x128xbf16>
    %51 = vector.extract_strided_slice %48 {offsets = [1, 0, 0], sizes = [1, 8, 128], strides = [1, 1, 1]} : vector<4x8x128xbf16> to vector<1x8x128xbf16>
    %52 = vector.shape_cast %51 : vector<1x8x128xbf16> to vector<8x128xbf16>
    %53 = vector.extract_strided_slice %48 {offsets = [2, 0, 0], sizes = [1, 8, 128], strides = [1, 1, 1]} : vector<4x8x128xbf16> to vector<1x8x128xbf16>
    %54 = vector.shape_cast %53 : vector<1x8x128xbf16> to vector<8x128xbf16>
    %55 = vector.extract_strided_slice %48 {offsets = [3, 0, 0], sizes = [1, 8, 128], strides = [1, 1, 1]} : vector<4x8x128xbf16> to vector<1x8x128xbf16>
    %56 = vector.shape_cast %55 : vector<1x8x128xbf16> to vector<8x128xbf16>
    %57 = tpu.concatenate %50, %52, %54, %56 in 1 : vector<8x128xbf16>, vector<8x128xbf16>, vector<8x128xbf16>, vector<8x128xbf16> -> vector<8x512xbf16>
    %cst_25 = arith.constant dense<0.000000e+00> : vector<8x32xf32>
    %58 = tpu.matmul %57, %26, %cst_25 {dimension_numbers = #tpu.dot_dimension_numbers<[1], [0], [0], [1], [0, 0, 1, 1], [], []>} : vector<8x512xbf16>, vector<512x32xbf16>, vector<8x32xf32> -> vector<8x32xf32>
    %59 = vector.broadcast %27 : vector<1x32xf32> to vector<8x32xf32>
    %60 = arith.addf %58, %59 : vector<8x32xf32>
    %61 = arith.addf %60, %4 : vector<8x32xf32>
    %c0_26 = arith.constant 0 : index
    %c0_27 = arith.constant 0 : index
    %62 = vector.load %arg12[%c0_26, %c0_27] : memref<1x32xf32, #tpu.memory_space<vmem>>, vector<1x32xf32>
    %c0_28 = arith.constant 0 : index
    %c0_29 = arith.constant 0 : index
    %63 = vector.load %arg13[%c0_28, %c0_29] : memref<1x32xf32, #tpu.memory_space<vmem>>, vector<1x32xf32>
    %cst_30 = arith.constant dense<0.000000e+00> : vector<8xf32>
    %64 = vector.multi_reduction <add>, %61, %cst_30 [1] : vector<8x32xf32> to vector<8xf32>
    %65 = vector.shape_cast %64 : vector<8xf32> to vector<8x1xf32>
    %cst_31 = arith.constant 3.200000e+01 : f32
    %66 = vector.broadcast %cst_31 : f32 to vector<8x1xf32>
    %67 = arith.divf %65, %66 : vector<8x1xf32>
    %68 = vector.broadcast %67 : vector<8x1xf32> to vector<8x32xf32>
    %69 = arith.subf %61, %68 : vector<8x32xf32>
    %70 = arith.mulf %69, %69 : vector<8x32xf32>
    %cst_32 = arith.constant dense<0.000000e+00> : vector<8xf32>
    %71 = vector.multi_reduction <add>, %70, %cst_32 [1] : vector<8x32xf32> to vector<8xf32>
    %72 = vector.shape_cast %71 : vector<8xf32> to vector<8x1xf32>
    %cst_33 = arith.constant 3.200000e+01 : f32
    %73 = vector.broadcast %cst_33 : f32 to vector<8x1xf32>
    %74 = arith.divf %72, %73 : vector<8x1xf32>
    %75 = vector.broadcast %67 : vector<8x1xf32> to vector<8x32xf32>
    %76 = arith.subf %61, %75 : vector<8x32xf32>
    %cst_34 = arith.constant 9.99999996E-13 : f32
    %77 = vector.broadcast %cst_34 : f32 to vector<8x1xf32>
    %78 = arith.addf %74, %77 : vector<8x1xf32>
    %79 = math.rsqrt %78 : vector<8x1xf32>
    %80 = vector.broadcast %79 : vector<8x1xf32> to vector<8x32xf32>
    %81 = arith.mulf %76, %80 : vector<8x32xf32>
    %82 = vector.broadcast %62 : vector<1x32xf32> to vector<8x32xf32>
    %83 = arith.mulf %81, %82 : vector<8x32xf32>
    %84 = vector.broadcast %63 : vector<1x32xf32> to vector<8x32xf32>
    %85 = arith.addf %83, %84 : vector<8x32xf32>
    %86 = arith.truncf %85 : vector<8x32xf32> to vector<8x32xbf16>
    %c0_35 = arith.constant 0 : index
    %c0_36 = arith.constant 0 : index
    %87 = vector.load %arg14[%c0_35, %c0_36] : memref<32x512xbf16, #tpu.memory_space<vmem>>, vector<32x512xbf16>
    %cst_37 = arith.constant dense<0.000000e+00> : vector<8x512xf32>
    %88 = tpu.matmul %86, %87, %cst_37 {dimension_numbers = #tpu.dot_dimension_numbers<[1], [0], [0], [1], [0, 0, 1, 1], [], []>} : vector<8x32xbf16>, vector<32x512xbf16>, vector<8x512xf32> -> vector<8x512xf32>
    %c0_38 = arith.constant 0 : index
    %c0_39 = arith.constant 0 : index
    %89 = vector.load %arg15[%c0_38, %c0_39] : memref<1x512xf32, #tpu.memory_space<vmem>>, vector<1x512xf32>
    %90 = vector.broadcast %89 : vector<1x512xf32> to vector<8x512xf32>
    %91 = arith.addf %88, %90 : vector<8x512xf32>
    %92 = vector.extract_strided_slice %91 {offsets = [0, 0], sizes = [8, 128], strides = [1, 1]} : vector<8x512xf32> to vector<8x128xf32>
    %93 = vector.extract_strided_slice %91 {offsets = [0, 128], sizes = [8, 128], strides = [1, 1]} : vector<8x512xf32> to vector<8x128xf32>
    %94 = vector.extract_strided_slice %91 {offsets = [0, 256], sizes = [8, 128], strides = [1, 1]} : vector<8x512xf32> to vector<8x128xf32>
    %95 = vector.extract_strided_slice %91 {offsets = [0, 384], sizes = [8, 128], strides = [1, 1]} : vector<8x512xf32> to vector<8x128xf32>
    %96 = vector.shape_cast %92 : vector<8x128xf32> to vector<1x8x128xf32>
    %97 = vector.shape_cast %93 : vector<8x128xf32> to vector<1x8x128xf32>
    %98 = vector.shape_cast %94 : vector<8x128xf32> to vector<1x8x128xf32>
    %99 = vector.shape_cast %95 : vector<8x128xf32> to vector<1x8x128xf32>
    %100 = tpu.concatenate %96, %97, %98, %99 in 0 : vector<1x8x128xf32>, vector<1x8x128xf32>, vector<1x8x128xf32>, vector<1x8x128xf32> -> vector<4x8x128xf32>
    %101 = arith.truncf %100 : vector<4x8x128xf32> to vector<4x8x128xbf16>
    %c0_40 = arith.constant 0 : index
    %c0_41 = arith.constant 0 : index
    %c0_42 = arith.constant 0 : index
    %102 = vector.load %arg32[%c0_40, %c0_41, %c0_42] : memref<8x8x128xbf16, #tpu.memory_space<vmem>>, vector<8x8x128xbf16>
    %103 = vector.extract_strided_slice %102 {offsets = [0, 0, 0], sizes = [4, 8, 128], strides = [1, 1, 1]} : vector<8x8x128xbf16> to vector<4x8x128xbf16>
    %104 = vector.extract_strided_slice %102 {offsets = [4, 0, 0], sizes = [4, 8, 128], strides = [1, 1, 1]} : vector<8x8x128xbf16> to vector<4x8x128xbf16>
    %c0_43 = arith.constant 0 : index
    %c0_44 = arith.constant 0 : index
    %105 = vector.load %arg18[%c0_43, %c0_44] : memref<512x32xbf16, #tpu.memory_space<vmem>>, vector<512x32xbf16>
    %c0_45 = arith.constant 0 : index
    %c0_46 = arith.constant 0 : index
    %106 = vector.load %arg19[%c0_45, %c0_46] : memref<1x32xf32, #tpu.memory_space<vmem>>, vector<1x32xf32>
    "tpu.trace_start"() <{level = 10 : i32, message = "hqd,hkd->hqk"}> : () -> ()
    %cst_47 = arith.constant dense<0.000000e+00> : vector<4x8x8xf32>
    %107 = tpu.matmul %101, %103, %cst_47 {dimension_numbers = #tpu.dot_dimension_numbers<[2], [2], [1], [1], [0, 0, 0, 1, 1, 1], [0], [0]>} : vector<4x8x128xbf16>, vector<4x8x128xbf16>, vector<4x8x8xf32> -> vector<4x8x8xf32>
    "tpu.trace_stop"() : () -> ()
    %cst_48 = arith.constant dense<0xFF800000> : vector<4x8xf32>
    %108 = vector.multi_reduction <maximumf>, %107, %cst_48 [2] : vector<4x8x8xf32> to vector<4x8xf32>
    %109 = vector.shape_cast %108 : vector<4x8xf32> to vector<4x8x1xf32>
    %110 = vector.broadcast %109 : vector<4x8x1xf32> to vector<4x8x8xf32>
    %111 = arith.subf %107, %110 : vector<4x8x8xf32>
    %112 = math.exp %111 : vector<4x8x8xf32>
    %cst_49 = arith.constant dense<0.000000e+00> : vector<4x8xf32>
    %113 = vector.multi_reduction <add>, %112, %cst_49 [2] : vector<4x8x8xf32> to vector<4x8xf32>
    %114 = vector.shape_cast %113 : vector<4x8xf32> to vector<4x8x1xf32>
    %115 = tpu.reciprocal %114 {approx = true} : vector<4x8x1xf32> -> vector<4x8x1xf32>
    %116 = vector.broadcast %115 : vector<4x8x1xf32> to vector<4x8x8xf32>
    %117 = arith.mulf %112, %116 : vector<4x8x8xf32>
    %118 = arith.truncf %117 : vector<4x8x8xf32> to vector<4x8x8xbf16>
    %c0_50 = arith.constant 0 : index
    %c0_51 = arith.constant 0 : index
    %c0_52 = arith.constant 0 : index
    %c0_53 = arith.constant 0 : index
    %119 = vector.load %arg30[%c0_50, %c0_51, %c0_52, %c0_53] : memref<1x4x8x8xbf16, #tpu.memory_space<vmem>>, vector<1x4x8x8xbf16>
    %120 = vector.shape_cast %119 : vector<1x4x8x8xbf16> to vector<4x8x8xbf16>
    %121 = vector.shape_cast %118 : vector<4x8x8xbf16> to vector<1x4x8x8xbf16>
    tpu.vector_store %arg30[%c0_50, %c0_51, %c0_52, %c0_53], %121 {strides = array<i32>} : memref<1x4x8x8xbf16, #tpu.memory_space<vmem>>, vector<1x4x8x8xbf16>,
    %122 = arith.truncf %117 : vector<4x8x8xf32> to vector<4x8x8xbf16>
    "tpu.trace_start"() <{level = 10 : i32, message = "hqk,hkd->hqd"}> : () -> ()
    %cst_54 = arith.constant dense<0.000000e+00> : vector<4x8x128xf32>
    %123 = tpu.matmul %122, %104, %cst_54 {dimension_numbers = #tpu.dot_dimension_numbers<[2], [1], [1], [2], [0, 0, 0, 1, 1, 2], [0], [0]>} : vector<4x8x8xbf16>, vector<4x8x128xbf16>, vector<4x8x128xf32> -> vector<4x8x128xf32>
    "tpu.trace_stop"() : () -> ()
    %124 = arith.truncf %123 : vector<4x8x128xf32> to vector<4x8x128xbf16>
    %125 = vector.extract_strided_slice %124 {offsets = [0, 0, 0], sizes = [1, 8, 128], strides = [1, 1, 1]} : vector<4x8x128xbf16> to vector<1x8x128xbf16>
    %126 = vector.shape_cast %125 : vector<1x8x128xbf16> to vector<8x128xbf16>
    %127 = vector.extract_strided_slice %124 {offsets = [1, 0, 0], sizes = [1, 8, 128], strides = [1, 1, 1]} : vector<4x8x128xbf16> to vector<1x8x128xbf16>
    %128 = vector.shape_cast %127 : vector<1x8x128xbf16> to vector<8x128xbf16>
    %129 = vector.extract_strided_slice %124 {offsets = [2, 0, 0], sizes = [1, 8, 128], strides = [1, 1, 1]} : vector<4x8x128xbf16> to vector<1x8x128xbf16>
    %130 = vector.shape_cast %129 : vector<1x8x128xbf16> to vector<8x128xbf16>
    %131 = vector.extract_strided_slice %124 {offsets = [3, 0, 0], sizes = [1, 8, 128], strides = [1, 1, 1]} : vector<4x8x128xbf16> to vector<1x8x128xbf16>
    %132 = vector.shape_cast %131 : vector<1x8x128xbf16> to vector<8x128xbf16>
    %133 = tpu.concatenate %126, %128, %130, %132 in 1 : vector<8x128xbf16>, vector<8x128xbf16>, vector<8x128xbf16>, vector<8x128xbf16> -> vector<8x512xbf16>
    %cst_55 = arith.constant dense<0.000000e+00> : vector<8x32xf32>
    %134 = tpu.matmul %133, %105, %cst_55 {dimension_numbers = #tpu.dot_dimension_numbers<[1], [0], [0], [1], [0, 0, 1, 1], [], []>} : vector<8x512xbf16>, vector<512x32xbf16>, vector<8x32xf32> -> vector<8x32xf32>
    %135 = vector.broadcast %106 : vector<1x32xf32> to vector<8x32xf32>
    %136 = arith.addf %134, %135 : vector<8x32xf32>
    %137 = arith.addf %136, %85 : vector<8x32xf32>
    %c0_56 = arith.constant 0 : index
    %c0_57 = arith.constant 0 : index
    %138 = vector.load %arg20[%c0_56, %c0_57] : memref<1x32xf32, #tpu.memory_space<vmem>>, vector<1x32xf32>
    %c0_58 = arith.constant 0 : index
    %c0_59 = arith.constant 0 : index
    %139 = vector.load %arg21[%c0_58, %c0_59] : memref<1x32xf32, #tpu.memory_space<vmem>>, vector<1x32xf32>
    %cst_60 = arith.constant dense<0.000000e+00> : vector<8xf32>
    %140 = vector.multi_reduction <add>, %137, %cst_60 [1] : vector<8x32xf32> to vector<8xf32>
    %141 = vector.shape_cast %140 : vector<8xf32> to vector<8x1xf32>
    %cst_61 = arith.constant 3.200000e+01 : f32
    %142 = vector.broadcast %cst_61 : f32 to vector<8x1xf32>
    %143 = arith.divf %141, %142 : vector<8x1xf32>
    %144 = vector.broadcast %143 : vector<8x1xf32> to vector<8x32xf32>
    %145 = arith.subf %137, %144 : vector<8x32xf32>
    %146 = arith.mulf %145, %145 : vector<8x32xf32>
    %cst_62 = arith.constant dense<0.000000e+00> : vector<8xf32>
    %147 = vector.multi_reduction <add>, %146, %cst_62 [1] : vector<8x32xf32> to vector<8xf32>
    %148 = vector.shape_cast %147 : vector<8xf32> to vector<8x1xf32>
    %cst_63 = arith.constant 3.200000e+01 : f32
    %149 = vector.broadcast %cst_63 : f32 to vector<8x1xf32>
    %150 = arith.divf %148, %149 : vector<8x1xf32>
    %151 = vector.broadcast %143 : vector<8x1xf32> to vector<8x32xf32>
    %152 = arith.subf %137, %151 : vector<8x32xf32>
    %cst_64 = arith.constant 9.99999996E-13 : f32
    %153 = vector.broadcast %cst_64 : f32 to vector<8x1xf32>
    %154 = arith.addf %150, %153 : vector<8x1xf32>
    %155 = math.rsqrt %154 : vector<8x1xf32>
    %156 = vector.broadcast %155 : vector<8x1xf32> to vector<8x32xf32>
    %157 = arith.mulf %152, %156 : vector<8x32xf32>
    %158 = vector.broadcast %138 : vector<1x32xf32> to vector<8x32xf32>
    %159 = arith.mulf %157, %158 : vector<8x32xf32>
    %160 = vector.broadcast %139 : vector<1x32xf32> to vector<8x32xf32>
    %161 = arith.addf %159, %160 : vector<8x32xf32>
    %162 = arith.truncf %161 : vector<8x32xf32> to vector<8x32xbf16>
    %c0_65 = arith.constant 0 : index
    %c0_66 = arith.constant 0 : index
    %163 = vector.load %arg22[%c0_65, %c0_66] : memref<32x64xbf16, #tpu.memory_space<vmem>>, vector<32x64xbf16>
    %cst_67 = arith.constant dense<0.000000e+00> : vector<8x64xf32>
    %164 = tpu.matmul %162, %163, %cst_67 {dimension_numbers = #tpu.dot_dimension_numbers<[1], [0], [0], [1], [0, 0, 1, 1], [], []>} : vector<8x32xbf16>, vector<32x64xbf16>, vector<8x64xf32> -> vector<8x64xf32>
    %c0_68 = arith.constant 0 : index
    %c0_69 = arith.constant 0 : index
    %165 = vector.load %arg23[%c0_68, %c0_69] : memref<1x64xf32, #tpu.memory_space<vmem>>, vector<1x64xf32>
    %166 = vector.broadcast %165 : vector<1x64xf32> to vector<8x64xf32>
    %167 = arith.addf %164, %166 : vector<8x64xf32>
    %cst_70 = arith.constant 5.000000e-01 : f32
    %168 = vector.broadcast %cst_70 : f32 to vector<8x64xf32>
    %169 = arith.mulf %168, %167 : vector<8x64xf32>
    %cst_71 = arith.constant 0.707106769 : f32
    %170 = vector.broadcast %cst_71 : f32 to vector<8x64xf32>
    %171 = arith.mulf %167, %170 : vector<8x64xf32>
    %172 = math.erf %171 : vector<8x64xf32>
    %cst_72 = arith.constant 1.000000e+00 : f32
    %173 = vector.broadcast %cst_72 : f32 to vector<8x64xf32>
    %174 = arith.addf %173, %172 : vector<8x64xf32>
    %175 = arith.mulf %169, %174 : vector<8x64xf32>
    %176 = arith.truncf %175 : vector<8x64xf32> to vector<8x64xbf16>
    %c0_73 = arith.constant 0 : index
    %c0_74 = arith.constant 0 : index
    %177 = vector.load %arg24[%c0_73, %c0_74] : memref<64x32xbf16, #tpu.memory_space<vmem>>, vector<64x32xbf16>
    %cst_75 = arith.constant dense<0.000000e+00> : vector<8x32xf32>
    %178 = tpu.matmul %176, %177, %cst_75 {dimension_numbers = #tpu.dot_dimension_numbers<[1], [0], [0], [1], [0, 0, 1, 1], [], []>} : vector<8x64xbf16>, vector<64x32xbf16>, vector<8x32xf32> -> vector<8x32xf32>
    %c0_76 = arith.constant 0 : index
    %c0_77 = arith.constant 0 : index
    %179 = vector.load %arg25[%c0_76, %c0_77] : memref<1x32xf32, #tpu.memory_space<vmem>>, vector<1x32xf32>
    %180 = vector.broadcast %179 : vector<1x32xf32> to vector<8x32xf32>
    %181 = arith.addf %178, %180 : vector<8x32xf32>
    %182 = arith.addf %181, %161 : vector<8x32xf32>
    %c0_78 = arith.constant 0 : index
    %c0_79 = arith.constant 0 : index
    %183 = vector.load %arg26[%c0_78, %c0_79] : memref<1x32xf32, #tpu.memory_space<vmem>>, vector<1x32xf32>
    %c0_80 = arith.constant 0 : index
    %c0_81 = arith.constant 0 : index
    %184 = vector.load %arg27[%c0_80, %c0_81] : memref<1x32xf32, #tpu.memory_space<vmem>>, vector<1x32xf32>
    %cst_82 = arith.constant dense<0.000000e+00> : vector<8xf32>
    %185 = vector.multi_reduction <add>, %182, %cst_82 [1] : vector<8x32xf32> to vector<8xf32>
    %186 = vector.shape_cast %185 : vector<8xf32> to vector<8x1xf32>
    %cst_83 = arith.constant 3.200000e+01 : f32
    %187 = vector.broadcast %cst_83 : f32 to vector<8x1xf32>
    %188 = arith.divf %186, %187 : vector<8x1xf32>
    %189 = vector.broadcast %188 : vector<8x1xf32> to vector<8x32xf32>
    %190 = arith.subf %182, %189 : vector<8x32xf32>
    %191 = arith.mulf %190, %190 : vector<8x32xf32>
    %cst_84 = arith.constant dense<0.000000e+00> : vector<8xf32>
    %192 = vector.multi_reduction <add>, %191, %cst_84 [1] : vector<8x32xf32> to vector<8xf32>
    %193 = vector.shape_cast %192 : vector<8xf32> to vector<8x1xf32>
    %cst_85 = arith.constant 3.200000e+01 : f32
    %194 = vector.broadcast %cst_85 : f32 to vector<8x1xf32>
    %195 = arith.divf %193, %194 : vector<8x1xf32>
    %196 = vector.broadcast %188 : vector<8x1xf32> to vector<8x32xf32>
    %197 = arith.subf %182, %196 : vector<8x32xf32>
    %cst_86 = arith.constant 9.99999996E-13 : f32
    %198 = vector.broadcast %cst_86 : f32 to vector<8x1xf32>
    %199 = arith.addf %195, %198 : vector<8x1xf32>
    %200 = math.rsqrt %199 : vector<8x1xf32>
    %201 = vector.broadcast %200 : vector<8x1xf32> to vector<8x32xf32>
    %202 = arith.mulf %197, %201 : vector<8x32xf32>
    %203 = vector.broadcast %183 : vector<1x32xf32> to vector<8x32xf32>
    %204 = arith.mulf %202, %203 : vector<8x32xf32>
    %205 = vector.broadcast %184 : vector<1x32xf32> to vector<8x32xf32>
    %206 = arith.addf %204, %205 : vector<8x32xf32>
    %c0_87 = arith.constant 0 : index
    %c0_88 = arith.constant 0 : index
    %c0_89 = arith.constant 0 : index
    %207 = vector.load %arg28[%c0_87, %c0_88, %c0_89] : memref<1x8x32xf32, #tpu.memory_space<vmem>>, vector<1x8x32xf32>
    %208 = vector.shape_cast %207 : vector<1x8x32xf32> to vector<8x32xf32>
    %209 = vector.shape_cast %206 : vector<8x32xf32> to vector<1x8x32xf32>
    tpu.vector_store %arg28[%c0_87, %c0_88, %c0_89], %209 {strides = array<i32>} : memref<1x8x32xf32, #tpu.memory_space<vmem>>, vector<1x8x32xf32>,
    return
  }
  func.func @transform_0(%arg0: i32, %arg1: i32) -> (i32, i32, i32) {
    %c0_i32 = arith.constant 0 : i32
    %c0_i32_0 = arith.constant 0 : i32
    return %arg0, %arg1, %c0_i32 : i32, i32, i32
  }
  func.func @transform_1(%arg0: i32, %arg1: i32) -> (i32, i32, i32) {
    %c0_i32 = arith.constant 0 : i32
    %c0_i32_0 = arith.constant 0 : i32
    %c0_i32_1 = arith.constant 0 : i32
    return %arg0, %c0_i32, %c0_i32_0 : i32, i32, i32
  }
  func.func @transform_2(%arg0: i32, %arg1: i32) -> (i32, i32, i32) {
    %c0_i32 = arith.constant 0 : i32
    %c0_i32_0 = arith.constant 0 : i32
    %c0_i32_1 = arith.constant 0 : i32
    return %arg0, %c0_i32, %c0_i32_0 : i32, i32, i32
  }
  func.func @transform_3(%arg0: i32, %arg1: i32) -> (i32, i32, i32) {
    %c0_i32 = arith.constant 0 : i32
    %c0_i32_0 = arith.constant 0 : i32
    %c0_i32_1 = arith.constant 0 : i32
    return %arg0, %c0_i32, %c0_i32_0 : i32, i32, i32
  }
  func.func @transform_4(%arg0: i32, %arg1: i32) -> (i32, i32) {
    %c0_i32 = arith.constant 0 : i32
    %c0_i32_0 = arith.constant 0 : i32
    %c0_i32_1 = arith.constant 0 : i32
    return %c0_i32, %c0_i32_0 : i32, i32
  }
  func.func @transform_5(%arg0: i32, %arg1: i32) -> (i32, i32) {
    %c0_i32 = arith.constant 0 : i32
    %c0_i32_0 = arith.constant 0 : i32
    %c0_i32_1 = arith.constant 0 : i32
    return %c0_i32, %c0_i32_0 : i32, i32
  }
  func.func @transform_6(%arg0: i32, %arg1: i32) -> (i32, i32) {
    %c0_i32 = arith.constant 0 : i32
    %c0_i32_0 = arith.constant 0 : i32
    %c0_i32_1 = arith.constant 0 : i32
    return %c0_i32, %c0_i32_0 : i32, i32
  }
  func.func @transform_7(%arg0: i32, %arg1: i32) -> (i32, i32) {
    %c0_i32 = arith.constant 0 : i32
    %c0_i32_0 = arith.constant 0 : i32
    %c0_i32_1 = arith.constant 0 : i32
    return %c0_i32, %c0_i32_0 : i32, i32
  }
  func.func @transform_8(%arg0: i32, %arg1: i32) -> (i32, i32) {
    %c0_i32 = arith.constant 0 : i32
    %c0_i32_0 = arith.constant 0 : i32
    %c0_i32_1 = arith.constant 0 : i32
    return %c0_i32, %c0_i32_0 : i32, i32
  }
  func.func @transform_9(%arg0: i32, %arg1: i32) -> (i32, i32) {
    %c0_i32 = arith.constant 0 : i32
    %c0_i32_0 = arith.constant 0 : i32
    %c0_i32_1 = arith.constant 0 : i32
    return %c0_i32, %c0_i32_0 : i32, i32
  }
  func.func @transform_10(%arg0: i32, %arg1: i32) -> (i32, i32) {
    %c0_i32 = arith.constant 0 : i32
    %c0_i32_0 = arith.constant 0 : i32
    %c0_i32_1 = arith.constant 0 : i32
    return %c0_i32, %c0_i32_0 : i32, i32
  }
  func.func @transform_11(%arg0: i32, %arg1: i32) -> (i32, i32) {
    %c0_i32 = arith.constant 0 : i32
    %c0_i32_0 = arith.constant 0 : i32
    %c0_i32_1 = arith.constant 0 : i32
    return %c0_i32, %c0_i32_0 : i32, i32
  }
  func.func @transform_12(%arg0: i32, %arg1: i32) -> (i32, i32) {
    %c0_i32 = arith.constant 0 : i32
    %c0_i32_0 = arith.constant 0 : i32
    %c0_i32_1 = arith.constant 0 : i32
    return %c0_i32, %c0_i32_0 : i32, i32
  }
  func.func @transform_13(%arg0: i32, %arg1: i32) -> (i32, i32) {
    %c0_i32 = arith.constant 0 : i32
    %c0_i32_0 = arith.constant 0 : i32
    %c0_i32_1 = arith.constant 0 : i32
    return %c0_i32, %c0_i32_0 : i32, i32
  }
  func.func @transform_14(%arg0: i32, %arg1: i32) -> (i32, i32) {
    %c0_i32 = arith.constant 0 : i32
    %c0_i32_0 = arith.constant 0 : i32
    %c0_i32_1 = arith.constant 0 : i32
    return %c0_i32, %c0_i32_0 : i32, i32
  }
  func.func @transform_15(%arg0: i32, %arg1: i32) -> (i32, i32) {
    %c0_i32 = arith.constant 0 : i32
    %c0_i32_0 = arith.constant 0 : i32
    %c0_i32_1 = arith.constant 0 : i32
    return %c0_i32, %c0_i32_0 : i32, i32
  }
  func.func @transform_16(%arg0: i32, %arg1: i32) -> (i32, i32) {
    %c0_i32 = arith.constant 0 : i32
    %c0_i32_0 = arith.constant 0 : i32
    %c0_i32_1 = arith.constant 0 : i32
    return %c0_i32, %c0_i32_0 : i32, i32
  }
  func.func @transform_17(%arg0: i32, %arg1: i32) -> (i32, i32) {
    %c0_i32 = arith.constant 0 : i32
    %c0_i32_0 = arith.constant 0 : i32
    %c0_i32_1 = arith.constant 0 : i32
    return %c0_i32, %c0_i32_0 : i32, i32
  }
  func.func @transform_18(%arg0: i32, %arg1: i32) -> (i32, i32) {
    %c0_i32 = arith.constant 0 : i32
    %c0_i32_0 = arith.constant 0 : i32
    %c0_i32_1 = arith.constant 0 : i32
    return %c0_i32, %c0_i32_0 : i32, i32
  }
  func.func @transform_19(%arg0: i32, %arg1: i32) -> (i32, i32) {
    %c0_i32 = arith.constant 0 : i32
    %c0_i32_0 = arith.constant 0 : i32
    %c0_i32_1 = arith.constant 0 : i32
    return %c0_i32, %c0_i32_0 : i32, i32
  }
  func.func @transform_20(%arg0: i32, %arg1: i32) -> (i32, i32) {
    %c0_i32 = arith.constant 0 : i32
    %c0_i32_0 = arith.constant 0 : i32
    %c0_i32_1 = arith.constant 0 : i32
    return %c0_i32, %c0_i32_0 : i32, i32
  }
  func.func @transform_21(%arg0: i32, %arg1: i32) -> (i32, i32) {
    %c0_i32 = arith.constant 0 : i32
    %c0_i32_0 = arith.constant 0 : i32
    %c0_i32_1 = arith.constant 0 : i32
    return %c0_i32, %c0_i32_0 : i32, i32
  }
  func.func @transform_22(%arg0: i32, %arg1: i32) -> (i32, i32) {
    %c0_i32 = arith.constant 0 : i32
    %c0_i32_0 = arith.constant 0 : i32
    %c0_i32_1 = arith.constant 0 : i32
    return %c0_i32, %c0_i32_0 : i32, i32
  }
  func.func @transform_23(%arg0: i32, %arg1: i32) -> (i32, i32) {
    %c0_i32 = arith.constant 0 : i32
    %c0_i32_0 = arith.constant 0 : i32
    %c0_i32_1 = arith.constant 0 : i32
    return %c0_i32, %c0_i32_0 : i32, i32
  }
  func.func @transform_24(%arg0: i32, %arg1: i32) -> (i32, i32) {
    %c0_i32 = arith.constant 0 : i32
    %c0_i32_0 = arith.constant 0 : i32
    %c0_i32_1 = arith.constant 0 : i32
    return %c0_i32, %c0_i32_0 : i32, i32
  }
  func.func @transform_25(%arg0: i32, %arg1: i32) -> (i32, i32) {
    %c0_i32 = arith.constant 0 : i32
    %c0_i32_0 = arith.constant 0 : i32
    %c0_i32_1 = arith.constant 0 : i32
    return %c0_i32, %c0_i32_0 : i32, i32
  }
  func.func @transform_26(%arg0: i32, %arg1: i32) -> (i32, i32, i32) {
    %c0_i32 = arith.constant 0 : i32
    %c0_i32_0 = arith.constant 0 : i32
    return %arg0, %arg1, %c0_i32 : i32, i32, i32
  }
  func.func @transform_27(%arg0: i32, %arg1: i32) -> (i32, i32, i32, i32) {
    %c0_i32 = arith.constant 0 : i32
    %c0_i32_0 = arith.constant 0 : i32
    %c0_i32_1 = arith.constant 0 : i32
    return %arg0, %c0_i32, %arg1, %c0_i32_0 : i32, i32, i32, i32
  }
  func.func @transform_28(%arg0: i32, %arg1: i32) -> (i32, i32, i32, i32) {
    %c0_i32 = arith.constant 0 : i32
    %c0_i32_0 = arith.constant 0 : i32
    %c0_i32_1 = arith.constant 0 : i32
    return %arg0, %c0_i32, %arg1, %c0_i32_0 : i32, i32, i32, i32
  }
}

</mosaic_0001>

<llo_original>
// kernel: tpu_custom_call.1
$region0: #{tpu_custom_call.1}
  #allocation0 [shape = 'u32[]', space=smem, size = 0x4, offset = 0x4, fixed_abs, tag = 'smem constant byte address 0x4 - core index']
  #allocation1 [shape = 'u32[144,128]{1,0:T(1,128)}', space=vmem, size = 0x12000, scoped, tag = 'internal scratch']
  #allocation2 [shape = 'bf16[8,8,128]{2,1,0:T(8,128)(2,1)}', space=vmem, size = 0x4000, scoped, tag = 'scratch operand']
  #allocation3 [shape = 'bf16[8,8,128]{2,1,0:T(8,128)(2,1)}', space=vmem, size = 0x4000, scoped, tag = 'scratch operand']
  %s0 = inlined_call_operand.vmem [shape: f32[2,8,32], index: 0, kind: input, shape index: {}]
  %s1 = inlined_call_operand.vmem [shape: f32[2,8,32], index: 1, kind: input, shape index: {}]
  %s2 = inlined_call_operand.vmem [shape: f32[2,1,8], index: 2, kind: input, shape index: {}]
  %s3 = inlined_call_operand.vmem [shape: f32[2,8,32], index: 3, kind: input, shape index: {}]
  %s4 = inlined_call_operand.vmem [shape: bf16[32,512], index: 4, kind: input, shape index: {}]
  %s5 = inlined_call_operand.vmem [shape: f32[1,512], index: 5, kind: input, shape index: {}]
  %s6 = inlined_call_operand.vmem [shape: bf16[32,1024], index: 6, kind: input, shape index: {}]
  %s7 = inlined_call_operand.vmem [shape: f32[1,1024], index: 7, kind: input, shape index: {}]
  %s8 = inlined_call_operand.vmem [shape: bf16[512,32], index: 8, kind: input, shape index: {}]
  %s9 = inlined_call_operand.vmem [shape: f32[1,32], index: 9, kind: input, shape index: {}]
  %s10 = inlined_call_operand.vmem [shape: f32[1,32], index: 10, kind: input, shape index: {}]
  %s11 = inlined_call_operand.vmem [shape: f32[1,32], index: 11, kind: input, shape index: {}]
  %s12 = inlined_call_operand.vmem [shape: bf16[32,512], index: 12, kind: input, shape index: {}]
  %s13 = inlined_call_operand.vmem [shape: f32[1,512], index: 13, kind: input, shape index: {}]
  %s14 = inlined_call_operand.vmem [shape: bf16[32,1024], index: 14, kind: input, shape index: {}]
  %s15 = inlined_call_operand.vmem [shape: f32[1,1024], index: 15, kind: input, shape index: {}]
  %s16 = inlined_call_operand.vmem [shape: bf16[512,32], index: 16, kind: input, shape index: {}]
  %s17 = inlined_call_operand.vmem [shape: f32[1,32], index: 17, kind: input, shape index: {}]
  %s18 = inlined_call_operand.vmem [shape: f32[1,32], index: 18, kind: input, shape index: {}]
  %s19 = inlined_call_operand.vmem [shape: f32[1,32], index: 19, kind: input, shape index: {}]
  %s20 = inlined_call_operand.vmem [shape: bf16[32,64], index: 20, kind: input, shape index: {}]
  %s21 = inlined_call_operand.vmem [shape: f32[1,64], index: 21, kind: input, shape index: {}]
  %s22 = inlined_call_operand.vmem [shape: bf16[64,32], index: 22, kind: input, shape index: {}]
  %s23 = inlined_call_operand.vmem [shape: f32[1,32], index: 23, kind: input, shape index: {}]
  %s24 = inlined_call_operand.vmem [shape: f32[1,32], index: 24, kind: input, shape index: {}]
  %s25 = inlined_call_operand.vmem [shape: f32[1,32], index: 25, kind: input, shape index: {}]
  %s26 = inlined_call_operand.hbm [shape: f32[2,8,32], index: 26, kind: output, shape index: {0}]
  %s27 = inlined_call_operand.hbm [shape: bf16[2,4,8,8], index: 27, kind: output, shape index: {1}]
  %s28 = inlined_call_operand.hbm [shape: bf16[2,4,8,8], index: 28, kind: output, shape index: {2}]
  %29 = xla_tuple %s26, %s27, %s28
  %s30 = sld [smem:[#allocation0]]
  $region157: #{tpu_custom_call.1} parent=0
    _
  %s32 = ssub.s32 1, %s30
  %s33 = scalar_select 0, %s32, %s30
  $region1: #{tpu_custom_call.1} parent=0
    #allocation4 [shape = 'u8[8192]{0}', space=vmem, size = 0x2000, scoped, tag = 'output window, operand 0']
    #allocation5 [shape = 's32[2]{0}', space=sflag, size = 0x8, scoped, tag = 'scoped memory for tpu_custom_call.1']
    #allocation6 [shape = 'u8[16384]{0}', space=vmem, size = 0x4000, scoped, tag = 'output window, operand 1']
    #allocation7 [shape = 's32[2]{0}', space=sflag, size = 0x8, scoped, tag = 'scoped memory for tpu_custom_call.1']
    #allocation8 [shape = 'u8[16384]{0}', space=vmem, size = 0x4000, scoped, tag = 'output window, operand 2']
    %34 = vsyncpa [#allocation5], 0
    %s35 = scalar_lea.sflag [#allocation5], 1
    %36 = vsyncpa %s35, 0
    %37 = vsyncpa [#allocation7], 0
    %s38 = scalar_lea.sflag [#allocation7], 1
    %39 = vsyncpa %s38, 0
    loop: start=0, step=1, limit=4
    $region2: #{tpu_custom_call.1} parent=1 // loop_pre_header
      _
    $region3: #{tpu_custom_call.1} parent=1 // loop_header
      %s41 = sphi 0, %s45
      %p42 = scmp.ge.s32.totalorder %s41, 4
      %s48 = sphi 0, %s60
      %s49 = sphi 0, %s56
      %s50 = sphi 0, %s48
      %s51 = sphi 0, %s49
      %s52 = sphi 0, %s50
      %s53 = sphi 0, %s51
      %s65 = sphi 0, %s67
      %s68 = sphi 0, %s65
      %s69 = sphi 0, %s68
      %s85 = sphi 0, %s69
      %s91 = sphi 0, %s93
      %s94 = sphi 0, %s91
      %s95 = sphi 0, %s94
      %s111 = sphi 0, %s95
      %s117 = sphi 0, %s119
      %s120 = sphi 0, %s117
      %s121 = sphi 0, %s120
      %s137 = sphi 0, %s121
      %s143 = sphi 0, %s145
      %s146 = sphi 0, %s143
      %s147 = sphi 0, %s146
      %s163 = sphi 0, %s147
      %s167 = sphi 0, %s167
      %s169 = sphi 0, %s167
      %s170 = sphi 0, %s169
      %s184 = sphi 0, %s170
      %s188 = sphi 0, %s188
      %s190 = sphi 0, %s188
      %s191 = sphi 0, %s190
      %s205 = sphi 0, %s191
      %s209 = sphi 0, %s209
      %s211 = sphi 0, %s209
      %s212 = sphi 0, %s211
      %s226 = sphi 0, %s212
      %s230 = sphi 0, %s230
      %s232 = sphi 0, %s230
      %s233 = sphi 0, %s232
      %s247 = sphi 0, %s233
      %s251 = sphi 0, %s251
      %s253 = sphi 0, %s251
      %s254 = sphi 0, %s253
      %s268 = sphi 0, %s254
      %s272 = sphi 0, %s272
      %s274 = sphi 0, %s272
      %s275 = sphi 0, %s274
      %s289 = sphi 0, %s275
      %s293 = sphi 0, %s293
      %s295 = sphi 0, %s293
      %s296 = sphi 0, %s295
      %s310 = sphi 0, %s296
      %s314 = sphi 0, %s314
      %s316 = sphi 0, %s314
      %s317 = sphi 0, %s316
      %s331 = sphi 0, %s317
      %s335 = sphi 0, %s335
      %s337 = sphi 0, %s335
      %s338 = sphi 0, %s337
      %s352 = sphi 0, %s338
      %s356 = sphi 0, %s356
      %s358 = sphi 0, %s356
      %s359 = sphi 0, %s358
      %s373 = sphi 0, %s359
      %s377 = sphi 0, %s377
      %s379 = sphi 0, %s377
      %s380 = sphi 0, %s379
      %s394 = sphi 0, %s380
      %s398 = sphi 0, %s398
      %s400 = sphi 0, %s398
      %s401 = sphi 0, %s400
      %s415 = sphi 0, %s401
      %s419 = sphi 0, %s419
      %s421 = sphi 0, %s419
      %s422 = sphi 0, %s421
      %s436 = sphi 0, %s422
      %s440 = sphi 0, %s440
      %s442 = sphi 0, %s440
      %s443 = sphi 0, %s442
      %s457 = sphi 0, %s443
      %s461 = sphi 0, %s461
      %s463 = sphi 0, %s461
      %s464 = sphi 0, %s463
      %s478 = sphi 0, %s464
      %s482 = sphi 0, %s482
      %s484 = sphi 0, %s482
      %s485 = sphi 0, %s484
      %s499 = sphi 0, %s485
      %s503 = sphi 0, %s503
      %s505 = sphi 0, %s503
      %s506 = sphi 0, %s505
      %s520 = sphi 0, %s506
      %s524 = sphi 0, %s524
      %s526 = sphi 0, %s524
      %s527 = sphi 0, %s526
      %s541 = sphi 0, %s527
      %s545 = sphi 0, %s545
      %s547 = sphi 0, %s545
      %s548 = sphi 0, %s547
      %s562 = sphi 0, %s548
      %s566 = sphi 0, %s566
      %s568 = sphi 0, %s566
      %s569 = sphi 0, %s568
      %s583 = sphi 0, %s569
      %s587 = sphi 0, %s587
      %s589 = sphi 0, %s587
      %s590 = sphi 0, %s589
      %s604 = sphi 0, %s590
      %s608 = sphi 0, %s608
      %s610 = sphi 0, %s608
      %s611 = sphi 0, %s610
      %s625 = sphi 0, %s611
      %s633 = sphi 0, %s635
      %s636 = sphi 0, %s633
      %s637 = sphi 0, %s636
      %s653 = sphi 0, %s637
      %s661 = sphi 0, %s663
      %s664 = sphi 0, %s661
      %s665 = sphi 0, %s664
      %s681 = sphi 0, %s665
      %s689 = sphi 0, %s691
      %s692 = sphi 0, %s689
      %s693 = sphi 0, %s692
      %s709 = sphi 0, %s693
    $region4: #{tpu_custom_call.1} parent=1 // loop_header_branch
      %44 = sbr.rel (%p42) target = $region8
    $region5: #{tpu_custom_call.1} parent=1 // loop_body
      %s46 = ssub.s32 %s41, 1
      %s47 = ssub.s32 %s41, 2
      %s54 = sadd.s32 1, %s49
      %p55 = scmp.ge.s32.totalorder %s54, 1
      %s56 = scalar_select %p55, 0, %s54
      %s57 = sadd.s32 1, %s48
      %s58 = scalar_select %p55, %s57, %s48
      %p59 = scmp.ge.s32.totalorder %s58, 2
      %s60 = scalar_select %p59, 0, %s58
      %s61 = ssub.s32 %s48, %s60
      %s62 = ssub.s32 %s49, %s56
      %s63 = sor.u32 %s61, %s62
      %p64 = scmp.eq.s32.totalorder %s63, 0
      %s66 = sadd.s32 %s65, 1
      %s67 = scalar_select %p64, %s65, %s66
      %p70 = pneg %p64
      %p71 = scmp.eq.s32.totalorder %s41, 1
      %p72 = por %p70, %p71
      %p73 = scmp.ne.s32.totalorder %s65, %s68
      %p74 = scmp.eq.s32.totalorder %s41, 0
      %p75 = por %p73, %p74
      %p76 = scmp.ne.s32.totalorder %s65, %s68
      %p77 = scmp.eq.s32.totalorder %s46, 1
      %p78 = por %p76, %p77
      %p79 = scmp.ne.s32.totalorder %s68, %s69
      %p80 = scmp.eq.s32.totalorder %s46, 0
      %p81 = por %p79, %p80
      %p82 = scmp.ne.s32.totalorder %s68, %s69
      %p83 = scmp.eq.s32.totalorder %s47, 1
      %p84 = por %p82, %p83
      %p86 = scmp.ne.s32.totalorder %s69, %s85
      %p87 = scmp.eq.s32.totalorder %s47, 0
      %p88 = por %p86, %p87
      %s89 = ssub.s32 %s48, %s60
      %p90 = scmp.eq.s32.totalorder %s89, 0
      %s92 = sadd.s32 %s91, 1
      %s93 = scalar_select %p90, %s91, %s92
      %p96 = pneg %p90
      %p97 = scmp.eq.s32.totalorder %s41, 1
      %p98 = por %p96, %p97
      %p99 = scmp.ne.s32.totalorder %s91, %s94
      %p100 = scmp.eq.s32.totalorder %s41, 0
      %p101 = por %p99, %p100
      %p102 = scmp.ne.s32.totalorder %s91, %s94
      %p103 = scmp.eq.s32.totalorder %s46, 1
      %p104 = por %p102, %p103
      %p105 = scmp.ne.s32.totalorder %s94, %s95
      %p106 = scmp.eq.s32.totalorder %s46, 0
      %p107 = por %p105, %p106
      %p108 = scmp.ne.s32.totalorder %s94, %s95
      %p109 = scmp.eq.s32.totalorder %s47, 1
      %p110 = por %p108, %p109
      %p112 = scmp.ne.s32.totalorder %s95, %s111
      %p113 = scmp.eq.s32.totalorder %s47, 0
      %p114 = por %p112, %p113
      %s115 = ssub.s32 %s48, %s60
      %p116 = scmp.eq.s32.totalorder %s115, 0
      %s118 = sadd.s32 %s117, 1
      %s119 = scalar_select %p116, %s117, %s118
      %p122 = pneg %p116
      %p123 = scmp.eq.s32.totalorder %s41, 1
      %p124 = por %p122, %p123
      %p125 = scmp.ne.s32.totalorder %s117, %s120
      %p126 = scmp.eq.s32.totalorder %s41, 0
      %p127 = por %p125, %p126
      %p128 = scmp.ne.s32.totalorder %s117, %s120
      %p129 = scmp.eq.s32.totalorder %s46, 1
      %p130 = por %p128, %p129
      %p131 = scmp.ne.s32.totalorder %s120, %s121
      %p132 = scmp.eq.s32.totalorder %s46, 0
      %p133 = por %p131, %p132
      %p134 = scmp.ne.s32.totalorder %s120, %s121
      %p135 = scmp.eq.s32.totalorder %s47, 1
      %p136 = por %p134, %p135
      %p138 = scmp.ne.s32.totalorder %s121, %s137
      %p139 = scmp.eq.s32.totalorder %s47, 0
      %p140 = por %p138, %p139
      %s141 = ssub.s32 %s48, %s60
      %p142 = scmp.eq.s32.totalorder %s141, 0
      %s144 = sadd.s32 %s143, 1
      %s145 = scalar_select %p142, %s143, %s144
      %p148 = pneg %p142
      %p149 = scmp.eq.s32.totalorder %s41, 1
      %p150 = por %p148, %p149
      %p151 = scmp.ne.s32.totalorder %s143, %s146
      %p152 = scmp.eq.s32.totalorder %s41, 0
      %p153 = por %p151, %p152
      %p154 = scmp.ne.s32.totalorder %s143, %s146
      %p155 = scmp.eq.s32.totalorder %s46, 1
      %p156 = por %p154, %p155
      %p157 = scmp.ne.s32.totalorder %s146, %s147
      %p158 = scmp.eq.s32.totalorder %s46, 0
      %p159 = por %p157, %p158
      %p160 = scmp.ne.s32.totalorder %s146, %s147
      %p161 = scmp.eq.s32.totalorder %s47, 1
      %p162 = por %p160, %p161
      %p164 = scmp.ne.s32.totalorder %s147, %s163
      %p165 = scmp.eq.s32.totalorder %s47, 0
      %p166 = por %p164, %p165
      %s168 = sadd.s32 %s167, 1
      %p171 = scmp.eq.s32.totalorder %s41, 1
      %p172 = scmp.ne.s32.totalorder %s167, %s169
      %p173 = scmp.eq.s32.totalorder %s41, 0
      %p174 = por %p172, %p173
      %p175 = scmp.ne.s32.totalorder %s167, %s169
      %p176 = scmp.eq.s32.totalorder %s46, 1
      %p177 = por %p175, %p176
      %p178 = scmp.ne.s32.totalorder %s169, %s170
      %p179 = scmp.eq.s32.totalorder %s46, 0
      %p180 = por %p178, %p179
      %p181 = scmp.ne.s32.totalorder %s169, %s170
      %p182 = scmp.eq.s32.totalorder %s47, 1
      %p183 = por %p181, %p182
      %p185 = scmp.ne.s32.totalorder %s170, %s184
      %p186 = scmp.eq.s32.totalorder %s47, 0
      %p187 = por %p185, %p186
      %s189 = sadd.s32 %s188, 1
      %p192 = scmp.eq.s32.totalorder %s41, 1
      %p193 = scmp.ne.s32.totalorder %s188, %s190
      %p194 = scmp.eq.s32.totalorder %s41, 0
      %p195 = por %p193, %p194
      %p196 = scmp.ne.s32.totalorder %s188, %s190
      %p197 = scmp.eq.s32.totalorder %s46, 1
      %p198 = por %p196, %p197
      %p199 = scmp.ne.s32.totalorder %s190, %s191
      %p200 = scmp.eq.s32.totalorder %s46, 0
      %p201 = por %p199, %p200
      %p202 = scmp.ne.s32.totalorder %s190, %s191
      %p203 = scmp.eq.s32.totalorder %s47, 1
      %p204 = por %p202, %p203
      %p206 = scmp.ne.s32.totalorder %s191, %s205
      %p207 = scmp.eq.s32.totalorder %s47, 0
      %p208 = por %p206, %p207
      %s210 = sadd.s32 %s209, 1
      %p213 = scmp.eq.s32.totalorder %s41, 1
      %p214 = scmp.ne.s32.totalorder %s209, %s211
      %p215 = scmp.eq.s32.totalorder %s41, 0
      %p216 = por %p214, %p215
      %p217 = scmp.ne.s32.totalorder %s209, %s211
      %p218 = scmp.eq.s32.totalorder %s46, 1
      %p219 = por %p217, %p218
      %p220 = scmp.ne.s32.totalorder %s211, %s212
      %p221 = scmp.eq.s32.totalorder %s46, 0
      %p222 = por %p220, %p221
      %p223 = scmp.ne.s32.totalorder %s211, %s212
      %p224 = scmp.eq.s32.totalorder %s47, 1
      %p225 = por %p223, %p224
      %p227 = scmp.ne.s32.totalorder %s212, %s226
      %p228 = scmp.eq.s32.totalorder %s47, 0
      %p229 = por %p227, %p228
      %s231 = sadd.s32 %s230, 1
      %p234 = scmp.eq.s32.totalorder %s41, 1
      %p235 = scmp.ne.s32.totalorder %s230, %s232
      %p236 = scmp.eq.s32.totalorder %s41, 0
      %p237 = por %p235, %p236
      %p238 = scmp.ne.s32.totalorder %s230, %s232
      %p239 = scmp.eq.s32.totalorder %s46, 1
      %p240 = por %p238, %p239
      %p241 = scmp.ne.s32.totalorder %s232, %s233
      %p242 = scmp.eq.s32.totalorder %s46, 0
      %p243 = por %p241, %p242
      %p244 = scmp.ne.s32.totalorder %s232, %s233
      %p245 = scmp.eq.s32.totalorder %s47, 1
      %p246 = por %p244, %p245
      %p248 = scmp.ne.s32.totalorder %s233, %s247
      %p249 = scmp.eq.s32.totalorder %s47, 0
      %p250 = por %p248, %p249
      %s252 = sadd.s32 %s251, 1
      %p255 = scmp.eq.s32.totalorder %s41, 1
      %p256 = scmp.ne.s32.totalorder %s251, %s253
      %p257 = scmp.eq.s32.totalorder %s41, 0
      %p258 = por %p256, %p257
      %p259 = scmp.ne.s32.totalorder %s251, %s253
      %p260 = scmp.eq.s32.totalorder %s46, 1
      %p261 = por %p259, %p260
      %p262 = scmp.ne.s32.totalorder %s253, %s254
      %p263 = scmp.eq.s32.totalorder %s46, 0
      %p264 = por %p262, %p263
      %p265 = scmp.ne.s32.totalorder %s253, %s254
      %p266 = scmp.eq.s32.totalorder %s47, 1
      %p267 = por %p265, %p266
      %p269 = scmp.ne.s32.totalorder %s254, %s268
      %p270 = scmp.eq.s32.totalorder %s47, 0
      %p271 = por %p269, %p270
      %s273 = sadd.s32 %s272, 1
      %p276 = scmp.eq.s32.totalorder %s41, 1
      %p277 = scmp.ne.s32.totalorder %s272, %s274
      %p278 = scmp.eq.s32.totalorder %s41, 0
      %p279 = por %p277, %p278
      %p280 = scmp.ne.s32.totalorder %s272, %s274
      %p281 = scmp.eq.s32.totalorder %s46, 1
      %p282 = por %p280, %p281
      %p283 = scmp.ne.s32.totalorder %s274, %s275
      %p284 = scmp.eq.s32.totalorder %s46, 0
      %p285 = por %p283, %p284
      %p286 = scmp.ne.s32.totalorder %s274, %s275
      %p287 = scmp.eq.s32.totalorder %s47, 1
      %p288 = por %p286, %p287
      %p290 = scmp.ne.s32.totalorder %s275, %s289
      %p291 = scmp.eq.s32.totalorder %s47, 0
      %p292 = por %p290, %p291
      %s294 = sadd.s32 %s293, 1
      %p297 = scmp.eq.s32.totalorder %s41, 1
      %p298 = scmp.ne.s32.totalorder %s293, %s295
      %p299 = scmp.eq.s32.totalorder %s41, 0
      %p300 = por %p298, %p299
      %p301 = scmp.ne.s32.totalorder %s293, %s295
      %p302 = scmp.eq.s32.totalorder %s46, 1
      %p303 = por %p301, %p302
      %p304 = scmp.ne.s32.totalorder %s295, %s296
      %p305 = scmp.eq.s32.totalorder %s46, 0
      %p306 = por %p304, %p305
      %p307 = scmp.ne.s32.totalorder %s295, %s296
      %p308 = scmp.eq.s32.totalorder %s47, 1
      %p309 = por %p307, %p308
      %p311 = scmp.ne.s32.totalorder %s296, %s310
      %p312 = scmp.eq.s32.totalorder %s47, 0
      %p313 = por %p311, %p312
      %s315 = sadd.s32 %s314, 1
      %p318 = scmp.eq.s32.totalorder %s41, 1
      %p319 = scmp.ne.s32.totalorder %s314, %s316
      %p320 = scmp.eq.s32.totalorder %s41, 0
      %p321 = por %p319, %p320
      %p322 = scmp.ne.s32.totalorder %s314, %s316
      %p323 = scmp.eq.s32.totalorder %s46, 1
      %p324 = por %p322, %p323
      %p325 = scmp.ne.s32.totalorder %s316, %s317
      %p326 = scmp.eq.s32.totalorder %s46, 0
      %p327 = por %p325, %p326
      %p328 = scmp.ne.s32.totalorder %s316, %s317
      %p329 = scmp.eq.s32.totalorder %s47, 1
      %p330 = por %p328, %p329
      %p332 = scmp.ne.s32.totalorder %s317, %s331
      %p333 = scmp.eq.s32.totalorder %s47, 0
      %p334 = por %p332, %p333
      %s336 = sadd.s32 %s335, 1
      %p339 = scmp.eq.s32.totalorder %s41, 1
      %p340 = scmp.ne.s32.totalorder %s335, %s337
      %p341 = scmp.eq.s32.totalorder %s41, 0
      %p342 = por %p340, %p341
      %p343 = scmp.ne.s32.totalorder %s335, %s337
      %p344 = scmp.eq.s32.totalorder %s46, 1
      %p345 = por %p343, %p344
      %p346 = scmp.ne.s32.totalorder %s337, %s338
      %p347 = scmp.eq.s32.totalorder %s46, 0
      %p348 = por %p346, %p347
      %p349 = scmp.ne.s32.totalorder %s337, %s338
      %p350 = scmp.eq.s32.totalorder %s47, 1
      %p351 = por %p349, %p350
      %p353 = scmp.ne.s32.totalorder %s338, %s352
      %p354 = scmp.eq.s32.totalorder %s47, 0
      %p355 = por %p353, %p354
      %s357 = sadd.s32 %s356, 1
      %p360 = scmp.eq.s32.totalorder %s41, 1
      %p361 = scmp.ne.s32.totalorder %s356, %s358
      %p362 = scmp.eq.s32.totalorder %s41, 0
      %p363 = por %p361, %p362
      %p364 = scmp.ne.s32.totalorder %s356, %s358
      %p365 = scmp.eq.s32.totalorder %s46, 1
      %p366 = por %p364, %p365
      %p367 = scmp.ne.s32.totalorder %s358, %s359
      %p368 = scmp.eq.s32.totalorder %s46, 0
      %p369 = por %p367, %p368
      %p370 = scmp.ne.s32.totalorder %s358, %s359
      %p371 = scmp.eq.s32.totalorder %s47, 1
      %p372 = por %p370, %p371
      %p374 = scmp.ne.s32.totalorder %s359, %s373
      %p375 = scmp.eq.s32.totalorder %s47, 0
      %p376 = por %p374, %p375
      %s378 = sadd.s32 %s377, 1
      %p381 = scmp.eq.s32.totalorder %s41, 1
      %p382 = scmp.ne.s32.totalorder %s377, %s379
      %p383 = scmp.eq.s32.totalorder %s41, 0
      %p384 = por %p382, %p383
      %p385 = scmp.ne.s32.totalorder %s377, %s379
      %p386 = scmp.eq.s32.totalorder %s46, 1
      %p387 = por %p385, %p386
      %p388 = scmp.ne.s32.totalorder %s379, %s380
      %p389 = scmp.eq.s32.totalorder %s46, 0
      %p390 = por %p388, %p389
      %p391 = scmp.ne.s32.totalorder %s379, %s380
      %p392 = scmp.eq.s32.totalorder %s47, 1
      %p393 = por %p391, %p392
      %p395 = scmp.ne.s32.totalorder %s380, %s394
      %p396 = scmp.eq.s32.totalorder %s47, 0
      %p397 = por %p395, %p396
      %s399 = sadd.s32 %s398, 1
      %p402 = scmp.eq.s32.totalorder %s41, 1
      %p403 = scmp.ne.s32.totalorder %s398, %s400
      %p404 = scmp.eq.s32.totalorder %s41, 0
      %p405 = por %p403, %p404
      %p406 = scmp.ne.s32.totalorder %s398, %s400
      %p407 = scmp.eq.s32.totalorder %s46, 1
      %p408 = por %p406, %p407
      %p409 = scmp.ne.s32.totalorder %s400, %s401
      %p410 = scmp.eq.s32.totalorder %s46, 0
      %p411 = por %p409, %p410
      %p412 = scmp.ne.s32.totalorder %s400, %s401
      %p413 = scmp.eq.s32.totalorder %s47, 1
      %p414 = por %p412, %p413
      %p416 = scmp.ne.s32.totalorder %s401, %s415
      %p417 = scmp.eq.s32.totalorder %s47, 0
      %p418 = por %p416, %p417
      %s420 = sadd.s32 %s419, 1
      %p423 = scmp.eq.s32.totalorder %s41, 1
      %p424 = scmp.ne.s32.totalorder %s419, %s421
      %p425 = scmp.eq.s32.totalorder %s41, 0
      %p426 = por %p424, %p425
      %p427 = scmp.ne.s32.totalorder %s419, %s421
      %p428 = scmp.eq.s32.totalorder %s46, 1
      %p429 = por %p427, %p428
      %p430 = scmp.ne.s32.totalorder %s421, %s422
      %p431 = scmp.eq.s32.totalorder %s46, 0
      %p432 = por %p430, %p431
      %p433 = scmp.ne.s32.totalorder %s421, %s422
      %p434 = scmp.eq.s32.totalorder %s47, 1
      %p435 = por %p433, %p434
      %p437 = scmp.ne.s32.totalorder %s422, %s436
      %p438 = scmp.eq.s32.totalorder %s47, 0
      %p439 = por %p437, %p438
      %s441 = sadd.s32 %s440, 1
      %p444 = scmp.eq.s32.totalorder %s41, 1
      %p445 = scmp.ne.s32.totalorder %s440, %s442
      %p446 = scmp.eq.s32.totalorder %s41, 0
      %p447 = por %p445, %p446
      %p448 = scmp.ne.s32.totalorder %s440, %s442
      %p449 = scmp.eq.s32.totalorder %s46, 1
      %p450 = por %p448, %p449
      %p451 = scmp.ne.s32.totalorder %s442, %s443
      %p452 = scmp.eq.s32.totalorder %s46, 0
      %p453 = por %p451, %p452
      %p454 = scmp.ne.s32.totalorder %s442, %s443
      %p455 = scmp.eq.s32.totalorder %s47, 1
      %p456 = por %p454, %p455
      %p458 = scmp.ne.s32.totalorder %s443, %s457
      %p459 = scmp.eq.s32.totalorder %s47, 0
      %p460 = por %p458, %p459
      %s462 = sadd.s32 %s461, 1
      %p465 = scmp.eq.s32.totalorder %s41, 1
      %p466 = scmp.ne.s32.totalorder %s461, %s463
      %p467 = scmp.eq.s32.totalorder %s41, 0
      %p468 = por %p466, %p467
      %p469 = scmp.ne.s32.totalorder %s461, %s463
      %p470 = scmp.eq.s32.totalorder %s46, 1
      %p471 = por %p469, %p470
      %p472 = scmp.ne.s32.totalorder %s463, %s464
      %p473 = scmp.eq.s32.totalorder %s46, 0
      %p474 = por %p472, %p473
      %p475 = scmp.ne.s32.totalorder %s463, %s464
      %p476 = scmp.eq.s32.totalorder %s47, 1
      %p477 = por %p475, %p476
      %p479 = scmp.ne.s32.totalorder %s464, %s478
      %p480 = scmp.eq.s32.totalorder %s47, 0
      %p481 = por %p479, %p480
      %s483 = sadd.s32 %s482, 1
      %p486 = scmp.eq.s32.totalorder %s41, 1
      %p487 = scmp.ne.s32.totalorder %s482, %s484
      %p488 = scmp.eq.s32.totalorder %s41, 0
      %p489 = por %p487, %p488
      %p490 = scmp.ne.s32.totalorder %s482, %s484
      %p491 = scmp.eq.s32.totalorder %s46, 1
      %p492 = por %p490, %p491
      %p493 = scmp.ne.s32.totalorder %s484, %s485
      %p494 = scmp.eq.s32.totalorder %s46, 0
      %p495 = por %p493, %p494
      %p496 = scmp.ne.s32.totalorder %s484, %s485
      %p497 = scmp.eq.s32.totalorder %s47, 1
      %p498 = por %p496, %p497
      %p500 = scmp.ne.s32.totalorder %s485, %s499
      %p501 = scmp.eq.s32.totalorder %s47, 0
      %p502 = por %p500, %p501
      %s504 = sadd.s32 %s503, 1
      %p507 = scmp.eq.s32.totalorder %s41, 1
      %p508 = scmp.ne.s32.totalorder %s503, %s505
      %p509 = scmp.eq.s32.totalorder %s41, 0
      %p510 = por %p508, %p509
      %p511 = scmp.ne.s32.totalorder %s503, %s505
      %p512 = scmp.eq.s32.totalorder %s46, 1
      %p513 = por %p511, %p512
      %p514 = scmp.ne.s32.totalorder %s505, %s506
      %p515 = scmp.eq.s32.totalorder %s46, 0
      %p516 = por %p514, %p515
      %p517 = scmp.ne.s32.totalorder %s505, %s506
      %p518 = scmp.eq.s32.totalorder %s47, 1
      %p519 = por %p517, %p518
      %p521 = scmp.ne.s32.totalorder %s506, %s520
      %p522 = scmp.eq.s32.totalorder %s47, 0
      %p523 = por %p521, %p522
      %s525 = sadd.s32 %s524, 1
      %p528 = scmp.eq.s32.totalorder %s41, 1
      %p529 = scmp.ne.s32.totalorder %s524, %s526
      %p530 = scmp.eq.s32.totalorder %s41, 0
      %p531 = por %p529, %p530
      %p532 = scmp.ne.s32.totalorder %s524, %s526
      %p533 = scmp.eq.s32.totalorder %s46, 1
      %p534 = por %p532, %p533
      %p535 = scmp.ne.s32.totalorder %s526, %s527
      %p536 = scmp.eq.s32.totalorder %s46, 0
      %p537 = por %p535, %p536
      %p538 = scmp.ne.s32.totalorder %s526, %s527
      %p539 = scmp.eq.s32.totalorder %s47, 1
      %p540 = por %p538, %p539
      %p542 = scmp.ne.s32.totalorder %s527, %s541
      %p543 = scmp.eq.s32.totalorder %s47, 0
      %p544 = por %p542, %p543
      %s546 = sadd.s32 %s545, 1
      %p549 = scmp.eq.s32.totalorder %s41, 1
      %p550 = scmp.ne.s32.totalorder %s545, %s547
      %p551 = scmp.eq.s32.totalorder %s41, 0
      %p552 = por %p550, %p551
      %p553 = scmp.ne.s32.totalorder %s545, %s547
      %p554 = scmp.eq.s32.totalorder %s46, 1
      %p555 = por %p553, %p554
      %p556 = scmp.ne.s32.totalorder %s547, %s548
      %p557 = scmp.eq.s32.totalorder %s46, 0
      %p558 = por %p556, %p557
      %p559 = scmp.ne.s32.totalorder %s547, %s548
      %p560 = scmp.eq.s32.totalorder %s47, 1
      %p561 = por %p559, %p560
      %p563 = scmp.ne.s32.totalorder %s548, %s562
      %p564 = scmp.eq.s32.totalorder %s47, 0
      %p565 = por %p563, %p564
      %s567 = sadd.s32 %s566, 1
      %p570 = scmp.eq.s32.totalorder %s41, 1
      %p571 = scmp.ne.s32.totalorder %s566, %s568
      %p572 = scmp.eq.s32.totalorder %s41, 0
      %p573 = por %p571, %p572
      %p574 = scmp.ne.s32.totalorder %s566, %s568
      %p575 = scmp.eq.s32.totalorder %s46, 1
      %p576 = por %p574, %p575
      %p577 = scmp.ne.s32.totalorder %s568, %s569
      %p578 = scmp.eq.s32.totalorder %s46, 0
      %p579 = por %p577, %p578
      %p580 = scmp.ne.s32.totalorder %s568, %s569
      %p581 = scmp.eq.s32.totalorder %s47, 1
      %p582 = por %p580, %p581
      %p584 = scmp.ne.s32.totalorder %s569, %s583
      %p585 = scmp.eq.s32.totalorder %s47, 0
      %p586 = por %p584, %p585
      %s588 = sadd.s32 %s587, 1
      %p591 = scmp.eq.s32.totalorder %s41, 1
      %p592 = scmp.ne.s32.totalorder %s587, %s589
      %p593 = scmp.eq.s32.totalorder %s41, 0
      %p594 = por %p592, %p593
      %p595 = scmp.ne.s32.totalorder %s587, %s589
      %p596 = scmp.eq.s32.totalorder %s46, 1
      %p597 = por %p595, %p596
      %p598 = scmp.ne.s32.totalorder %s589, %s590
      %p599 = scmp.eq.s32.totalorder %s46, 0
      %p600 = por %p598, %p599
      %p601 = scmp.ne.s32.totalorder %s589, %s590
      %p602 = scmp.eq.s32.totalorder %s47, 1
      %p603 = por %p601, %p602
      %p605 = scmp.ne.s32.totalorder %s590, %s604
      %p606 = scmp.eq.s32.totalorder %s47, 0
      %p607 = por %p605, %p606
      %s609 = sadd.s32 %s608, 1
      %p612 = scmp.eq.s32.totalorder %s41, 1
      %p613 = scmp.ne.s32.totalorder %s608, %s610
      %p614 = scmp.eq.s32.totalorder %s41, 0
      %p615 = por %p613, %p614
      %p616 = scmp.ne.s32.totalorder %s608, %s610
      %p617 = scmp.eq.s32.totalorder %s46, 1
      %p618 = por %p616, %p617
      %p619 = scmp.ne.s32.totalorder %s610, %s611
      %p620 = scmp.eq.s32.totalorder %s46, 0
      %p621 = por %p619, %p620
      %p622 = scmp.ne.s32.totalorder %s610, %s611
      %p623 = scmp.eq.s32.totalorder %s47, 1
      %p624 = por %p622, %p623
      %p626 = scmp.ne.s32.totalorder %s611, %s625
      %p627 = scmp.eq.s32.totalorder %s47, 0
      %p628 = por %p626, %p627
      %s629 = ssub.s32 %s48, %s60
      %s630 = ssub.s32 %s49, %s56
      %s631 = sor.u32 %s629, %s630
      %p632 = scmp.eq.s32.totalorder %s631, 0
      %s634 = sadd.s32 %s633, 1
      %s635 = scalar_select %p632, %s633, %s634
      %p638 = pneg %p632
      %p639 = scmp.eq.s32.totalorder %s41, 1
      %p640 = por %p638, %p639
      %p641 = scmp.ne.s32.totalorder %s633, %s636
      %p642 = scmp.eq.s32.totalorder %s41, 0
      %p643 = por %p641, %p642
      %p644 = scmp.ne.s32.totalorder %s633, %s636
      %p645 = scmp.eq.s32.totalorder %s46, 1
      %p646 = por %p644, %p645
      %p647 = scmp.ne.s32.totalorder %s636, %s637
      %p648 = scmp.eq.s32.totalorder %s46, 0
      %p649 = por %p647, %p648
      %p650 = scmp.ne.s32.totalorder %s636, %s637
      %p651 = scmp.eq.s32.totalorder %s47, 1
      %p652 = por %p650, %p651
      %p654 = scmp.ne.s32.totalorder %s637, %s653
      %p655 = scmp.eq.s32.totalorder %s47, 0
      %p656 = por %p654, %p655
      %s657 = ssub.s32 %s48, %s60
      %s658 = ssub.s32 %s49, %s56
      %s659 = sor.u32 %s657, %s658
      %p660 = scmp.eq.s32.totalorder %s659, 0
      %s662 = sadd.s32 %s661, 1
      %s663 = scalar_select %p660, %s661, %s662
      %p666 = pneg %p660
      %p667 = scmp.eq.s32.totalorder %s41, 1
      %p668 = por %p666, %p667
      %p669 = scmp.ne.s32.totalorder %s661, %s664
      %p670 = scmp.eq.s32.totalorder %s41, 0
      %p671 = por %p669, %p670
      %p672 = scmp.ne.s32.totalorder %s661, %s664
      %p673 = scmp.eq.s32.totalorder %s46, 1
      %p674 = por %p672, %p673
      %p675 = scmp.ne.s32.totalorder %s664, %s665
      %p676 = scmp.eq.s32.totalorder %s46, 0
      %p677 = por %p675, %p676
      %p678 = scmp.ne.s32.totalorder %s664, %s665
      %p679 = scmp.eq.s32.totalorder %s47, 1
      %p680 = por %p678, %p679
      %p682 = scmp.ne.s32.totalorder %s665, %s681
      %p683 = scmp.eq.s32.totalorder %s47, 0
      %p684 = por %p682, %p683
      %s685 = ssub.s32 %s48, %s60
      %s686 = ssub.s32 %s49, %s56
      %s687 = sor.u32 %s685, %s686
      %p688 = scmp.eq.s32.totalorder %s687, 0
      %s690 = sadd.s32 %s689, 1
      %s691 = scalar_select %p688, %s689, %s690
      %p694 = pneg %p688
      %p695 = scmp.eq.s32.totalorder %s41, 1
      %p696 = por %p694, %p695
      %p697 = scmp.ne.s32.totalorder %s689, %s692
      %p698 = scmp.eq.s32.totalorder %s41, 0
      %p699 = por %p697, %p698
      %p700 = scmp.ne.s32.totalorder %s689, %s692
      %p701 = scmp.eq.s32.totalorder %s46, 1
      %p702 = por %p700, %p701
      %p703 = scmp.ne.s32.totalorder %s692, %s693
      %p704 = scmp.eq.s32.totalorder %s46, 0
      %p705 = por %p703, %p704
      %p706 = scmp.ne.s32.totalorder %s692, %s693
      %p707 = scmp.eq.s32.totalorder %s47, 1
      %p708 = por %p706, %p707
      %p710 = scmp.ne.s32.totalorder %s693, %s709
      %p711 = scmp.eq.s32.totalorder %s47, 0
      %p712 = por %p710, %p711
      %p713 = scmp.le.s32.totalorder 1, %s41
      %p714 = scmp.lt.s32.totalorder %s41, 3
      %p715 = pnand %p713, %p714
      %p716 = pneg %p715
      // Predicated region
      $region9: #{tpu_custom_call.1} parent=5 // pred_check
        _
      $region10: #{tpu_custom_call.1} parent=5 // pred_check_branch
        %718 = sbr.rel (%p715) target = $region12
      $region11: #{tpu_custom_call.1} parent=5 // pred_region
        %s719 = ssub.s32 %s41, 1
        // Predicated region
        $region13: #{tpu_custom_call.1} parent=11 // pred_check
          %p720 = pneg %p180
        $region14: #{tpu_custom_call.1} parent=11 // pred_check_branch
          %722 = sbr.rel (%p720) target = $region16
        $region15: #{tpu_custom_call.1} parent=11 // pred_region
          _
        $region16: #{tpu_custom_call.1} parent=11 // pred_fallthru
          _
        // Predicated region
        $region17: #{tpu_custom_call.1} parent=11 // pred_check
          %p723 = pneg %p201
        $region18: #{tpu_custom_call.1} parent=11 // pred_check_branch
          %725 = sbr.rel (%p723) target = $region20
        $region19: #{tpu_custom_call.1} parent=11 // pred_region
          _
        $region20: #{tpu_custom_call.1} parent=11 // pred_fallthru
          _
        // Predicated region
        $region21: #{tpu_custom_call.1} parent=11 // pred_check
          %p726 = pneg %p222
        $region22: #{tpu_custom_call.1} parent=11 // pred_check_branch
          %728 = sbr.rel (%p726) target = $region24
        $region23: #{tpu_custom_call.1} parent=11 // pred_region
          _
        $region24: #{tpu_custom_call.1} parent=11 // pred_fallthru
          _
        // Predicated region
        $region25: #{tpu_custom_call.1} parent=11 // pred_check
          %p729 = pneg %p243
        $region26: #{tpu_custom_call.1} parent=11 // pred_check_branch
          %731 = sbr.rel (%p729) target = $region28
        $region27: #{tpu_custom_call.1} parent=11 // pred_region
          _
        $region28: #{tpu_custom_call.1} parent=11 // pred_fallthru
          _
        // Predicated region
        $region29: #{tpu_custom_call.1} parent=11 // pred_check
          %p732 = pneg %p264
        $region30: #{tpu_custom_call.1} parent=11 // pred_check_branch
          %734 = sbr.rel (%p732) target = $region32
        $region31: #{tpu_custom_call.1} parent=11 // pred_region
          _
        $region32: #{tpu_custom_call.1} parent=11 // pred_fallthru
          _
        // Predicated region
        $region33: #{tpu_custom_call.1} parent=11 // pred_check
          %p735 = pneg %p285
        $region34: #{tpu_custom_call.1} parent=11 // pred_check_branch
          %737 = sbr.rel (%p735) target = $region36
        $region35: #{tpu_custom_call.1} parent=11 // pred_region
          _
        $region36: #{tpu_custom_call.1} parent=11 // pred_fallthru
          _
        // Predicated region
        $region37: #{tpu_custom_call.1} parent=11 // pred_check
          %p738 = pneg %p306
        $region38: #{tpu_custom_call.1} parent=11 // pred_check_branch
          %740 = sbr.rel (%p738) target = $region40
        $region39: #{tpu_custom_call.1} parent=11 // pred_region
          _
        $region40: #{tpu_custom_call.1} parent=11 // pred_fallthru
          _
        // Predicated region
        $region41: #{tpu_custom_call.1} parent=11 // pred_check
          %p741 = pneg %p327
        $region42: #{tpu_custom_call.1} parent=11 // pred_check_branch
          %743 = sbr.rel (%p741) target = $region44
        $region43: #{tpu_custom_call.1} parent=11 // pred_region
          _
        $region44: #{tpu_custom_call.1} parent=11 // pred_fallthru
          _
        // Predicated region
        $region45: #{tpu_custom_call.1} parent=11 // pred_check
          %p744 = pneg %p348
        $region46: #{tpu_custom_call.1} parent=11 // pred_check_branch
          %746 = sbr.rel (%p744) target = $region48
        $region47: #{tpu_custom_call.1} parent=11 // pred_region
          _
        $region48: #{tpu_custom_call.1} parent=11 // pred_fallthru
          _
        // Predicated region
        $region49: #{tpu_custom_call.1} parent=11 // pred_check
          %p747 = pneg %p369
        $region50: #{tpu_custom_call.1} parent=11 // pred_check_branch
          %749 = sbr.rel (%p747) target = $region52
        $region51: #{tpu_custom_call.1} parent=11 // pred_region
          _
        $region52: #{tpu_custom_call.1} parent=11 // pred_fallthru
          _
        // Predicated region
        $region53: #{tpu_custom_call.1} parent=11 // pred_check
          %p750 = pneg %p390
        $region54: #{tpu_custom_call.1} parent=11 // pred_check_branch
          %752 = sbr.rel (%p750) target = $region56
        $region55: #{tpu_custom_call.1} parent=11 // pred_region
          _
        $region56: #{tpu_custom_call.1} parent=11 // pred_fallthru
          _
        // Predicated region
        $region57: #{tpu_custom_call.1} parent=11 // pred_check
          %p753 = pneg %p411
        $region58: #{tpu_custom_call.1} parent=11 // pred_check_branch
          %755 = sbr.rel (%p753) target = $region60
        $region59: #{tpu_custom_call.1} parent=11 // pred_region
          _
        $region60: #{tpu_custom_call.1} parent=11 // pred_fallthru
          _
        // Predicated region
        $region61: #{tpu_custom_call.1} parent=11 // pred_check
          %p756 = pneg %p432
        $region62: #{tpu_custom_call.1} parent=11 // pred_check_branch
          %758 = sbr.rel (%p756) target = $region64
        $region63: #{tpu_custom_call.1} parent=11 // pred_region
          _
        $region64: #{tpu_custom_call.1} parent=11 // pred_fallthru
          _
        // Predicated region
        $region65: #{tpu_custom_call.1} parent=11 // pred_check
          %p759 = pneg %p453
        $region66: #{tpu_custom_call.1} parent=11 // pred_check_branch
          %761 = sbr.rel (%p759) target = $region68
        $region67: #{tpu_custom_call.1} parent=11 // pred_region
          _
        $region68: #{tpu_custom_call.1} parent=11 // pred_fallthru
          _
        // Predicated region
        $region69: #{tpu_custom_call.1} parent=11 // pred_check
          %p762 = pneg %p474
        $region70: #{tpu_custom_call.1} parent=11 // pred_check_branch
          %764 = sbr.rel (%p762) target = $region72
        $region71: #{tpu_custom_call.1} parent=11 // pred_region
          _
        $region72: #{tpu_custom_call.1} parent=11 // pred_fallthru
          _
        // Predicated region
        $region73: #{tpu_custom_call.1} parent=11 // pred_check
          %p765 = pneg %p495
        $region74: #{tpu_custom_call.1} parent=11 // pred_check_branch
          %767 = sbr.rel (%p765) target = $region76
        $region75: #{tpu_custom_call.1} parent=11 // pred_region
          _
        $region76: #{tpu_custom_call.1} parent=11 // pred_fallthru
          _
        // Predicated region
        $region77: #{tpu_custom_call.1} parent=11 // pred_check
          %p768 = pneg %p516
        $region78: #{tpu_custom_call.1} parent=11 // pred_check_branch
          %770 = sbr.rel (%p768) target = $region80
        $region79: #{tpu_custom_call.1} parent=11 // pred_region
          _
        $region80: #{tpu_custom_call.1} parent=11 // pred_fallthru
          _
        // Predicated region
        $region81: #{tpu_custom_call.1} parent=11 // pred_check
          %p771 = pneg %p537
        $region82: #{tpu_custom_call.1} parent=11 // pred_check_branch
          %773 = sbr.rel (%p771) target = $region84
        $region83: #{tpu_custom_call.1} parent=11 // pred_region
          _
        $region84: #{tpu_custom_call.1} parent=11 // pred_fallthru
          _
        // Predicated region
        $region85: #{tpu_custom_call.1} parent=11 // pred_check
          %p774 = pneg %p558
        $region86: #{tpu_custom_call.1} parent=11 // pred_check_branch
          %776 = sbr.rel (%p774) target = $region88
        $region87: #{tpu_custom_call.1} parent=11 // pred_region
          _
        $region88: #{tpu_custom_call.1} parent=11 // pred_fallthru
          _
        // Predicated region
        $region89: #{tpu_custom_call.1} parent=11 // pred_check
          %p777 = pneg %p579
        $region90: #{tpu_custom_call.1} parent=11 // pred_check_branch
          %779 = sbr.rel (%p777) target = $region92
        $region91: #{tpu_custom_call.1} parent=11 // pred_region
          _
        $region92: #{tpu_custom_call.1} parent=11 // pred_fallthru
          _
        // Predicated region
        $region93: #{tpu_custom_call.1} parent=11 // pred_check
          %p780 = pneg %p600
        $region94: #{tpu_custom_call.1} parent=11 // pred_check_branch
          %782 = sbr.rel (%p780) target = $region96
        $region95: #{tpu_custom_call.1} parent=11 // pred_region
          _
        $region96: #{tpu_custom_call.1} parent=11 // pred_fallthru
          _
        // Predicated region
        $region97: #{tpu_custom_call.1} parent=11 // pred_check
          %p783 = pneg %p621
        $region98: #{tpu_custom_call.1} parent=11 // pred_check_branch
          %785 = sbr.rel (%p783) target = $region100
        $region99: #{tpu_custom_call.1} parent=11 // pred_region
          _
        $region100: #{tpu_custom_call.1} parent=11 // pred_fallthru
          _
      $region12: #{tpu_custom_call.1} parent=5 // pred_fallthru
        _
      %p786 = scmp.lt.s32.totalorder %s41, 2
      // Predicated region
      $region101: #{tpu_custom_call.1} parent=5 // pred_check
        %p787 = pneg %p786
      $region102: #{tpu_custom_call.1} parent=5 // pred_check_branch
        %789 = sbr.rel (%p787) target = $region104
      $region103: #{tpu_custom_call.1} parent=5 // pred_region
        // Predicated region
        $region105: #{tpu_custom_call.1} parent=103 // pred_check
          %p790 = pneg %p75
        $region106: #{tpu_custom_call.1} parent=103 // pred_check_branch
          %792 = sbr.rel (%p790) target = $region108
        $region107: #{tpu_custom_call.1} parent=103 // pred_region
          %p793 = scmp.lt.s32.totalorder %s48, 1
          %s794 = scalar_select %p793, %s48, 1
          %p795 = scmp.lt.s32.totalorder %s49, 0
          %s796 = scalar_select %p795, %s49, 0
          %s797 = sadd.s32 %s796, %s794
          %s798 = smul.addr %s797, 8
          %s799 = scalar_lea.vmem %s0, %s798
        $region108: #{tpu_custom_call.1} parent=103 // pred_fallthru
          _
        // Predicated region
        $region109: #{tpu_custom_call.1} parent=103 // pred_check
          %p800 = pneg %p101
        $region110: #{tpu_custom_call.1} parent=103 // pred_check_branch
          %802 = sbr.rel (%p800) target = $region112
        $region111: #{tpu_custom_call.1} parent=103 // pred_region
          %p803 = scmp.lt.s32.totalorder %s48, 1
          %s804 = scalar_select %p803, %s48, 1
          %s805 = smul.addr %s804, 8
          %s806 = scalar_lea.vmem %s1, %s805
        $region112: #{tpu_custom_call.1} parent=103 // pred_fallthru
          _
        // Predicated region
        $region113: #{tpu_custom_call.1} parent=103 // pred_check
          %p807 = pneg %p127
        $region114: #{tpu_custom_call.1} parent=103 // pred_check_branch
          %809 = sbr.rel (%p807) target = $region116
        $region115: #{tpu_custom_call.1} parent=103 // pred_region
          %p810 = scmp.lt.s32.totalorder %s48, 1
          %s811 = scalar_select %p810, %s48, 1
          %s812 = scalar_lea.vmem %s2, %s811
        $region116: #{tpu_custom_call.1} parent=103 // pred_fallthru
          _
        // Predicated region
        $region117: #{tpu_custom_call.1} parent=103 // pred_check
          %p813 = pneg %p153
        $region118: #{tpu_custom_call.1} parent=103 // pred_check_branch
          %815 = sbr.rel (%p813) target = $region120
        $region119: #{tpu_custom_call.1} parent=103 // pred_region
          %p816 = scmp.lt.s32.totalorder %s48, 1
          %s817 = scalar_select %p816, %s48, 1
          %s818 = smul.addr %s817, 8
          %s819 = scalar_lea.vmem %s3, %s818
        $region120: #{tpu_custom_call.1} parent=103 // pred_fallthru
          _
      $region104: #{tpu_custom_call.1} parent=5 // pred_fallthru
        _
      %p820 = scmp.le.s32.totalorder 1, %s41
      %p821 = scmp.lt.s32.totalorder %s41, 3
      %p822 = pnand %p820, %p821
      %p823 = pneg %p822
      // Predicated region
      $region121: #{tpu_custom_call.1} parent=5 // pred_check
        _
      $region122: #{tpu_custom_call.1} parent=5 // pred_check_branch
        %825 = sbr.rel (%p822) target = $region124
      $region123: #{tpu_custom_call.1} parent=5 // pred_region
        %s826 = ssub.s32 %s41, 1
        %p827 = scmp.lt.s32.totalorder %s50, 1
        %s828 = scalar_select %p827, %s50, 1
        %p829 = scmp.lt.s32.totalorder %s51, 0
        %s830 = scalar_select %p829, %s51, 0
        %s831 = sadd.s32 %s830, %s828
        %s832 = smul.addr %s831, 8
        %s833 = scalar_lea.vmem %s0, %s832
        %p834 = pneg %p81
        %p835 = pneg %p78
        %p836 = scmp.lt.s32.totalorder %s50, 1
        %s837 = scalar_select %p836, %s50, 1
        %s838 = smul.addr %s837, 8
        %s839 = scalar_lea.vmem %s1, %s838
        %p840 = pneg %p107
        %p841 = pneg %p104
        %p842 = scmp.lt.s32.totalorder %s50, 1
        %s843 = scalar_select %p842, %s50, 1
        %s844 = scalar_lea.vmem %s2, %s843
        %p845 = pneg %p133
        %p846 = pneg %p130
        %p847 = scmp.lt.s32.totalorder %s50, 1
        %s848 = scalar_select %p847, %s50, 1
        %s849 = smul.addr %s848, 8
        %s850 = scalar_lea.vmem %s3, %s849
        %p851 = pneg %p159
        %p852 = pneg %p156
        %p853 = pneg %p180
        %p854 = pneg %p177
        %p855 = pneg %p201
        %p856 = pneg %p198
        %p857 = pneg %p222
        %p858 = pneg %p219
        %p859 = pneg %p243
        %p860 = pneg %p240
        %p861 = pneg %p264
        %p862 = pneg %p261
        %p863 = pneg %p285
        %p864 = pneg %p282
        %p865 = pneg %p306
        %p866 = pneg %p303
        %p867 = pneg %p327
        %p868 = pneg %p324
        %p869 = pneg %p348
        %p870 = pneg %p345
        %p871 = pneg %p369
        %p872 = pneg %p366
        %p873 = pneg %p390
        %p874 = pneg %p387
        %p875 = pneg %p411
        %p876 = pneg %p408
        %p877 = pneg %p432
        %p878 = pneg %p429
        %p879 = pneg %p453
        %p880 = pneg %p450
        %p881 = pneg %p474
        %p882 = pneg %p471
        %p883 = pneg %p495
        %p884 = pneg %p492
        %p885 = pneg %p516
        %p886 = pneg %p513
        %p887 = pneg %p537
        %p888 = pneg %p534
        %p889 = pneg %p558
        %p890 = pneg %p555
        %p891 = pneg %p579
        %p892 = pneg %p576
        %p893 = pneg %p600
        %p894 = pneg %p597
        %p895 = pneg %p621
        %p896 = pneg %p618
        %p897 = pneg %p649
        %p898 = pneg %p646
        %s899 = sand.u32 %s636, 1
        %s900 = scalar_lea.sflag [#allocation5], %s899
        %s901 = sand.u32 %s636, 1
        %s902 = smul.addr %s901, 8
        %s903 = scalar_lea.vmem [#allocation4], %s902
        %p904 = pneg %p677
        %p905 = pneg %p674
        %s906 = sand.u32 %s46, 1
        %s907 = scalar_lea.sflag [#allocation7], %s906
        %s908 = sand.u32 %s664, 1
        %s909 = smul.addr %s908, 16
        %s910 = scalar_lea.vmem [#allocation6], %s909
        %p911 = pneg %p705
        %p912 = pneg %p702
        %s913 = sand.u32 %s46, 1
        %s914 = scalar_lea.sflag [#allocation7], %s913
        %s915 = sand.u32 %s692, 1
        %s916 = smul.addr %s915, 16
        %s917 = scalar_lea.vmem [#allocation8], %s916
        %p918 = scmp.lt.s32.totalorder %s50, 1
        %s919 = scalar_select %p918, %s50, 1
        %p920 = scmp.lt.s32.totalorder %s51, 0
        %s921 = scalar_select %p920, %s51, 0
        %s922 = sadd.s32 %s921, %s919
        %s923 = smul.addr %s922, 8
        %s924 = scalar_lea.vmem %s0, %s923
        %p925 = scmp.lt.s32.totalorder %s50, 1
        %s926 = scalar_select %p925, %s50, 1
        %s927 = smul.addr %s926, 8
        %s928 = scalar_lea.vmem %s1, %s927
        %p929 = scmp.lt.s32.totalorder %s50, 1
        %s930 = scalar_select %p929, %s50, 1
        %s931 = scalar_lea.vmem %s2, %s930
        %p932 = scmp.lt.s32.totalorder %s50, 1
        %s933 = scalar_select %p932, %s50, 1
        %s934 = smul.addr %s933, 8
        %s935 = scalar_lea.vmem %s3, %s934
        %p937 = scmp.eq.s32.totalorder %s51, 0
        // Predicated region
        $region125: #{tpu_custom_call.1} parent=123 // pred_check
          %p938 = pneg %p937
        $region126: #{tpu_custom_call.1} parent=123 // pred_check_branch
          %940 = sbr.rel (%p938) target = $region128
        $region127: #{tpu_custom_call.1} parent=123 // pred_region
          %v941 = vld [vmem:[%s928] sm:$0xff]
          %v942 = vpack.c.bf16 %v941, %v941
          %v943 = vld [vmem:[%s6] sm:$0xff]
          %v944 = vld [vmem:[%s6 + $0x8] sm:$0xff]
          %v945 = vld [vmem:[%s6 + $0x10] sm:$0xff]
          %v946 = vld [vmem:[%s6 + $0x18] sm:$0xff]
          %v947 = vld [vmem:[%s6 + $0x20] sm:$0xff]
          %v948 = vld [vmem:[%s6 + $0x28] sm:$0xff]
          %v949 = vld [vmem:[%s6 + $0x30] sm:$0xff]
          %v950 = vld [vmem:[%s6 + $0x38] sm:$0xff]
          %v951 = vld [vmem:[%s6 + $0x40] sm:$0xff]
          %v952 = vld [vmem:[%s6 + $0x48] sm:$0xff]
          %v953 = vld [vmem:[%s6 + $0x50] sm:$0xff]
          %v954 = vld [vmem:[%s6 + $0x58] sm:$0xff]
          %v955 = vld [vmem:[%s6 + $0x60] sm:$0xff]
          %v956 = vld [vmem:[%s6 + $0x68] sm:$0xff]
          %v957 = vld [vmem:[%s6 + $0x70] sm:$0xff]
          %v958 = vld [vmem:[%s6 + $0x78] sm:$0xff]
          %v959 = vld [vmem:[%s7] sm:$0xff]
          %v961 = vlaneseq
          %v962 = vshrl.u32 %v961, 7
          %v963 = vsub.s32 0, %v962
          %v964 = vrot.slane %v959, %v963
          %v965 = vlaneseq
          %v966 = vshrl.u32 %v965, 7
          %v967 = vsub.s32 1, %v966
          %v968 = vrot.slane %v959, %v967
          %v969 = vlaneseq
          %v970 = vshrl.u32 %v969, 7
          %v971 = vsub.s32 2, %v970
          %v972 = vrot.slane %v959, %v971
          %v973 = vlaneseq
          %v974 = vshrl.u32 %v973, 7
          %v975 = vsub.s32 3, %v974
          %v976 = vrot.slane %v959, %v975
          %v977 = vlaneseq
          %v978 = vshrl.u32 %v977, 7
          %v979 = vsub.s32 4, %v978
          %v980 = vrot.slane %v959, %v979
          %v981 = vlaneseq
          %v982 = vshrl.u32 %v981, 7
          %v983 = vsub.s32 5, %v982
          %v984 = vrot.slane %v959, %v983
          %v985 = vlaneseq
          %v986 = vshrl.u32 %v985, 7
          %v987 = vsub.s32 6, %v986
          %v988 = vrot.slane %v959, %v987
          %v989 = vlaneseq
          %v990 = vshrl.u32 %v989, 7
          %v991 = vsub.s32 7, %v990
          %v992 = vrot.slane %v959, %v991
          %v1017 = vunpack.c.l.b16 %v943
          %v1018 = vunpack.c.h.b16 %v943
          %v1019 = vunpack.c.l.b16 %v944
          %v1020 = vunpack.c.h.b16 %v944
          %v1021 = vunpack.c.l.b16 %v945
          %v1022 = vunpack.c.h.b16 %v945
          %v1023 = vunpack.c.l.b16 %v946
          %v1024 = vunpack.c.h.b16 %v946
          %v1025 = vunpack.c.l.b16 %v947
          %v1026 = vunpack.c.h.b16 %v947
          %v1027 = vunpack.c.l.b16 %v948
          %v1028 = vunpack.c.h.b16 %v948
          %v1029 = vunpack.c.l.b16 %v949
          %v1030 = vunpack.c.h.b16 %v949
          %v1031 = vunpack.c.l.b16 %v950
          %v1032 = vunpack.c.h.b16 %v950
          %v1033 = vunpack.c.l.b16 %v951
          %v1034 = vunpack.c.h.b16 %v951
          %v1035 = vunpack.c.l.b16 %v952
          %v1036 = vunpack.c.h.b16 %v952
          %v1037 = vunpack.c.l.b16 %v953
          %v1038 = vunpack.c.h.b16 %v953
          %v1039 = vunpack.c.l.b16 %v954
          %v1040 = vunpack.c.h.b16 %v954
          %v1041 = vunpack.c.l.b16 %v955
          %v1042 = vunpack.c.h.b16 %v955
          %v1043 = vunpack.c.l.b16 %v956
          %v1044 = vunpack.c.h.b16 %v956
          %v1045 = vunpack.c.l.b16 %v957
          %v1046 = vunpack.c.h.b16 %v957
          %v1047 = vunpack.c.l.b16 %v958
          %v1048 = vunpack.c.h.b16 %v958
          %v1049 = vpack.c.b16 %v1025, %v1017
          %v1050 = vpack.c.b16 %v1026, %v1018
          %v1051 = vpack.c.b16 %v1027, %v1019
          %v1052 = vpack.c.b16 %v1028, %v1020
          %v1053 = vpack.c.b16 %v1029, %v1021
          %v1054 = vpack.c.b16 %v1030, %v1022
          %v1055 = vpack.c.b16 %v1031, %v1023
          %v1056 = vpack.c.b16 %v1032, %v1024
          %v1057 = vpack.c.b16 %v1041, %v1033
          %v1058 = vpack.c.b16 %v1042, %v1034
          %v1059 = vpack.c.b16 %v1043, %v1035
          %v1060 = vpack.c.b16 %v1044, %v1036
          %v1061 = vpack.c.b16 %v1045, %v1037
          %v1062 = vpack.c.b16 %v1046, %v1038
          %v1063 = vpack.c.b16 %v1047, %v1039
          %v1064 = vpack.c.b16 %v1048, %v1040
          %vm1081 = vcmask 261120
          %v1083 = vsel %vm1081, %v942, 0
          %1085 = vmatprep.subr.bf16.mxu0 0
          %1086 = vmatpush1.bf16.msra.mxu0 0
          %1087 = vmatprep.subr.bf16.mxu0 0
          %1088 = vmatpush1.bf16.msra.mxu0 0
          %1089 = vmatprep.subr.bf16.mxu0 0
          %1090 = vmatpush1.bf16.msra.mxu0 0
          %1091 = vmatprep.subr.bf16.mxu0 0
          %1092 = vmatpush1.bf16.msra.mxu0 0
          %1093 = vmatprep.subr.bf16.mxu0 0
          %1094 = vmatpush1.bf16.msra.mxu0 0
          %1095 = vmatprep.subr.bf16.mxu0 0
          %1096 = vmatpush1.bf16.msra.mxu0 0
          %1097 = vmatprep.subr.bf16.mxu0 %v1058
          %1098 = vmatpush1.bf16.msra.mxu0 %v1057
          %1099 = vmatprep.subr.bf16.mxu0 %v1050
          %1100 = vmatpush1.bf16.msra.mxu0 %v1049
          %1101 = vmatprep.subr.bf16.mxu0 0
          %1102 = vmatpush2.bf16.msra.mxu0 0
          %1103 = vmatprep.subr.bf16.mxu0 0
          %1104 = vmatpush2.bf16.msra.mxu0 0
          %1105 = vmatprep.subr.bf16.mxu0 0
          %1106 = vmatpush2.bf16.msra.mxu0 0
          %1107 = vmatprep.subr.bf16.mxu0 0
          %1108 = vmatpush2.bf16.msra.mxu0 0
          %1109 = vmatprep.subr.bf16.mxu0 0
          %1110 = vmatpush2.bf16.msra.mxu0 0
          %1111 = vmatprep.subr.bf16.mxu0 0
          %1112 = vmatpush2.bf16.msra.mxu0 0
          %1113 = vmatprep.subr.bf16.mxu0 0
          %1114 = vmatpush2.bf16.msra.mxu0 0
          %1115 = vmatprep.subr.bf16.mxu0 0
          %1116 = vmatpush2.bf16.msra.mxu0 0
          %1117 = vmatprep.mubr.bf16.mxu0 0
          %1118 = vmatmul.mubr.bf16.gmra.mxu0 %v1083
          %v1119 = vpop.f32.mrf.mxu0
          %v1120 = vadd.f32 %v964, %v1119
          %v1121 = vpop.f32.mrf.mxu0
          %v1122 = vadd.f32 %v968, %v1121
          %v1123 = vpop.f32.mrf.mxu0
          %v1124 = vpop.f32.mrf.mxu0
          %1125 = vdwg.mxu0
          %1126 = vmatprep.subr.bf16.mxu0 0
          %1127 = vmatpush1.bf16.msra.mxu0 0
          %1128 = vmatprep.subr.bf16.mxu0 0
          %1129 = vmatpush1.bf16.msra.mxu0 0
          %1130 = vmatprep.subr.bf16.mxu0 0
          %1131 = vmatpush1.bf16.msra.mxu0 0
          %1132 = vmatprep.subr.bf16.mxu0 0
          %1133 = vmatpush1.bf16.msra.mxu0 0
          %1134 = vmatprep.subr.bf16.mxu0 0
          %1135 = vmatpush1.bf16.msra.mxu0 0
          %1136 = vmatprep.subr.bf16.mxu0 0
          %1137 = vmatpush1.bf16.msra.mxu0 0
          %1138 = vmatprep.subr.bf16.mxu0 %v1060
          %1139 = vmatpush1.bf16.msra.mxu0 %v1059
          %1140 = vmatprep.subr.bf16.mxu0 %v1052
          %1141 = vmatpush1.bf16.msra.mxu0 %v1051
          %1142 = vmatprep.subr.bf16.mxu0 0
          %1143 = vmatpush2.bf16.msra.mxu0 0
          %1144 = vmatprep.subr.bf16.mxu0 0
          %1145 = vmatpush2.bf16.msra.mxu0 0
          %1146 = vmatprep.subr.bf16.mxu0 0
          %1147 = vmatpush2.bf16.msra.mxu0 0
          %1148 = vmatprep.subr.bf16.mxu0 0
          %1149 = vmatpush2.bf16.msra.mxu0 0
          %1150 = vmatprep.subr.bf16.mxu0 0
          %1151 = vmatpush2.bf16.msra.mxu0 0
          %1152 = vmatprep.subr.bf16.mxu0 0
          %1153 = vmatpush2.bf16.msra.mxu0 0
          %1154 = vmatprep.subr.bf16.mxu0 0
          %1155 = vmatpush2.bf16.msra.mxu0 0
          %1156 = vmatprep.subr.bf16.mxu0 0
          %1157 = vmatpush2.bf16.msra.mxu0 0
          %1158 = vmatprep.mubr.bf16.mxu0 0
          %1159 = vmatmul.mubr.bf16.gmra.mxu0 %v1083
          %v1160 = vpop.f32.mrf.mxu0
          %v1161 = vadd.f32 %v972, %v1160
          %v1162 = vpop.f32.mrf.mxu0
          %v1163 = vadd.f32 %v976, %v1162
          %v1164 = vpop.f32.mrf.mxu0
          %v1165 = vpop.f32.mrf.mxu0
          %1166 = vdwg.mxu0
          %1167 = vmatprep.subr.bf16.mxu0 0
          %1168 = vmatpush1.bf16.msra.mxu0 0
          %1169 = vmatprep.subr.bf16.mxu0 0
          %1170 = vmatpush1.bf16.msra.mxu0 0
          %1171 = vmatprep.subr.bf16.mxu0 0
          %1172 = vmatpush1.bf16.msra.mxu0 0
          %1173 = vmatprep.subr.bf16.mxu0 0
          %1174 = vmatpush1.bf16.msra.mxu0 0
          %1175 = vmatprep.subr.bf16.mxu0 0
          %1176 = vmatpush1.bf16.msra.mxu0 0
          %1177 = vmatprep.subr.bf16.mxu0 0
          %1178 = vmatpush1.bf16.msra.mxu0 0
          %1179 = vmatprep.subr.bf16.mxu0 %v1062
          %1180 = vmatpush1.bf16.msra.mxu0 %v1061
          %1181 = vmatprep.subr.bf16.mxu0 %v1054
          %1182 = vmatpush1.bf16.msra.mxu0 %v1053
          %1183 = vmatprep.subr.bf16.mxu0 0
          %1184 = vmatpush2.bf16.msra.mxu0 0
          %1185 = vmatprep.subr.bf16.mxu0 0
          %1186 = vmatpush2.bf16.msra.mxu0 0
          %1187 = vmatprep.subr.bf16.mxu0 0
          %1188 = vmatpush2.bf16.msra.mxu0 0
          %1189 = vmatprep.subr.bf16.mxu0 0
          %1190 = vmatpush2.bf16.msra.mxu0 0
          %1191 = vmatprep.subr.bf16.mxu0 0
          %1192 = vmatpush2.bf16.msra.mxu0 0
          %1193 = vmatprep.subr.bf16.mxu0 0
          %1194 = vmatpush2.bf16.msra.mxu0 0
          %1195 = vmatprep.subr.bf16.mxu0 0
          %1196 = vmatpush2.bf16.msra.mxu0 0
          %1197 = vmatprep.subr.bf16.mxu0 0
          %1198 = vmatpush2.bf16.msra.mxu0 0
          %1199 = vmatprep.mubr.bf16.mxu0 0
          %1200 = vmatmul.mubr.bf16.gmra.mxu0 %v1083
          %v1201 = vpop.f32.mrf.mxu0
          %v1202 = vadd.f32 %v980, %v1201
          %v1203 = vpop.f32.mrf.mxu0
          %v1204 = vadd.f32 %v984, %v1203
          %v1205 = vpop.f32.mrf.mxu0
          %v1206 = vpop.f32.mrf.mxu0
          %1207 = vdwg.mxu0
          %1208 = vmatprep.subr.bf16.mxu0 0
          %1209 = vmatpush1.bf16.msra.mxu0 0
          %1210 = vmatprep.subr.bf16.mxu0 0
          %1211 = vmatpush1.bf16.msra.mxu0 0
          %1212 = vmatprep.subr.bf16.mxu0 0
          %1213 = vmatpush1.bf16.msra.mxu0 0
          %1214 = vmatprep.subr.bf16.mxu0 0
          %1215 = vmatpush1.bf16.msra.mxu0 0
          %1216 = vmatprep.subr.bf16.mxu0 0
          %1217 = vmatpush1.bf16.msra.mxu0 0
          %1218 = vmatprep.subr.bf16.mxu0 0
          %1219 = vmatpush1.bf16.msra.mxu0 0
          %1220 = vmatprep.subr.bf16.mxu0 %v1064
          %1221 = vmatpush1.bf16.msra.mxu0 %v1063
          %1222 = vmatprep.subr.bf16.mxu0 %v1056
          %1223 = vmatpush1.bf16.msra.mxu0 %v1055
          %1224 = vmatprep.subr.bf16.mxu0 0
          %1225 = vmatpush2.bf16.msra.mxu0 0
          %1226 = vmatprep.subr.bf16.mxu0 0
          %1227 = vmatpush2.bf16.msra.mxu0 0
          %1228 = vmatprep.subr.bf16.mxu0 0
          %1229 = vmatpush2.bf16.msra.mxu0 0
          %1230 = vmatprep.subr.bf16.mxu0 0
          %1231 = vmatpush2.bf16.msra.mxu0 0
          %1232 = vmatprep.subr.bf16.mxu0 0
          %1233 = vmatpush2.bf16.msra.mxu0 0
          %1234 = vmatprep.subr.bf16.mxu0 0
          %1235 = vmatpush2.bf16.msra.mxu0 0
          %1236 = vmatprep.subr.bf16.mxu0 0
          %1237 = vmatpush2.bf16.msra.mxu0 0
          %1238 = vmatprep.subr.bf16.mxu0 0
          %1239 = vmatpush2.bf16.msra.mxu0 0
          %1240 = vmatprep.mubr.bf16.mxu0 0
          %1241 = vmatmul.mubr.bf16.gmra.mxu0 %v1083
          %v1242 = vpop.f32.mrf.mxu0
          %v1243 = vadd.f32 %v988, %v1242
          %v1244 = vpop.f32.mrf.mxu0
          %v1245 = vadd.f32 %v992, %v1244
          %v1246 = vpop.f32.mrf.mxu0
          %v1247 = vpop.f32.mrf.mxu0
          %1248 = vdwg.mxu0
          %v1249 = vpack.c.bf16 %v1120, %v1120
          %v1250 = vpack.c.bf16 %v1122, %v1122
          %v1251 = vpack.c.bf16 %v1161, %v1161
          %v1252 = vpack.c.bf16 %v1163, %v1163
          %v1253 = vpack.c.bf16 %v1202, %v1202
          %v1254 = vpack.c.bf16 %v1204, %v1204
          %v1255 = vpack.c.bf16 %v1243, %v1243
          %v1256 = vpack.c.bf16 %v1245, %v1245
          %1257 = vst [vmem:[#allocation2] sm:$0xf] %v1249
          %1258 = vst [vmem:[#allocation2 + $0x4] sm:$0xf] %v1250
          %1259 = vst [vmem:[#allocation2 + $0x8] sm:$0xf] %v1251
          %1260 = vst [vmem:[#allocation2 + $0xc] sm:$0xf] %v1252
          %1261 = vst [vmem:[#allocation2 + $0x10] sm:$0xf] %v1253
          %1262 = vst [vmem:[#allocation2 + $0x14] sm:$0xf] %v1254
          %1263 = vst [vmem:[#allocation2 + $0x18] sm:$0xf] %v1255
          %1264 = vst [vmem:[#allocation2 + $0x1c] sm:$0xf] %v1256
          %v1265 = vld [vmem:[%s935] sm:$0xff]
          %v1266 = vpack.c.bf16 %v1265, %v1265
          %v1267 = vld [vmem:[%s14] sm:$0xff]
          %v1268 = vld [vmem:[%s14 + $0x8] sm:$0xff]
          %v1269 = vld [vmem:[%s14 + $0x10] sm:$0xff]
          %v1270 = vld [vmem:[%s14 + $0x18] sm:$0xff]
          %v1271 = vld [vmem:[%s14 + $0x20] sm:$0xff]
          %v1272 = vld [vmem:[%s14 + $0x28] sm:$0xff]
          %v1273 = vld [vmem:[%s14 + $0x30] sm:$0xff]
          %v1274 = vld [vmem:[%s14 + $0x38] sm:$0xff]
          %v1275 = vld [vmem:[%s14 + $0x40] sm:$0xff]
          %v1276 = vld [vmem:[%s14 + $0x48] sm:$0xff]
          %v1277 = vld [vmem:[%s14 + $0x50] sm:$0xff]
          %v1278 = vld [vmem:[%s14 + $0x58] sm:$0xff]
          %v1279 = vld [vmem:[%s14 + $0x60] sm:$0xff]
          %v1280 = vld [vmem:[%s14 + $0x68] sm:$0xff]
          %v1281 = vld [vmem:[%s14 + $0x70] sm:$0xff]
          %v1282 = vld [vmem:[%s14 + $0x78] sm:$0xff]
          %v1283 = vld [vmem:[%s15] sm:$0xff]
          %v1285 = vlaneseq
          %v1286 = vshrl.u32 %v1285, 7
          %v1287 = vsub.s32 0, %v1286
          %v1288 = vrot.slane %v1283, %v1287
          %v1289 = vlaneseq
          %v1290 = vshrl.u32 %v1289, 7
          %v1291 = vsub.s32 1, %v1290
          %v1292 = vrot.slane %v1283, %v1291
          %v1293 = vlaneseq
          %v1294 = vshrl.u32 %v1293, 7
          %v1295 = vsub.s32 2, %v1294
          %v1296 = vrot.slane %v1283, %v1295
          %v1297 = vlaneseq
          %v1298 = vshrl.u32 %v1297, 7
          %v1299 = vsub.s32 3, %v1298
          %v1300 = vrot.slane %v1283, %v1299
          %v1301 = vlaneseq
          %v1302 = vshrl.u32 %v1301, 7
          %v1303 = vsub.s32 4, %v1302
          %v1304 = vrot.slane %v1283, %v1303
          %v1305 = vlaneseq
          %v1306 = vshrl.u32 %v1305, 7
          %v1307 = vsub.s32 5, %v1306
          %v1308 = vrot.slane %v1283, %v1307
          %v1309 = vlaneseq
          %v1310 = vshrl.u32 %v1309, 7
          %v1311 = vsub.s32 6, %v1310
          %v1312 = vrot.slane %v1283, %v1311
          %v1313 = vlaneseq
          %v1314 = vshrl.u32 %v1313, 7
          %v1315 = vsub.s32 7, %v1314
          %v1316 = vrot.slane %v1283, %v1315
          %v1341 = vunpack.c.l.b16 %v1267
          %v1342 = vunpack.c.h.b16 %v1267
          %v1343 = vunpack.c.l.b16 %v1268
          %v1344 = vunpack.c.h.b16 %v1268
          %v1345 = vunpack.c.l.b16 %v1269
          %v1346 = vunpack.c.h.b16 %v1269
          %v1347 = vunpack.c.l.b16 %v1270
          %v1348 = vunpack.c.h.b16 %v1270
          %v1349 = vunpack.c.l.b16 %v1271
          %v1350 = vunpack.c.h.b16 %v1271
          %v1351 = vunpack.c.l.b16 %v1272
          %v1352 = vunpack.c.h.b16 %v1272
          %v1353 = vunpack.c.l.b16 %v1273
          %v1354 = vunpack.c.h.b16 %v1273
          %v1355 = vunpack.c.l.b16 %v1274
          %v1356 = vunpack.c.h.b16 %v1274
          %v1357 = vunpack.c.l.b16 %v1275
          %v1358 = vunpack.c.h.b16 %v1275
          %v1359 = vunpack.c.l.b16 %v1276
          %v1360 = vunpack.c.h.b16 %v1276
          %v1361 = vunpack.c.l.b16 %v1277
          %v1362 = vunpack.c.h.b16 %v1277
          %v1363 = vunpack.c.l.b16 %v1278
          %v1364 = vunpack.c.h.b16 %v1278
          %v1365 = vunpack.c.l.b16 %v1279
          %v1366 = vunpack.c.h.b16 %v1279
          %v1367 = vunpack.c.l.b16 %v1280
          %v1368 = vunpack.c.h.b16 %v1280
          %v1369 = vunpack.c.l.b16 %v1281
          %v1370 = vunpack.c.h.b16 %v1281
          %v1371 = vunpack.c.l.b16 %v1282
          %v1372 = vunpack.c.h.b16 %v1282
          %v1373 = vpack.c.b16 %v1349, %v1341
          %v1374 = vpack.c.b16 %v1350, %v1342
          %v1375 = vpack.c.b16 %v1351, %v1343
          %v1376 = vpack.c.b16 %v1352, %v1344
          %v1377 = vpack.c.b16 %v1353, %v1345
          %v1378 = vpack.c.b16 %v1354, %v1346
          %v1379 = vpack.c.b16 %v1355, %v1347
          %v1380 = vpack.c.b16 %v1356, %v1348
          %v1381 = vpack.c.b16 %v1365, %v1357
          %v1382 = vpack.c.b16 %v1366, %v1358
          %v1383 = vpack.c.b16 %v1367, %v1359
          %v1384 = vpack.c.b16 %v1368, %v1360
          %v1385 = vpack.c.b16 %v1369, %v1361
          %v1386 = vpack.c.b16 %v1370, %v1362
          %v1387 = vpack.c.b16 %v1371, %v1363
          %v1388 = vpack.c.b16 %v1372, %v1364
          %v1406 = vsel %vm1081, %v1266, 0
          %1408 = vmatprep.subr.bf16.mxu0 0
          %1409 = vmatpush1.bf16.msra.mxu0 0
          %1410 = vmatprep.subr.bf16.mxu0 0
          %1411 = vmatpush1.bf16.msra.mxu0 0
          %1412 = vmatprep.subr.bf16.mxu0 0
          %1413 = vmatpush1.bf16.msra.mxu0 0
          %1414 = vmatprep.subr.bf16.mxu0 0
          %1415 = vmatpush1.bf16.msra.mxu0 0
          %1416 = vmatprep.subr.bf16.mxu0 0
          %1417 = vmatpush1.bf16.msra.mxu0 0
          %1418 = vmatprep.subr.bf16.mxu0 0
          %1419 = vmatpush1.bf16.msra.mxu0 0
          %1420 = vmatprep.subr.bf16.mxu0 %v1382
          %1421 = vmatpush1.bf16.msra.mxu0 %v1381
          %1422 = vmatprep.subr.bf16.mxu0 %v1374
          %1423 = vmatpush1.bf16.msra.mxu0 %v1373
          %1424 = vmatprep.subr.bf16.mxu0 0
          %1425 = vmatpush2.bf16.msra.mxu0 0
          %1426 = vmatprep.subr.bf16.mxu0 0
          %1427 = vmatpush2.bf16.msra.mxu0 0
          %1428 = vmatprep.subr.bf16.mxu0 0
          %1429 = vmatpush2.bf16.msra.mxu0 0
          %1430 = vmatprep.subr.bf16.mxu0 0
          %1431 = vmatpush2.bf16.msra.mxu0 0
          %1432 = vmatprep.subr.bf16.mxu0 0
          %1433 = vmatpush2.bf16.msra.mxu0 0
          %1434 = vmatprep.subr.bf16.mxu0 0
          %1435 = vmatpush2.bf16.msra.mxu0 0
          %1436 = vmatprep.subr.bf16.mxu0 0
          %1437 = vmatpush2.bf16.msra.mxu0 0
          %1438 = vmatprep.subr.bf16.mxu0 0
          %1439 = vmatpush2.bf16.msra.mxu0 0
          %1440 = vmatprep.mubr.bf16.mxu0 0
          %1441 = vmatmul.mubr.bf16.gmra.mxu0 %v1406
          %v1442 = vpop.f32.mrf.mxu0
          %v1443 = vadd.f32 %v1288, %v1442
          %v1444 = vpop.f32.mrf.mxu0
          %v1445 = vadd.f32 %v1292, %v1444
          %v1446 = vpop.f32.mrf.mxu0
          %v1447 = vpop.f32.mrf.mxu0
          %1448 = vdwg.mxu0
          %1449 = vmatprep.subr.bf16.mxu0 0
          %1450 = vmatpush1.bf16.msra.mxu0 0
          %1451 = vmatprep.subr.bf16.mxu0 0
          %1452 = vmatpush1.bf16.msra.mxu0 0
          %1453 = vmatprep.subr.bf16.mxu0 0
          %1454 = vmatpush1.bf16.msra.mxu0 0
          %1455 = vmatprep.subr.bf16.mxu0 0
          %1456 = vmatpush1.bf16.msra.mxu0 0
          %1457 = vmatprep.subr.bf16.mxu0 0
          %1458 = vmatpush1.bf16.msra.mxu0 0
          %1459 = vmatprep.subr.bf16.mxu0 0
          %1460 = vmatpush1.bf16.msra.mxu0 0
          %1461 = vmatprep.subr.bf16.mxu0 %v1384
          %1462 = vmatpush1.bf16.msra.mxu0 %v1383
          %1463 = vmatprep.subr.bf16.mxu0 %v1376
          %1464 = vmatpush1.bf16.msra.mxu0 %v1375
          %1465 = vmatprep.subr.bf16.mxu0 0
          %1466 = vmatpush2.bf16.msra.mxu0 0
          %1467 = vmatprep.subr.bf16.mxu0 0
          %1468 = vmatpush2.bf16.msra.mxu0 0
          %1469 = vmatprep.subr.bf16.mxu0 0
          %1470 = vmatpush2.bf16.msra.mxu0 0
          %1471 = vmatprep.subr.bf16.mxu0 0
          %1472 = vmatpush2.bf16.msra.mxu0 0
          %1473 = vmatprep.subr.bf16.mxu0 0
          %1474 = vmatpush2.bf16.msra.mxu0 0
          %1475 = vmatprep.subr.bf16.mxu0 0
          %1476 = vmatpush2.bf16.msra.mxu0 0
          %1477 = vmatprep.subr.bf16.mxu0 0
          %1478 = vmatpush2.bf16.msra.mxu0 0
          %1479 = vmatprep.subr.bf16.mxu0 0
          %1480 = vmatpush2.bf16.msra.mxu0 0
          %1481 = vmatprep.mubr.bf16.mxu0 0
          %1482 = vmatmul.mubr.bf16.gmra.mxu0 %v1406
          %v1483 = vpop.f32.mrf.mxu0
          %v1484 = vadd.f32 %v1296, %v1483
          %v1485 = vpop.f32.mrf.mxu0
          %v1486 = vadd.f32 %v1300, %v1485
          %v1487 = vpop.f32.mrf.mxu0
          %v1488 = vpop.f32.mrf.mxu0
          %1489 = vdwg.mxu0
          %1490 = vmatprep.subr.bf16.mxu0 0
          %1491 = vmatpush1.bf16.msra.mxu0 0
          %1492 = vmatprep.subr.bf16.mxu0 0
          %1493 = vmatpush1.bf16.msra.mxu0 0
          %1494 = vmatprep.subr.bf16.mxu0 0
          %1495 = vmatpush1.bf16.msra.mxu0 0
          %1496 = vmatprep.subr.bf16.mxu0 0
          %1497 = vmatpush1.bf16.msra.mxu0 0
          %1498 = vmatprep.subr.bf16.mxu0 0
          %1499 = vmatpush1.bf16.msra.mxu0 0
          %1500 = vmatprep.subr.bf16.mxu0 0
          %1501 = vmatpush1.bf16.msra.mxu0 0
          %1502 = vmatprep.subr.bf16.mxu0 %v1386
          %1503 = vmatpush1.bf16.msra.mxu0 %v1385
          %1504 = vmatprep.subr.bf16.mxu0 %v1378
          %1505 = vmatpush1.bf16.msra.mxu0 %v1377
          %1506 = vmatprep.subr.bf16.mxu0 0
          %1507 = vmatpush2.bf16.msra.mxu0 0
          %1508 = vmatprep.subr.bf16.mxu0 0
          %1509 = vmatpush2.bf16.msra.mxu0 0
          %1510 = vmatprep.subr.bf16.mxu0 0
          %1511 = vmatpush2.bf16.msra.mxu0 0
          %1512 = vmatprep.subr.bf16.mxu0 0
          %1513 = vmatpush2.bf16.msra.mxu0 0
          %1514 = vmatprep.subr.bf16.mxu0 0
          %1515 = vmatpush2.bf16.msra.mxu0 0
          %1516 = vmatprep.subr.bf16.mxu0 0
          %1517 = vmatpush2.bf16.msra.mxu0 0
          %1518 = vmatprep.subr.bf16.mxu0 0
          %1519 = vmatpush2.bf16.msra.mxu0 0
          %1520 = vmatprep.subr.bf16.mxu0 0
          %1521 = vmatpush2.bf16.msra.mxu0 0
          %1522 = vmatprep.mubr.bf16.mxu0 0
          %1523 = vmatmul.mubr.bf16.gmra.mxu0 %v1406
          %v1524 = vpop.f32.mrf.mxu0
          %v1525 = vadd.f32 %v1304, %v1524
          %v1526 = vpop.f32.mrf.mxu0
          %v1527 = vadd.f32 %v1308, %v1526
          %v1528 = vpop.f32.mrf.mxu0
          %v1529 = vpop.f32.mrf.mxu0
          %1530 = vdwg.mxu0
          %1531 = vmatprep.subr.bf16.mxu0 0
          %1532 = vmatpush1.bf16.msra.mxu0 0
          %1533 = vmatprep.subr.bf16.mxu0 0
          %1534 = vmatpush1.bf16.msra.mxu0 0
          %1535 = vmatprep.subr.bf16.mxu0 0
          %1536 = vmatpush1.bf16.msra.mxu0 0
          %1537 = vmatprep.subr.bf16.mxu0 0
          %1538 = vmatpush1.bf16.msra.mxu0 0
          %1539 = vmatprep.subr.bf16.mxu0 0
          %1540 = vmatpush1.bf16.msra.mxu0 0
          %1541 = vmatprep.subr.bf16.mxu0 0
          %1542 = vmatpush1.bf16.msra.mxu0 0
          %1543 = vmatprep.subr.bf16.mxu0 %v1388
          %1544 = vmatpush1.bf16.msra.mxu0 %v1387
          %1545 = vmatprep.subr.bf16.mxu0 %v1380
          %1546 = vmatpush1.bf16.msra.mxu0 %v1379
          %1547 = vmatprep.subr.bf16.mxu0 0
          %1548 = vmatpush2.bf16.msra.mxu0 0
          %1549 = vmatprep.subr.bf16.mxu0 0
          %1550 = vmatpush2.bf16.msra.mxu0 0
          %1551 = vmatprep.subr.bf16.mxu0 0
          %1552 = vmatpush2.bf16.msra.mxu0 0
          %1553 = vmatprep.subr.bf16.mxu0 0
          %1554 = vmatpush2.bf16.msra.mxu0 0
          %1555 = vmatprep.subr.bf16.mxu0 0
          %1556 = vmatpush2.bf16.msra.mxu0 0
          %1557 = vmatprep.subr.bf16.mxu0 0
          %1558 = vmatpush2.bf16.msra.mxu0 0
          %1559 = vmatprep.subr.bf16.mxu0 0
          %1560 = vmatpush2.bf16.msra.mxu0 0
          %1561 = vmatprep.subr.bf16.mxu0 0
          %1562 = vmatpush2.bf16.msra.mxu0 0
          %1563 = vmatprep.mubr.bf16.mxu0 0
          %1564 = vmatmul.mubr.bf16.gmra.mxu0 %v1406
          %v1565 = vpop.f32.mrf.mxu0
          %v1566 = vadd.f32 %v1312, %v1565
          %v1567 = vpop.f32.mrf.mxu0
          %v1568 = vadd.f32 %v1316, %v1567
          %v1569 = vpop.f32.mrf.mxu0
          %v1570 = vpop.f32.mrf.mxu0
          %1571 = vdwg.mxu0
          %v1572 = vpack.c.bf16 %v1443, %v1443
          %v1573 = vpack.c.bf16 %v1445, %v1445
          %v1574 = vpack.c.bf16 %v1484, %v1484
          %v1575 = vpack.c.bf16 %v1486, %v1486
          %v1576 = vpack.c.bf16 %v1525, %v1525
          %v1577 = vpack.c.bf16 %v1527, %v1527
          %v1578 = vpack.c.bf16 %v1566, %v1566
          %v1579 = vpack.c.bf16 %v1568, %v1568
          %1580 = vst [vmem:[#allocation3] sm:$0xf] %v1572
          %1581 = vst [vmem:[#allocation3 + $0x4] sm:$0xf] %v1573
          %1582 = vst [vmem:[#allocation3 + $0x8] sm:$0xf] %v1574
          %1583 = vst [vmem:[#allocation3 + $0xc] sm:$0xf] %v1575
          %1584 = vst [vmem:[#allocation3 + $0x10] sm:$0xf] %v1576
          %1585 = vst [vmem:[#allocation3 + $0x14] sm:$0xf] %v1577
          %1586 = vst [vmem:[#allocation3 + $0x18] sm:$0xf] %v1578
          %1587 = vst [vmem:[#allocation3 + $0x1c] sm:$0xf] %v1579
        $region128: #{tpu_custom_call.1} parent=123 // pred_fallthru
          _
        %v1588 = vld [vmem:[%s924] sm:$0xff]
        %v1589 = vpack.c.bf16 %v1588, %v1588
        %v1590 = vld [vmem:[%s931] sm:$0x1]
        %v1591 = vld [vmem:[%s4] sm:$0xff]
        %v1592 = vld [vmem:[%s4 + $0x8] sm:$0xff]
        %v1593 = vld [vmem:[%s4 + $0x10] sm:$0xff]
        %v1594 = vld [vmem:[%s4 + $0x18] sm:$0xff]
        %v1595 = vld [vmem:[%s4 + $0x20] sm:$0xff]
        %v1596 = vld [vmem:[%s4 + $0x28] sm:$0xff]
        %v1597 = vld [vmem:[%s4 + $0x30] sm:$0xff]
        %v1598 = vld [vmem:[%s4 + $0x38] sm:$0xff]
        %v1599 = vld [vmem:[%s5] sm:$0xf]
        %v1601 = vlaneseq
        %v1602 = vshrl.u32 %v1601, 7
        %v1603 = vsub.s32 0, %v1602
        %v1604 = vrot.slane %v1599, %v1603
        %v1605 = vlaneseq
        %v1606 = vshrl.u32 %v1605, 7
        %v1607 = vsub.s32 1, %v1606
        %v1608 = vrot.slane %v1599, %v1607
        %v1609 = vlaneseq
        %v1610 = vshrl.u32 %v1609, 7
        %v1611 = vsub.s32 2, %v1610
        %v1612 = vrot.slane %v1599, %v1611
        %v1613 = vlaneseq
        %v1614 = vshrl.u32 %v1613, 7
        %v1615 = vsub.s32 3, %v1614
        %v1616 = vrot.slane %v1599, %v1615
        %v1629 = vunpack.c.l.b16 %v1591
        %v1630 = vunpack.c.h.b16 %v1591
        %v1631 = vunpack.c.l.b16 %v1592
        %v1632 = vunpack.c.h.b16 %v1592
        %v1633 = vunpack.c.l.b16 %v1593
        %v1634 = vunpack.c.h.b16 %v1593
        %v1635 = vunpack.c.l.b16 %v1594
        %v1636 = vunpack.c.h.b16 %v1594
        %v1637 = vunpack.c.l.b16 %v1595
        %v1638 = vunpack.c.h.b16 %v1595
        %v1639 = vunpack.c.l.b16 %v1596
        %v1640 = vunpack.c.h.b16 %v1596
        %v1641 = vunpack.c.l.b16 %v1597
        %v1642 = vunpack.c.h.b16 %v1597
        %v1643 = vunpack.c.l.b16 %v1598
        %v1644 = vunpack.c.h.b16 %v1598
        %v1645 = vpack.c.b16 %v1633, %v1629
        %v1646 = vpack.c.b16 %v1634, %v1630
        %v1647 = vpack.c.b16 %v1635, %v1631
        %v1648 = vpack.c.b16 %v1636, %v1632
        %v1649 = vpack.c.b16 %v1641, %v1637
        %v1650 = vpack.c.b16 %v1642, %v1638
        %v1651 = vpack.c.b16 %v1643, %v1639
        %v1652 = vpack.c.b16 %v1644, %v1640
        %vm1661 = vcmask 261120
        %v1663 = vsel %vm1661, %v1589, 0
        %1665 = vmatprep.subr.bf16.mxu0 0
        %1666 = vmatpush1.bf16.msra.mxu0 0
        %1667 = vmatprep.subr.bf16.mxu0 0
        %1668 = vmatpush1.bf16.msra.mxu0 0
        %1669 = vmatprep.subr.bf16.mxu0 0
        %1670 = vmatpush1.bf16.msra.mxu0 0
        %1671 = vmatprep.subr.bf16.mxu0 0
        %1672 = vmatpush1.bf16.msra.mxu0 0
        %1673 = vmatprep.subr.bf16.mxu0 0
        %1674 = vmatpush1.bf16.msra.mxu0 0
        %1675 = vmatprep.subr.bf16.mxu0 0
        %1676 = vmatpush1.bf16.msra.mxu0 0
        %1677 = vmatprep.subr.bf16.mxu0 %v1650
        %1678 = vmatpush1.bf16.msra.mxu0 %v1649
        %1679 = vmatprep.subr.bf16.mxu0 %v1646
        %1680 = vmatpush1.bf16.msra.mxu0 %v1645
        %1681 = vmatprep.subr.bf16.mxu0 0
        %1682 = vmatpush2.bf16.msra.mxu0 0
        %1683 = vmatprep.subr.bf16.mxu0 0
        %1684 = vmatpush2.bf16.msra.mxu0 0
        %1685 = vmatprep.subr.bf16.mxu0 0
        %1686 = vmatpush2.bf16.msra.mxu0 0
        %1687 = vmatprep.subr.bf16.mxu0 0
        %1688 = vmatpush2.bf16.msra.mxu0 0
        %1689 = vmatprep.subr.bf16.mxu0 0
        %1690 = vmatpush2.bf16.msra.mxu0 0
        %1691 = vmatprep.subr.bf16.mxu0 0
        %1692 = vmatpush2.bf16.msra.mxu0 0
        %1693 = vmatprep.subr.bf16.mxu0 0
        %1694 = vmatpush2.bf16.msra.mxu0 0
        %1695 = vmatprep.subr.bf16.mxu0 0
        %1696 = vmatpush2.bf16.msra.mxu0 0
        %1697 = vmatprep.mubr.bf16.mxu0 0
        %1698 = vmatmul.mubr.bf16.gmra.mxu0 %v1663
        %v1699 = vpop.f32.mrf.mxu0
        %v1700 = vadd.f32 %v1604, %v1699
        %v1701 = vpop.f32.mrf.mxu0
        %v1702 = vadd.f32 %v1608, %v1701
        %v1703 = vpop.f32.mrf.mxu0
        %v1704 = vpop.f32.mrf.mxu0
        %1705 = vdwg.mxu0
        %1706 = vmatprep.subr.bf16.mxu0 0
        %1707 = vmatpush1.bf16.msra.mxu0 0
        %1708 = vmatprep.subr.bf16.mxu0 0
        %1709 = vmatpush1.bf16.msra.mxu0 0
        %1710 = vmatprep.subr.bf16.mxu0 0
        %1711 = vmatpush1.bf16.msra.mxu0 0
        %1712 = vmatprep.subr.bf16.mxu0 0
        %1713 = vmatpush1.bf16.msra.mxu0 0
        %1714 = vmatprep.subr.bf16.mxu0 0
        %1715 = vmatpush1.bf16.msra.mxu0 0
        %1716 = vmatprep.subr.bf16.mxu0 0
        %1717 = vmatpush1.bf16.msra.mxu0 0
        %1718 = vmatprep.subr.bf16.mxu0 %v1652
        %1719 = vmatpush1.bf16.msra.mxu0 %v1651
        %1720 = vmatprep.subr.bf16.mxu0 %v1648
        %1721 = vmatpush1.bf16.msra.mxu0 %v1647
        %1722 = vmatprep.subr.bf16.mxu0 0
        %1723 = vmatpush2.bf16.msra.mxu0 0
        %1724 = vmatprep.subr.bf16.mxu0 0
        %1725 = vmatpush2.bf16.msra.mxu0 0
        %1726 = vmatprep.subr.bf16.mxu0 0
        %1727 = vmatpush2.bf16.msra.mxu0 0
        %1728 = vmatprep.subr.bf16.mxu0 0
        %1729 = vmatpush2.bf16.msra.mxu0 0
        %1730 = vmatprep.subr.bf16.mxu0 0
        %1731 = vmatpush2.bf16.msra.mxu0 0
        %1732 = vmatprep.subr.bf16.mxu0 0
        %1733 = vmatpush2.bf16.msra.mxu0 0
        %1734 = vmatprep.subr.bf16.mxu0 0
        %1735 = vmatpush2.bf16.msra.mxu0 0
        %1736 = vmatprep.subr.bf16.mxu0 0
        %1737 = vmatpush2.bf16.msra.mxu0 0
        %1738 = vmatprep.mubr.bf16.mxu0 0
        %1739 = vmatmul.mubr.bf16.gmra.mxu0 %v1663
        %v1740 = vpop.f32.mrf.mxu0
        %v1741 = vadd.f32 %v1612, %v1740
        %v1742 = vpop.f32.mrf.mxu0
        %v1743 = vadd.f32 %v1616, %v1742
        %v1744 = vpop.f32.mrf.mxu0
        %v1745 = vpop.f32.mrf.mxu0
        %1746 = vdwg.mxu0
        %v1747 = vpack.c.bf16 %v1700, %v1700
        %v1748 = vpack.c.bf16 %v1702, %v1702
        %v1749 = vpack.c.bf16 %v1741, %v1741
        %v1750 = vpack.c.bf16 %v1743, %v1743
        %v1751 = vld [vmem:[#allocation2] sm:$0xf]
        %v1752 = vld [vmem:[#allocation2 + $0x4] sm:$0xf]
        %v1753 = vld [vmem:[#allocation2 + $0x8] sm:$0xf]
        %v1754 = vld [vmem:[#allocation2 + $0xc] sm:$0xf]
        %v1755 = vld [vmem:[#allocation2 + $0x10] sm:$0xf]
        %v1756 = vld [vmem:[#allocation2 + $0x14] sm:$0xf]
        %v1757 = vld [vmem:[#allocation2 + $0x18] sm:$0xf]
        %v1758 = vld [vmem:[#allocation2 + $0x1c] sm:$0xf]
        %v1759 = vld [vmem:[%s8] sm:$0xf]
        %v1760 = vld [vmem:[%s8 + $0x4] sm:$0xf]
        %v1761 = vld [vmem:[%s8 + $0x8] sm:$0xf]
        %v1762 = vld [vmem:[%s8 + $0xc] sm:$0xf]
        %v1763 = vld [vmem:[%s8 + $0x10] sm:$0xf]
        %v1764 = vld [vmem:[%s8 + $0x14] sm:$0xf]
        %v1765 = vld [vmem:[%s8 + $0x18] sm:$0xf]
        %v1766 = vld [vmem:[%s8 + $0x1c] sm:$0xf]
        %v1767 = vld [vmem:[%s8 + $0x20] sm:$0xf]
        %v1768 = vld [vmem:[%s8 + $0x24] sm:$0xf]
        %v1769 = vld [vmem:[%s8 + $0x28] sm:$0xf]
        %v1770 = vld [vmem:[%s8 + $0x2c] sm:$0xf]
        %v1771 = vld [vmem:[%s8 + $0x30] sm:$0xf]
        %v1772 = vld [vmem:[%s8 + $0x34] sm:$0xf]
        %v1773 = vld [vmem:[%s8 + $0x38] sm:$0xf]
        %v1774 = vld [vmem:[%s8 + $0x3c] sm:$0xf]
        %v1775 = vld [vmem:[%s8 + $0x40] sm:$0xf]
        %v1776 = vld [vmem:[%s8 + $0x44] sm:$0xf]
        %v1777 = vld [vmem:[%s8 + $0x48] sm:$0xf]
        %v1778 = vld [vmem:[%s8 + $0x4c] sm:$0xf]
        %v1779 = vld [vmem:[%s8 + $0x50] sm:$0xf]
        %v1780 = vld [vmem:[%s8 + $0x54] sm:$0xf]
        %v1781 = vld [vmem:[%s8 + $0x58] sm:$0xf]
        %v1782 = vld [vmem:[%s8 + $0x5c] sm:$0xf]
        %v1783 = vld [vmem:[%s8 + $0x60] sm:$0xf]
        %v1784 = vld [vmem:[%s8 + $0x64] sm:$0xf]
        %v1785 = vld [vmem:[%s8 + $0x68] sm:$0xf]
        %v1786 = vld [vmem:[%s8 + $0x6c] sm:$0xf]
        %v1787 = vld [vmem:[%s8 + $0x70] sm:$0xf]
        %v1788 = vld [vmem:[%s8 + $0x74] sm:$0xf]
        %v1789 = vld [vmem:[%s8 + $0x78] sm:$0xf]
        %v1790 = vld [vmem:[%s8 + $0x7c] sm:$0xf]
        %v1791 = vld [vmem:[%s8 + $0x80] sm:$0xf]
        %v1792 = vld [vmem:[%s8 + $0x84] sm:$0xf]
        %v1793 = vld [vmem:[%s8 + $0x88] sm:$0xf]
        %v1794 = vld [vmem:[%s8 + $0x8c] sm:$0xf]
        %v1795 = vld [vmem:[%s8 + $0x90] sm:$0xf]
        %v1796 = vld [vmem:[%s8 + $0x94] sm:$0xf]
        %v1797 = vld [vmem:[%s8 + $0x98] sm:$0xf]
        %v1798 = vld [vmem:[%s8 + $0x9c] sm:$0xf]
        %v1799 = vld [vmem:[%s8 + $0xa0] sm:$0xf]
        %v1800 = vld [vmem:[%s8 + $0xa4] sm:$0xf]
        %v1801 = vld [vmem:[%s8 + $0xa8] sm:$0xf]
        %v1802 = vld [vmem:[%s8 + $0xac] sm:$0xf]
        %v1803 = vld [vmem:[%s8 + $0xb0] sm:$0xf]
        %v1804 = vld [vmem:[%s8 + $0xb4] sm:$0xf]
        %v1805 = vld [vmem:[%s8 + $0xb8] sm:$0xf]
        %v1806 = vld [vmem:[%s8 + $0xbc] sm:$0xf]
        %v1807 = vld [vmem:[%s8 + $0xc0] sm:$0xf]
        %v1808 = vld [vmem:[%s8 + $0xc4] sm:$0xf]
        %v1809 = vld [vmem:[%s8 + $0xc8] sm:$0xf]
        %v1810 = vld [vmem:[%s8 + $0xcc] sm:$0xf]
        %v1811 = vld [vmem:[%s8 + $0xd0] sm:$0xf]
        %v1812 = vld [vmem:[%s8 + $0xd4] sm:$0xf]
        %v1813 = vld [vmem:[%s8 + $0xd8] sm:$0xf]
        %v1814 = vld [vmem:[%s8 + $0xdc] sm:$0xf]
        %v1815 = vld [vmem:[%s8 + $0xe0] sm:$0xf]
        %v1816 = vld [vmem:[%s8 + $0xe4] sm:$0xf]
        %v1817 = vld [vmem:[%s8 + $0xe8] sm:$0xf]
        %v1818 = vld [vmem:[%s8 + $0xec] sm:$0xf]
        %v1819 = vld [vmem:[%s8 + $0xf0] sm:$0xf]
        %v1820 = vld [vmem:[%s8 + $0xf4] sm:$0xf]
        %v1821 = vld [vmem:[%s8 + $0xf8] sm:$0xf]
        %v1822 = vld [vmem:[%s8 + $0xfc] sm:$0xf]
        %v1823 = vld [vmem:[%s9] sm:$0x1]
        %v1825 = vlaneseq
        %v1826 = vshrl.u32 %v1825, 7
        %v1827 = vsub.s32 0, %v1826
        %v1828 = vrot.slane %v1590, %v1827
        %1830 = vmatprep.subr.bf16.mxu0 0
        %1831 = vmatpush1.bf16.xpose.msra.mxu0 0
        %1832 = vmatprep.subr.bf16.mxu0 0
        %1833 = vmatpush1.bf16.xpose.msra.mxu0 0
        %1834 = vmatprep.subr.bf16.mxu0 0
        %1835 = vmatpush1.bf16.xpose.msra.mxu0 0
        %1836 = vmatprep.subr.bf16.mxu0 0
        %1837 = vmatpush1.bf16.xpose.msra.mxu0 0
        %1838 = vmatprep.subr.bf16.mxu0 0
        %1839 = vmatpush1.bf16.xpose.msra.mxu0 0
        %1840 = vmatprep.subr.bf16.mxu0 0
        %1841 = vmatpush1.bf16.xpose.msra.mxu0 0
        %1842 = vmatprep.subr.bf16.mxu0 0
        %1843 = vmatpush1.bf16.xpose.msra.mxu0 0
        %1844 = vmatprep.subr.bf16.mxu0 0
        %1845 = vmatpush1.bf16.xpose.msra.mxu0 %v1751
        %1846 = vmatprep.subr.bf16.mxu0 0
        %1847 = vmatpush2.bf16.xpose.msra.mxu0 0
        %1848 = vmatprep.subr.bf16.mxu0 0
        %1849 = vmatpush2.bf16.xpose.msra.mxu0 0
        %1850 = vmatprep.subr.bf16.mxu0 0
        %1851 = vmatpush2.bf16.xpose.msra.mxu0 0
        %1852 = vmatprep.subr.bf16.mxu0 0
        %1853 = vmatpush2.bf16.xpose.msra.mxu0 0
        %1854 = vmatprep.subr.bf16.mxu0 0
        %1855 = vmatpush2.bf16.xpose.msra.mxu0 0
        %1856 = vmatprep.subr.bf16.mxu0 0
        %1857 = vmatpush2.bf16.xpose.msra.mxu0 0
        %1858 = vmatprep.subr.bf16.mxu0 0
        %1859 = vmatpush2.bf16.xpose.msra.mxu0 0
        %1860 = vmatprep.subr.bf16.mxu0 0
        %1861 = vmatpush2.bf16.xpose.msra.mxu0 0
        %1862 = vmatprep.mubr.bf16.mxu0 0
        %1863 = vmatmul.mubr.bf16.gmra.mxu0 %v1747
        %v1864 = vpop.f32.mrf.mxu0
        %v1865 = vadd.f32 %v1828, %v1864
        %v1866 = vpop.f32.mrf.mxu0
        %v1867 = vpop.f32.mrf.mxu0
        %v1868 = vpop.f32.mrf.mxu0
        %1869 = vdwg.mxu0
        %1870 = vmatprep.subr.bf16.mxu0 0
        %1871 = vmatpush1.bf16.xpose.msra.mxu0 0
        %1872 = vmatprep.subr.bf16.mxu0 0
        %1873 = vmatpush1.bf16.xpose.msra.mxu0 0
        %1874 = vmatprep.subr.bf16.mxu0 0
        %1875 = vmatpush1.bf16.xpose.msra.mxu0 0
        %1876 = vmatprep.subr.bf16.mxu0 0
        %1877 = vmatpush1.bf16.xpose.msra.mxu0 0
        %1878 = vmatprep.subr.bf16.mxu0 0
        %1879 = vmatpush1.bf16.xpose.msra.mxu0 0
        %1880 = vmatprep.subr.bf16.mxu0 0
        %1881 = vmatpush1.bf16.xpose.msra.mxu0 0
        %1882 = vmatprep.subr.bf16.mxu0 0
        %1883 = vmatpush1.bf16.xpose.msra.mxu0 0
        %1884 = vmatprep.subr.bf16.mxu0 0
        %1885 = vmatpush1.bf16.xpose.msra.mxu0 %v1752
        %1886 = vmatprep.subr.bf16.mxu0 0
        %1887 = vmatpush2.bf16.xpose.msra.mxu0 0
        %1888 = vmatprep.subr.bf16.mxu0 0
        %1889 = vmatpush2.bf16.xpose.msra.mxu0 0
        %1890 = vmatprep.subr.bf16.mxu0 0
        %1891 = vmatpush2.bf16.xpose.msra.mxu0 0
        %1892 = vmatprep.subr.bf16.mxu0 0
        %1893 = vmatpush2.bf16.xpose.msra.mxu0 0
        %1894 = vmatprep.subr.bf16.mxu0 0
        %1895 = vmatpush2.bf16.xpose.msra.mxu0 0
        %1896 = vmatprep.subr.bf16.mxu0 0
        %1897 = vmatpush2.bf16.xpose.msra.mxu0 0
        %1898 = vmatprep.subr.bf16.mxu0 0
        %1899 = vmatpush2.bf16.xpose.msra.mxu0 0
        %1900 = vmatprep.subr.bf16.mxu0 0
        %1901 = vmatpush2.bf16.xpose.msra.mxu0 0
        %1902 = vmatprep.mubr.bf16.mxu0 0
        %1903 = vmatmul.mubr.bf16.gmra.mxu0 %v1748
        %v1904 = vpop.f32.mrf.mxu0
        %v1905 = vadd.f32 %v1828, %v1904
        %v1906 = vpop.f32.mrf.mxu0
        %v1907 = vpop.f32.mrf.mxu0
        %v1908 = vpop.f32.mrf.mxu0
        %1909 = vdwg.mxu0
        %1910 = vmatprep.subr.bf16.mxu0 0
        %1911 = vmatpush1.bf16.xpose.msra.mxu0 0
        %1912 = vmatprep.subr.bf16.mxu0 0
        %1913 = vmatpush1.bf16.xpose.msra.mxu0 0
        %1914 = vmatprep.subr.bf16.mxu0 0
        %1915 = vmatpush1.bf16.xpose.msra.mxu0 0
        %1916 = vmatprep.subr.bf16.mxu0 0
        %1917 = vmatpush1.bf16.xpose.msra.mxu0 0
        %1918 = vmatprep.subr.bf16.mxu0 0
        %1919 = vmatpush1.bf16.xpose.msra.mxu0 0
        %1920 = vmatprep.subr.bf16.mxu0 0
        %1921 = vmatpush1.bf16.xpose.msra.mxu0 0
        %1922 = vmatprep.subr.bf16.mxu0 0
        %1923 = vmatpush1.bf16.xpose.msra.mxu0 0
        %1924 = vmatprep.subr.bf16.mxu0 0
        %1925 = vmatpush1.bf16.xpose.msra.mxu0 %v1753
        %1926 = vmatprep.subr.bf16.mxu0 0
        %1927 = vmatpush2.bf16.xpose.msra.mxu0 0
        %1928 = vmatprep.subr.bf16.mxu0 0
        %1929 = vmatpush2.bf16.xpose.msra.mxu0 0
        %1930 = vmatprep.subr.bf16.mxu0 0
        %1931 = vmatpush2.bf16.xpose.msra.mxu0 0
        %1932 = vmatprep.subr.bf16.mxu0 0
        %1933 = vmatpush2.bf16.xpose.msra.mxu0 0
        %1934 = vmatprep.subr.bf16.mxu0 0
        %1935 = vmatpush2.bf16.xpose.msra.mxu0 0
        %1936 = vmatprep.subr.bf16.mxu0 0
        %1937 = vmatpush2.bf16.xpose.msra.mxu0 0
        %1938 = vmatprep.subr.bf16.mxu0 0
        %1939 = vmatpush2.bf16.xpose.msra.mxu0 0
        %1940 = vmatprep.subr.bf16.mxu0 0
        %1941 = vmatpush2.bf16.xpose.msra.mxu0 0
        %1942 = vmatprep.mubr.bf16.mxu0 0
        %1943 = vmatmul.mubr.bf16.gmra.mxu0 %v1749
        %v1944 = vpop.f32.mrf.mxu0
        %v1945 = vadd.f32 %v1828, %v1944
        %v1946 = vpop.f32.mrf.mxu0
        %v1947 = vpop.f32.mrf.mxu0
        %v1948 = vpop.f32.mrf.mxu0
        %1949 = vdwg.mxu0
        %1950 = vmatprep.subr.bf16.mxu0 0
        %1951 = vmatpush1.bf16.xpose.msra.mxu0 0
        %1952 = vmatprep.subr.bf16.mxu0 0
        %1953 = vmatpush1.bf16.xpose.msra.mxu0 0
        %1954 = vmatprep.subr.bf16.mxu0 0
        %1955 = vmatpush1.bf16.xpose.msra.mxu0 0
        %1956 = vmatprep.subr.bf16.mxu0 0
        %1957 = vmatpush1.bf16.xpose.msra.mxu0 0
        %1958 = vmatprep.subr.bf16.mxu0 0
        %1959 = vmatpush1.bf16.xpose.msra.mxu0 0
        %1960 = vmatprep.subr.bf16.mxu0 0
        %1961 = vmatpush1.bf16.xpose.msra.mxu0 0
        %1962 = vmatprep.subr.bf16.mxu0 0
        %1963 = vmatpush1.bf16.xpose.msra.mxu0 0
        %1964 = vmatprep.subr.bf16.mxu0 0
        %1965 = vmatpush1.bf16.xpose.msra.mxu0 %v1754
        %1966 = vmatprep.subr.bf16.mxu0 0
        %1967 = vmatpush2.bf16.xpose.msra.mxu0 0
        %1968 = vmatprep.subr.bf16.mxu0 0
        %1969 = vmatpush2.bf16.xpose.msra.mxu0 0
        %1970 = vmatprep.subr.bf16.mxu0 0
        %1971 = vmatpush2.bf16.xpose.msra.mxu0 0
        %1972 = vmatprep.subr.bf16.mxu0 0
        %1973 = vmatpush2.bf16.xpose.msra.mxu0 0
        %1974 = vmatprep.subr.bf16.mxu0 0
        %1975 = vmatpush2.bf16.xpose.msra.mxu0 0
        %1976 = vmatprep.subr.bf16.mxu0 0
        %1977 = vmatpush2.bf16.xpose.msra.mxu0 0
        %1978 = vmatprep.subr.bf16.mxu0 0
        %1979 = vmatpush2.bf16.xpose.msra.mxu0 0
        %1980 = vmatprep.subr.bf16.mxu0 0
        %1981 = vmatpush2.bf16.xpose.msra.mxu0 0
        %1982 = vmatprep.mubr.bf16.mxu0 0
        %1983 = vmatmul.mubr.bf16.gmra.mxu0 %v1750
        %v1984 = vpop.f32.mrf.mxu0
        %v1985 = vadd.f32 %v1828, %v1984
        %v1986 = vpop.f32.mrf.mxu0
        %v1987 = vpop.f32.mrf.mxu0
        %v1988 = vpop.f32.mrf.mxu0
        %1989 = vdwg.mxu0
        %vm1990 = vcmask 64512
        %v1991 = vsel %vm1990, %v1865, -inf
        %1992 = vmax.xlane.f32.xlu0 %v1991
        %v1993 = vpop.xlane.xlu0 %1992
        %v1994 = vsel %vm1990, %v1905, -inf
        %1995 = vmax.xlane.f32.xlu0 %v1994
        %v1996 = vpop.xlane.xlu0 %1995
        %v1997 = vsel %vm1990, %v1945, -inf
        %1998 = vmax.xlane.f32.xlu0 %v1997
        %v1999 = vpop.xlane.xlu0 %1998
        %v2000 = vsel %vm1990, %v1985, -inf
        %2001 = vmax.xlane.f32.xlu0 %v2000
        %v2002 = vpop.xlane.xlu0 %2001
        %v2003 = vsub.f32 %v1865, %v1993
        %v2004 = vsub.f32 %v1905, %v1996
        %v2005 = vsub.f32 %v1945, %v1999
        %v2006 = vsub.f32 %v1985, %v2002
        %v2007 = vmul.f32 %v2003, 1.442695
        %v2008 = vpow.pop %v2007
        %v2009 = vmul.f32 %v2004, 1.442695
        %v2010 = vpow.pop %v2009
        %v2011 = vmul.f32 %v2005, 1.442695
        %v2012 = vpow.pop %v2011
        %v2013 = vmul.f32 %v2006, 1.442695
        %v2014 = vpow.pop %v2013
        %v2015 = vsel %vm1990, %v2008, 0.0
        %2016 = vadd.xlane.f32.xlu0 %v2015
        %v2017 = vpop.xlane.xlu0 %2016
        %v2018 = vsel %vm1990, %v2010, 0.0
        %2019 = vadd.xlane.f32.xlu0 %v2018
        %v2020 = vpop.xlane.xlu0 %2019
        %v2021 = vsel %vm1990, %v2012, 0.0
        %2022 = vadd.xlane.f32.xlu0 %v2021
        %v2023 = vpop.xlane.xlu0 %2022
        %v2024 = vsel %vm1990, %v2014, 0.0
        %2025 = vadd.xlane.f32.xlu0 %v2024
        %v2026 = vpop.xlane.xlu0 %2025
        %v2027 = vrcp.pop %v2017
        %v2028 = vrcp.pop %v2020
        %v2029 = vrcp.pop %v2023
        %v2030 = vrcp.pop %v2026
        %v2031 = vmul.f32 %v2008, %v2027
        %v2032 = vmul.f32 %v2010, %v2028
        %v2033 = vmul.f32 %v2012, %v2029
        %v2034 = vmul.f32 %v2014, %v2030
        %v2035 = vpack.c.bf16 %v2031, %v2031
        %v2036 = vpack.c.bf16 %v2032, %v2032
        %v2037 = vpack.c.bf16 %v2033, %v2033
        %v2038 = vpack.c.bf16 %v2034, %v2034
        %vm2039 = vcmask 60416
        %2040 = vst.msk [vmem:[%s910] sm:$0xf] %vm2039, %v2035
        %2041 = vst.msk [vmem:[%s910 + $0x4] sm:$0xf] %vm2039, %v2036
        %2042 = vst.msk [vmem:[%s910 + $0x8] sm:$0xf] %vm2039, %v2037
        %2043 = vst.msk [vmem:[%s910 + $0xc] sm:$0xf] %vm2039, %v2038
        %v2045 = vsel %vm1990, %v2035, 0
        %vm2047 = vcmask 1043456
        %v2049 = vsel %vm2047, %v1755, 0
        %2051 = vmatprep.subr.bf16.mxu0 0
        %2052 = vmatpush1.bf16.msra.mxu0 0
        %2053 = vmatprep.subr.bf16.mxu0 0
        %2054 = vmatpush1.bf16.msra.mxu0 0
        %2055 = vmatprep.subr.bf16.mxu0 0
        %2056 = vmatpush1.bf16.msra.mxu0 0
        %2057 = vmatprep.subr.bf16.mxu0 0
        %2058 = vmatpush1.bf16.msra.mxu0 0
        %2059 = vmatprep.subr.bf16.mxu0 0
        %2060 = vmatpush1.bf16.msra.mxu0 0
        %2061 = vmatprep.subr.bf16.mxu0 0
        %2062 = vmatpush1.bf16.msra.mxu0 0
        %2063 = vmatprep.subr.bf16.mxu0 0
        %2064 = vmatpush1.bf16.msra.mxu0 0
        %2065 = vmatprep.subr.bf16.mxu0 0
        %2066 = vmatpush1.bf16.msra.mxu0 %v2049
        %2067 = vmatprep.subr.bf16.mxu0 0
        %2068 = vmatpush2.bf16.msra.mxu0 0
        %2069 = vmatprep.subr.bf16.mxu0 0
        %2070 = vmatpush2.bf16.msra.mxu0 0
        %2071 = vmatprep.subr.bf16.mxu0 0
        %2072 = vmatpush2.bf16.msra.mxu0 0
        %2073 = vmatprep.subr.bf16.mxu0 0
        %2074 = vmatpush2.bf16.msra.mxu0 0
        %2075 = vmatprep.subr.bf16.mxu0 0
        %2076 = vmatpush2.bf16.msra.mxu0 0
        %2077 = vmatprep.subr.bf16.mxu0 0
        %2078 = vmatpush2.bf16.msra.mxu0 0
        %2079 = vmatprep.subr.bf16.mxu0 0
        %2080 = vmatpush2.bf16.msra.mxu0 0
        %2081 = vmatprep.subr.bf16.mxu0 0
        %2082 = vmatpush2.bf16.msra.mxu0 0
        %2083 = vmatprep.mubr.bf16.mxu0 0
        %2084 = vmatmul.mubr.bf16.gmra.mxu0 %v2045
        %v2085 = vpop.f32.mrf.mxu0
        %v2086 = vadd.f32 0.0, %v2085
        %v2087 = vpop.f32.mrf.mxu0
        %v2088 = vpop.f32.mrf.mxu0
        %v2089 = vpop.f32.mrf.mxu0
        %2090 = vdwg.mxu0
        %v2092 = vsel %vm1990, %v2036, 0
        %v2095 = vsel %vm2047, %v1756, 0
        %2097 = vmatprep.subr.bf16.mxu0 0
        %2098 = vmatpush1.bf16.msra.mxu0 0
        %2099 = vmatprep.subr.bf16.mxu0 0
        %2100 = vmatpush1.bf16.msra.mxu0 0
        %2101 = vmatprep.subr.bf16.mxu0 0
        %2102 = vmatpush1.bf16.msra.mxu0 0
        %2103 = vmatprep.subr.bf16.mxu0 0
        %2104 = vmatpush1.bf16.msra.mxu0 0
        %2105 = vmatprep.subr.bf16.mxu0 0
        %2106 = vmatpush1.bf16.msra.mxu0 0
        %2107 = vmatprep.subr.bf16.mxu0 0
        %2108 = vmatpush1.bf16.msra.mxu0 0
        %2109 = vmatprep.subr.bf16.mxu0 0
        %2110 = vmatpush1.bf16.msra.mxu0 0
        %2111 = vmatprep.subr.bf16.mxu0 0
        %2112 = vmatpush1.bf16.msra.mxu0 %v2095
        %2113 = vmatprep.subr.bf16.mxu0 0
        %2114 = vmatpush2.bf16.msra.mxu0 0
        %2115 = vmatprep.subr.bf16.mxu0 0
        %2116 = vmatpush2.bf16.msra.mxu0 0
        %2117 = vmatprep.subr.bf16.mxu0 0
        %2118 = vmatpush2.bf16.msra.mxu0 0
        %2119 = vmatprep.subr.bf16.mxu0 0
        %2120 = vmatpush2.bf16.msra.mxu0 0
        %2121 = vmatprep.subr.bf16.mxu0 0
        %2122 = vmatpush2.bf16.msra.mxu0 0
        %2123 = vmatprep.subr.bf16.mxu0 0
        %2124 = vmatpush2.bf16.msra.mxu0 0
        %2125 = vmatprep.subr.bf16.mxu0 0
        %2126 = vmatpush2.bf16.msra.mxu0 0
        %2127 = vmatprep.subr.bf16.mxu0 0
        %2128 = vmatpush2.bf16.msra.mxu0 0
        %2129 = vmatprep.mubr.bf16.mxu0 0
        %2130 = vmatmul.mubr.bf16.gmra.mxu0 %v2092
        %v2131 = vpop.f32.mrf.mxu0
        %v2132 = vadd.f32 0.0, %v2131
        %v2133 = vpop.f32.mrf.mxu0
        %v2134 = vpop.f32.mrf.mxu0
        %v2135 = vpop.f32.mrf.mxu0
        %2136 = vdwg.mxu0
        %v2138 = vsel %vm1990, %v2037, 0
        %v2141 = vsel %vm2047, %v1757, 0
        %2143 = vmatprep.subr.bf16.mxu0 0
        %2144 = vmatpush1.bf16.msra.mxu0 0
        %2145 = vmatprep.subr.bf16.mxu0 0
        %2146 = vmatpush1.bf16.msra.mxu0 0
        %2147 = vmatprep.subr.bf16.mxu0 0
        %2148 = vmatpush1.bf16.msra.mxu0 0
        %2149 = vmatprep.subr.bf16.mxu0 0
        %2150 = vmatpush1.bf16.msra.mxu0 0
        %2151 = vmatprep.subr.bf16.mxu0 0
        %2152 = vmatpush1.bf16.msra.mxu0 0
        %2153 = vmatprep.subr.bf16.mxu0 0
        %2154 = vmatpush1.bf16.msra.mxu0 0
        %2155 = vmatprep.subr.bf16.mxu0 0
        %2156 = vmatpush1.bf16.msra.mxu0 0
        %2157 = vmatprep.subr.bf16.mxu0 0
        %2158 = vmatpush1.bf16.msra.mxu0 %v2141
        %2159 = vmatprep.subr.bf16.mxu0 0
        %2160 = vmatpush2.bf16.msra.mxu0 0
        %2161 = vmatprep.subr.bf16.mxu0 0
        %2162 = vmatpush2.bf16.msra.mxu0 0
        %2163 = vmatprep.subr.bf16.mxu0 0
        %2164 = vmatpush2.bf16.msra.mxu0 0
        %2165 = vmatprep.subr.bf16.mxu0 0
        %2166 = vmatpush2.bf16.msra.mxu0 0
        %2167 = vmatprep.subr.bf16.mxu0 0
        %2168 = vmatpush2.bf16.msra.mxu0 0
        %2169 = vmatprep.subr.bf16.mxu0 0
        %2170 = vmatpush2.bf16.msra.mxu0 0
        %2171 = vmatprep.subr.bf16.mxu0 0
        %2172 = vmatpush2.bf16.msra.mxu0 0
        %2173 = vmatprep.subr.bf16.mxu0 0
        %2174 = vmatpush2.bf16.msra.mxu0 0
        %2175 = vmatprep.mubr.bf16.mxu0 0
        %2176 = vmatmul.mubr.bf16.gmra.mxu0 %v2138
        %v2177 = vpop.f32.mrf.mxu0
        %v2178 = vadd.f32 0.0, %v2177
        %v2179 = vpop.f32.mrf.mxu0
        %v2180 = vpop.f32.mrf.mxu0
        %v2181 = vpop.f32.mrf.mxu0
        %2182 = vdwg.mxu0
        %v2184 = vsel %vm1990, %v2038, 0
        %v2187 = vsel %vm2047, %v1758, 0
        %2189 = vmatprep.subr.bf16.mxu0 0
        %2190 = vmatpush1.bf16.msra.mxu0 0
        %2191 = vmatprep.subr.bf16.mxu0 0
        %2192 = vmatpush1.bf16.msra.mxu0 0
        %2193 = vmatprep.subr.bf16.mxu0 0
        %2194 = vmatpush1.bf16.msra.mxu0 0
        %2195 = vmatprep.subr.bf16.mxu0 0
        %2196 = vmatpush1.bf16.msra.mxu0 0
        %2197 = vmatprep.subr.bf16.mxu0 0
        %2198 = vmatpush1.bf16.msra.mxu0 0
        %2199 = vmatprep.subr.bf16.mxu0 0
        %2200 = vmatpush1.bf16.msra.mxu0 0
        %2201 = vmatprep.subr.bf16.mxu0 0
        %2202 = vmatpush1.bf16.msra.mxu0 0
        %2203 = vmatprep.subr.bf16.mxu0 0
        %2204 = vmatpush1.bf16.msra.mxu0 %v2187
        %2205 = vmatprep.subr.bf16.mxu0 0
        %2206 = vmatpush2.bf16.msra.mxu0 0
        %2207 = vmatprep.subr.bf16.mxu0 0
        %2208 = vmatpush2.bf16.msra.mxu0 0
        %2209 = vmatprep.subr.bf16.mxu0 0
        %2210 = vmatpush2.bf16.msra.mxu0 0
        %2211 = vmatprep.subr.bf16.mxu0 0
        %2212 = vmatpush2.bf16.msra.mxu0 0
        %2213 = vmatprep.subr.bf16.mxu0 0
        %2214 = vmatpush2.bf16.msra.mxu0 0
        %2215 = vmatprep.subr.bf16.mxu0 0
        %2216 = vmatpush2.bf16.msra.mxu0 0
        %2217 = vmatprep.subr.bf16.mxu0 0
        %2218 = vmatpush2.bf16.msra.mxu0 0
        %2219 = vmatprep.subr.bf16.mxu0 0
        %2220 = vmatpush2.bf16.msra.mxu0 0
        %2221 = vmatprep.mubr.bf16.mxu0 0
        %2222 = vmatmul.mubr.bf16.gmra.mxu0 %v2184
        %v2223 = vpop.f32.mrf.mxu0
        %v2224 = vadd.f32 0.0, %v2223
        %v2225 = vpop.f32.mrf.mxu0
        %v2226 = vpop.f32.mrf.mxu0
        %v2227 = vpop.f32.mrf.mxu0
        %2228 = vdwg.mxu0
        %v2229 = vpack.c.bf16 %v2086, %v2086
        %v2230 = vpack.c.bf16 %v2132, %v2132
        %v2231 = vpack.c.bf16 %v2178, %v2178
        %v2232 = vpack.c.bf16 %v2224, %v2224
        %v2234 = vlaneseq
        %v2235 = vshrl.u32 %v2234, 7
        %v2236 = vsub.s32 0, %v2235
        %v2237 = vrot.slane %v1823, %v2236
        %v2303 = vunpack.c.l.b16 %v1759
        %v2304 = vunpack.c.l.b16 %v1760
        %v2305 = vunpack.c.l.b16 %v1761
        %v2306 = vunpack.c.l.b16 %v1762
        %v2307 = vunpack.c.l.b16 %v1763
        %v2308 = vunpack.c.l.b16 %v1764
        %v2309 = vunpack.c.l.b16 %v1765
        %v2310 = vunpack.c.l.b16 %v1766
        %v2311 = vunpack.c.l.b16 %v1767
        %v2312 = vunpack.c.l.b16 %v1768
        %v2313 = vunpack.c.l.b16 %v1769
        %v2314 = vunpack.c.l.b16 %v1770
        %v2315 = vunpack.c.l.b16 %v1771
        %v2316 = vunpack.c.l.b16 %v1772
        %v2317 = vunpack.c.l.b16 %v1773
        %v2318 = vunpack.c.l.b16 %v1774
        %v2319 = vunpack.c.l.b16 %v1775
        %v2320 = vunpack.c.l.b16 %v1776
        %v2321 = vunpack.c.l.b16 %v1777
        %v2322 = vunpack.c.l.b16 %v1778
        %v2323 = vunpack.c.l.b16 %v1779
        %v2324 = vunpack.c.l.b16 %v1780
        %v2325 = vunpack.c.l.b16 %v1781
        %v2326 = vunpack.c.l.b16 %v1782
        %v2327 = vunpack.c.l.b16 %v1783
        %v2328 = vunpack.c.l.b16 %v1784
        %v2329 = vunpack.c.l.b16 %v1785
        %v2330 = vunpack.c.l.b16 %v1786
        %v2331 = vunpack.c.l.b16 %v1787
        %v2332 = vunpack.c.l.b16 %v1788
        %v2333 = vunpack.c.l.b16 %v1789
        %v2334 = vunpack.c.l.b16 %v1790
        %v2335 = vunpack.c.l.b16 %v1791
        %v2336 = vunpack.c.l.b16 %v1792
        %v2337 = vunpack.c.l.b16 %v1793
        %v2338 = vunpack.c.l.b16 %v1794
        %v2339 = vunpack.c.l.b16 %v1795
        %v2340 = vunpack.c.l.b16 %v1796
        %v2341 = vunpack.c.l.b16 %v1797
        %v2342 = vunpack.c.l.b16 %v1798
        %v2343 = vunpack.c.l.b16 %v1799
        %v2344 = vunpack.c.l.b16 %v1800
        %v2345 = vunpack.c.l.b16 %v1801
        %v2346 = vunpack.c.l.b16 %v1802
        %v2347 = vunpack.c.l.b16 %v1803
        %v2348 = vunpack.c.l.b16 %v1804
        %v2349 = vunpack.c.l.b16 %v1805
        %v2350 = vunpack.c.l.b16 %v1806
        %v2351 = vunpack.c.l.b16 %v1807
        %v2352 = vunpack.c.l.b16 %v1808
        %v2353 = vunpack.c.l.b16 %v1809
        %v2354 = vunpack.c.l.b16 %v1810
        %v2355 = vunpack.c.l.b16 %v1811
        %v2356 = vunpack.c.l.b16 %v1812
        %v2357 = vunpack.c.l.b16 %v1813
        %v2358 = vunpack.c.l.b16 %v1814
        %v2359 = vunpack.c.l.b16 %v1815
        %v2360 = vunpack.c.l.b16 %v1816
        %v2361 = vunpack.c.l.b16 %v1817
        %v2362 = vunpack.c.l.b16 %v1818
        %v2363 = vunpack.c.l.b16 %v1819
        %v2364 = vunpack.c.l.b16 %v1820
        %v2365 = vunpack.c.l.b16 %v1821
        %v2366 = vunpack.c.l.b16 %v1822
        %v2367 = vpack.c.b16 %v2304, %v2303
        %v2368 = vpack.c.b16 %v2306, %v2305
        %v2369 = vpack.c.b16 %v2308, %v2307
        %v2370 = vpack.c.b16 %v2310, %v2309
        %v2371 = vpack.c.b16 %v2312, %v2311
        %v2372 = vpack.c.b16 %v2314, %v2313
        %v2373 = vpack.c.b16 %v2316, %v2315
        %v2374 = vpack.c.b16 %v2318, %v2317
        %v2375 = vpack.c.b16 %v2320, %v2319
        %v2376 = vpack.c.b16 %v2322, %v2321
        %v2377 = vpack.c.b16 %v2324, %v2323
        %v2378 = vpack.c.b16 %v2326, %v2325
        %v2379 = vpack.c.b16 %v2328, %v2327
        %v2380 = vpack.c.b16 %v2330, %v2329
        %v2381 = vpack.c.b16 %v2332, %v2331
        %v2382 = vpack.c.b16 %v2334, %v2333
        %v2383 = vpack.c.b16 %v2336, %v2335
        %v2384 = vpack.c.b16 %v2338, %v2337
        %v2385 = vpack.c.b16 %v2340, %v2339
        %v2386 = vpack.c.b16 %v2342, %v2341
        %v2387 = vpack.c.b16 %v2344, %v2343
        %v2388 = vpack.c.b16 %v2346, %v2345
        %v2389 = vpack.c.b16 %v2348, %v2347
        %v2390 = vpack.c.b16 %v2350, %v2349
        %v2391 = vpack.c.b16 %v2352, %v2351
        %v2392 = vpack.c.b16 %v2354, %v2353
        %v2393 = vpack.c.b16 %v2356, %v2355
        %v2394 = vpack.c.b16 %v2358, %v2357
        %v2395 = vpack.c.b16 %v2360, %v2359
        %v2396 = vpack.c.b16 %v2362, %v2361
        %v2397 = vpack.c.b16 %v2364, %v2363
        %v2398 = vpack.c.b16 %v2366, %v2365
        %2431 = vmatprep.subr.bf16.mxu0 0
        %2432 = vmatpush1.bf16.msra.mxu0 %v2374
        %2433 = vmatprep.subr.bf16.mxu0 0
        %2434 = vmatpush1.bf16.msra.mxu0 %v2373
        %2435 = vmatprep.subr.bf16.mxu0 0
        %2436 = vmatpush1.bf16.msra.mxu0 %v2372
        %2437 = vmatprep.subr.bf16.mxu0 0
        %2438 = vmatpush1.bf16.msra.mxu0 %v2371
        %2439 = vmatprep.subr.bf16.mxu0 0
        %2440 = vmatpush1.bf16.msra.mxu0 %v2370
        %2441 = vmatprep.subr.bf16.mxu0 0
        %2442 = vmatpush1.bf16.msra.mxu0 %v2369
        %2443 = vmatprep.subr.bf16.mxu0 0
        %2444 = vmatpush1.bf16.msra.mxu0 %v2368
        %2445 = vmatprep.subr.bf16.mxu0 0
        %2446 = vmatpush1.bf16.msra.mxu0 %v2367
        %2447 = vmatprep.subr.bf16.mxu0 0
        %2448 = vmatpush2.bf16.msra.mxu0 %v2382
        %2449 = vmatprep.subr.bf16.mxu0 0
        %2450 = vmatpush2.bf16.msra.mxu0 %v2381
        %2451 = vmatprep.subr.bf16.mxu0 0
        %2452 = vmatpush2.bf16.msra.mxu0 %v2380
        %2453 = vmatprep.subr.bf16.mxu0 0
        %2454 = vmatpush2.bf16.msra.mxu0 %v2379
        %2455 = vmatprep.subr.bf16.mxu0 0
        %2456 = vmatpush2.bf16.msra.mxu0 %v2378
        %2457 = vmatprep.subr.bf16.mxu0 0
        %2458 = vmatpush2.bf16.msra.mxu0 %v2377
        %2459 = vmatprep.subr.bf16.mxu0 0
        %2460 = vmatpush2.bf16.msra.mxu0 %v2376
        %2461 = vmatprep.subr.bf16.mxu0 0
        %2462 = vmatpush2.bf16.msra.mxu0 %v2375
        %2463 = vmatprep.mubr.bf16.mxu0 %v2230
        %2464 = vmatmul.mubr.bf16.gmra.mxu0 %v2229
        %v2465 = vpop.f32.mrf.mxu0
        %v2466 = vadd.f32 %v2237, %v2465
        %v2467 = vpop.f32.mrf.mxu0
        %v2468 = vpop.f32.mrf.mxu0
        %v2469 = vpop.f32.mrf.mxu0
        %2470 = vdwg.mxu0
        %2471 = vmatprep.subr.bf16.mxu0 0
        %2472 = vmatpush1.bf16.msra.mxu0 %v2390
        %2473 = vmatprep.subr.bf16.mxu0 0
        %2474 = vmatpush1.bf16.msra.mxu0 %v2389
        %2475 = vmatprep.subr.bf16.mxu0 0
        %2476 = vmatpush1.bf16.msra.mxu0 %v2388
        %2477 = vmatprep.subr.bf16.mxu0 0
        %2478 = vmatpush1.bf16.msra.mxu0 %v2387
        %2479 = vmatprep.subr.bf16.mxu0 0
        %2480 = vmatpush1.bf16.msra.mxu0 %v2386
        %2481 = vmatprep.subr.bf16.mxu0 0
        %2482 = vmatpush1.bf16.msra.mxu0 %v2385
        %2483 = vmatprep.subr.bf16.mxu0 0
        %2484 = vmatpush1.bf16.msra.mxu0 %v2384
        %2485 = vmatprep.subr.bf16.mxu0 0
        %2486 = vmatpush1.bf16.msra.mxu0 %v2383
        %2487 = vmatprep.subr.bf16.mxu0 0
        %2488 = vmatpush2.bf16.msra.mxu0 %v2398
        %2489 = vmatprep.subr.bf16.mxu0 0
        %2490 = vmatpush2.bf16.msra.mxu0 %v2397
        %2491 = vmatprep.subr.bf16.mxu0 0
        %2492 = vmatpush2.bf16.msra.mxu0 %v2396
        %2493 = vmatprep.subr.bf16.mxu0 0
        %2494 = vmatpush2.bf16.msra.mxu0 %v2395
        %2495 = vmatprep.subr.bf16.mxu0 0
        %2496 = vmatpush2.bf16.msra.mxu0 %v2394
        %2497 = vmatprep.subr.bf16.mxu0 0
        %2498 = vmatpush2.bf16.msra.mxu0 %v2393
        %2499 = vmatprep.subr.bf16.mxu0 0
        %2500 = vmatpush2.bf16.msra.mxu0 %v2392
        %2501 = vmatprep.subr.bf16.mxu0 0
        %2502 = vmatpush2.bf16.msra.mxu0 %v2391
        %2503 = vmatprep.mubr.bf16.mxu0 %v2232
        %2504 = vmatmul.mubr.bf16.gmra.mxu0 %v2231
        %v2505 = vpop.f32.mrf.mxu0
        %v2506 = vadd.f32 %v2466, %v2505
        %v2507 = vpop.f32.mrf.mxu0
        %v2508 = vpop.f32.mrf.mxu0
        %v2509 = vpop.f32.mrf.mxu0
        %2510 = vdwg.mxu0
        %v2511 = vadd.f32 %v2506, %v1588
        %v2512 = vld [vmem:[%s10] sm:$0x1]
        %v2513 = vld [vmem:[%s11] sm:$0x1]
        %v2514 = vsel %vm1661, %v2511, 0.0
        %2515 = vadd.xlane.f32.xlu0 %v2514
        %v2516 = vpop.xlane.xlu0 %2515
        %v2517 = vrcp.pop 32.0
        %v2518 = vmul.f32 %v2516, %v2517
        %v2519 = vsub.f32 %v2511, %v2518
        %v2520 = vmul.f32 %v2519, %v2519
        %v2521 = vsel %vm1661, %v2520, 0.0
        %2522 = vadd.xlane.f32.xlu0 %v2521
        %v2523 = vpop.xlane.xlu0 %2522
        %v2524 = vmul.f32 %v2523, %v2517
        %v2525 = vadd.f32 %v2524, 1e-12
        %v2526 = vrsqrt.pop %v2525
        %v2527 = vmul.f32 %v2519, %v2526
        %v2529 = vlaneseq
        %v2530 = vshrl.u32 %v2529, 7
        %v2531 = vsub.s32 0, %v2530
        %v2532 = vrot.slane %v2512, %v2531
        %v2534 = vmul.f32 %v2527, %v2532
        %v2536 = vlaneseq
        %v2537 = vshrl.u32 %v2536, 7
        %v2538 = vsub.s32 0, %v2537
        %v2539 = vrot.slane %v2513, %v2538
        %v2541 = vadd.f32 %v2534, %v2539
        %v2542 = vpack.c.bf16 %v2541, %v2541
        %v2543 = vld [vmem:[%s12] sm:$0xff]
        %v2544 = vld [vmem:[%s12 + $0x8] sm:$0xff]
        %v2545 = vld [vmem:[%s12 + $0x10] sm:$0xff]
        %v2546 = vld [vmem:[%s12 + $0x18] sm:$0xff]
        %v2547 = vld [vmem:[%s12 + $0x20] sm:$0xff]
        %v2548 = vld [vmem:[%s12 + $0x28] sm:$0xff]
        %v2549 = vld [vmem:[%s12 + $0x30] sm:$0xff]
        %v2550 = vld [vmem:[%s12 + $0x38] sm:$0xff]
        %v2551 = vld [vmem:[%s13] sm:$0xf]
        %v2553 = vlaneseq
        %v2554 = vshrl.u32 %v2553, 7
        %v2555 = vsub.s32 0, %v2554
        %v2556 = vrot.slane %v2551, %v2555
        %v2557 = vlaneseq
        %v2558 = vshrl.u32 %v2557, 7
        %v2559 = vsub.s32 1, %v2558
        %v2560 = vrot.slane %v2551, %v2559
        %v2561 = vlaneseq
        %v2562 = vshrl.u32 %v2561, 7
        %v2563 = vsub.s32 2, %v2562
        %v2564 = vrot.slane %v2551, %v2563
        %v2565 = vlaneseq
        %v2566 = vshrl.u32 %v2565, 7
        %v2567 = vsub.s32 3, %v2566
        %v2568 = vrot.slane %v2551, %v2567
        %v2581 = vunpack.c.l.b16 %v2543
        %v2582 = vunpack.c.h.b16 %v2543
        %v2583 = vunpack.c.l.b16 %v2544
        %v2584 = vunpack.c.h.b16 %v2544
        %v2585 = vunpack.c.l.b16 %v2545
        %v2586 = vunpack.c.h.b16 %v2545
        %v2587 = vunpack.c.l.b16 %v2546
        %v2588 = vunpack.c.h.b16 %v2546
        %v2589 = vunpack.c.l.b16 %v2547
        %v2590 = vunpack.c.h.b16 %v2547
        %v2591 = vunpack.c.l.b16 %v2548
        %v2592 = vunpack.c.h.b16 %v2548
        %v2593 = vunpack.c.l.b16 %v2549
        %v2594 = vunpack.c.h.b16 %v2549
        %v2595 = vunpack.c.l.b16 %v2550
        %v2596 = vunpack.c.h.b16 %v2550
        %v2597 = vpack.c.b16 %v2585, %v2581
        %v2598 = vpack.c.b16 %v2586, %v2582
        %v2599 = vpack.c.b16 %v2587, %v2583
        %v2600 = vpack.c.b16 %v2588, %v2584
        %v2601 = vpack.c.b16 %v2593, %v2589
        %v2602 = vpack.c.b16 %v2594, %v2590
        %v2603 = vpack.c.b16 %v2595, %v2591
        %v2604 = vpack.c.b16 %v2596, %v2592
        %v2614 = vsel %vm1661, %v2542, 0
        %2616 = vmatprep.subr.bf16.mxu0 0
        %2617 = vmatpush1.bf16.msra.mxu0 0
        %2618 = vmatprep.subr.bf16.mxu0 0
        %2619 = vmatpush1.bf16.msra.mxu0 0
        %2620 = vmatprep.subr.bf16.mxu0 0
        %2621 = vmatpush1.bf16.msra.mxu0 0
        %2622 = vmatprep.subr.bf16.mxu0 0
        %2623 = vmatpush1.bf16.msra.mxu0 0
        %2624 = vmatprep.subr.bf16.mxu0 0
        %2625 = vmatpush1.bf16.msra.mxu0 0
        %2626 = vmatprep.subr.bf16.mxu0 0
        %2627 = vmatpush1.bf16.msra.mxu0 0
        %2628 = vmatprep.subr.bf16.mxu0 %v2602
        %2629 = vmatpush1.bf16.msra.mxu0 %v2601
        %2630 = vmatprep.subr.bf16.mxu0 %v2598
        %2631 = vmatpush1.bf16.msra.mxu0 %v2597
        %2632 = vmatprep.subr.bf16.mxu0 0
        %2633 = vmatpush2.bf16.msra.mxu0 0
        %2634 = vmatprep.subr.bf16.mxu0 0
        %2635 = vmatpush2.bf16.msra.mxu0 0
        %2636 = vmatprep.subr.bf16.mxu0 0
        %2637 = vmatpush2.bf16.msra.mxu0 0
        %2638 = vmatprep.subr.bf16.mxu0 0
        %2639 = vmatpush2.bf16.msra.mxu0 0
        %2640 = vmatprep.subr.bf16.mxu0 0
        %2641 = vmatpush2.bf16.msra.mxu0 0
        %2642 = vmatprep.subr.bf16.mxu0 0
        %2643 = vmatpush2.bf16.msra.mxu0 0
        %2644 = vmatprep.subr.bf16.mxu0 0
        %2645 = vmatpush2.bf16.msra.mxu0 0
        %2646 = vmatprep.subr.bf16.mxu0 0
        %2647 = vmatpush2.bf16.msra.mxu0 0
        %2648 = vmatprep.mubr.bf16.mxu0 0
        %2649 = vmatmul.mubr.bf16.gmra.mxu0 %v2614
        %v2650 = vpop.f32.mrf.mxu0
        %v2651 = vadd.f32 %v2556, %v2650
        %v2652 = vpop.f32.mrf.mxu0
        %v2653 = vadd.f32 %v2560, %v2652
        %v2654 = vpop.f32.mrf.mxu0
        %v2655 = vpop.f32.mrf.mxu0
        %2656 = vdwg.mxu0
        %2657 = vmatprep.subr.bf16.mxu0 0
        %2658 = vmatpush1.bf16.msra.mxu0 0
        %2659 = vmatprep.subr.bf16.mxu0 0
        %2660 = vmatpush1.bf16.msra.mxu0 0
        %2661 = vmatprep.subr.bf16.mxu0 0
        %2662 = vmatpush1.bf16.msra.mxu0 0
        %2663 = vmatprep.subr.bf16.mxu0 0
        %2664 = vmatpush1.bf16.msra.mxu0 0
        %2665 = vmatprep.subr.bf16.mxu0 0
        %2666 = vmatpush1.bf16.msra.mxu0 0
        %2667 = vmatprep.subr.bf16.mxu0 0
        %2668 = vmatpush1.bf16.msra.mxu0 0
        %2669 = vmatprep.subr.bf16.mxu0 %v2604
        %2670 = vmatpush1.bf16.msra.mxu0 %v2603
        %2671 = vmatprep.subr.bf16.mxu0 %v2600
        %2672 = vmatpush1.bf16.msra.mxu0 %v2599
        %2673 = vmatprep.subr.bf16.mxu0 0
        %2674 = vmatpush2.bf16.msra.mxu0 0
        %2675 = vmatprep.subr.bf16.mxu0 0
        %2676 = vmatpush2.bf16.msra.mxu0 0
        %2677 = vmatprep.subr.bf16.mxu0 0
        %2678 = vmatpush2.bf16.msra.mxu0 0
        %2679 = vmatprep.subr.bf16.mxu0 0
        %2680 = vmatpush2.bf16.msra.mxu0 0
        %2681 = vmatprep.subr.bf16.mxu0 0
        %2682 = vmatpush2.bf16.msra.mxu0 0
        %2683 = vmatprep.subr.bf16.mxu0 0
        %2684 = vmatpush2.bf16.msra.mxu0 0
        %2685 = vmatprep.subr.bf16.mxu0 0
        %2686 = vmatpush2.bf16.msra.mxu0 0
        %2687 = vmatprep.subr.bf16.mxu0 0
        %2688 = vmatpush2.bf16.msra.mxu0 0
        %2689 = vmatprep.mubr.bf16.mxu0 0
        %2690 = vmatmul.mubr.bf16.gmra.mxu0 %v2614
        %v2691 = vpop.f32.mrf.mxu0
        %v2692 = vadd.f32 %v2564, %v2691
        %v2693 = vpop.f32.mrf.mxu0
        %v2694 = vadd.f32 %v2568, %v2693
        %v2695 = vpop.f32.mrf.mxu0
        %v2696 = vpop.f32.mrf.mxu0
        %2697 = vdwg.mxu0
        %v2698 = vpack.c.bf16 %v2651, %v2651
        %v2699 = vpack.c.bf16 %v2653, %v2653
        %v2700 = vpack.c.bf16 %v2692, %v2692
        %v2701 = vpack.c.bf16 %v2694, %v2694
        %v2702 = vld [vmem:[#allocation3] sm:$0xf]
        %v2703 = vld [vmem:[#allocation3 + $0x4] sm:$0xf]
        %v2704 = vld [vmem:[#allocation3 + $0x8] sm:$0xf]
        %v2705 = vld [vmem:[#allocation3 + $0xc] sm:$0xf]
        %v2706 = vld [vmem:[#allocation3 + $0x10] sm:$0xf]
        %v2707 = vld [vmem:[#allocation3 + $0x14] sm:$0xf]
        %v2708 = vld [vmem:[#allocation3 + $0x18] sm:$0xf]
        %v2709 = vld [vmem:[#allocation3 + $0x1c] sm:$0xf]
        %v2710 = vld [vmem:[%s16] sm:$0xf]
        %v2711 = vld [vmem:[%s16 + $0x4] sm:$0xf]
        %v2712 = vld [vmem:[%s16 + $0x8] sm:$0xf]
        %v2713 = vld [vmem:[%s16 + $0xc] sm:$0xf]
        %v2714 = vld [vmem:[%s16 + $0x10] sm:$0xf]
        %v2715 = vld [vmem:[%s16 + $0x14] sm:$0xf]
        %v2716 = vld [vmem:[%s16 + $0x18] sm:$0xf]
        %v2717 = vld [vmem:[%s16 + $0x1c] sm:$0xf]
        %v2718 = vld [vmem:[%s16 + $0x20] sm:$0xf]
        %v2719 = vld [vmem:[%s16 + $0x24] sm:$0xf]
        %v2720 = vld [vmem:[%s16 + $0x28] sm:$0xf]
        %v2721 = vld [vmem:[%s16 + $0x2c] sm:$0xf]
        %v2722 = vld [vmem:[%s16 + $0x30] sm:$0xf]
        %v2723 = vld [vmem:[%s16 + $0x34] sm:$0xf]
        %v2724 = vld [vmem:[%s16 + $0x38] sm:$0xf]
        %v2725 = vld [vmem:[%s16 + $0x3c] sm:$0xf]
        %v2726 = vld [vmem:[%s16 + $0x40] sm:$0xf]
        %v2727 = vld [vmem:[%s16 + $0x44] sm:$0xf]
        %v2728 = vld [vmem:[%s16 + $0x48] sm:$0xf]
        %v2729 = vld [vmem:[%s16 + $0x4c] sm:$0xf]
        %v2730 = vld [vmem:[%s16 + $0x50] sm:$0xf]
        %v2731 = vld [vmem:[%s16 + $0x54] sm:$0xf]
        %v2732 = vld [vmem:[%s16 + $0x58] sm:$0xf]
        %v2733 = vld [vmem:[%s16 + $0x5c] sm:$0xf]
        %v2734 = vld [vmem:[%s16 + $0x60] sm:$0xf]
        %v2735 = vld [vmem:[%s16 + $0x64] sm:$0xf]
        %v2736 = vld [vmem:[%s16 + $0x68] sm:$0xf]
        %v2737 = vld [vmem:[%s16 + $0x6c] sm:$0xf]
        %v2738 = vld [vmem:[%s16 + $0x70] sm:$0xf]
        %v2739 = vld [vmem:[%s16 + $0x74] sm:$0xf]
        %v2740 = vld [vmem:[%s16 + $0x78] sm:$0xf]
        %v2741 = vld [vmem:[%s16 + $0x7c] sm:$0xf]
        %v2742 = vld [vmem:[%s16 + $0x80] sm:$0xf]
        %v2743 = vld [vmem:[%s16 + $0x84] sm:$0xf]
        %v2744 = vld [vmem:[%s16 + $0x88] sm:$0xf]
        %v2745 = vld [vmem:[%s16 + $0x8c] sm:$0xf]
        %v2746 = vld [vmem:[%s16 + $0x90] sm:$0xf]
        %v2747 = vld [vmem:[%s16 + $0x94] sm:$0xf]
        %v2748 = vld [vmem:[%s16 + $0x98] sm:$0xf]
        %v2749 = vld [vmem:[%s16 + $0x9c] sm:$0xf]
        %v2750 = vld [vmem:[%s16 + $0xa0] sm:$0xf]
        %v2751 = vld [vmem:[%s16 + $0xa4] sm:$0xf]
        %v2752 = vld [vmem:[%s16 + $0xa8] sm:$0xf]
        %v2753 = vld [vmem:[%s16 + $0xac] sm:$0xf]
        %v2754 = vld [vmem:[%s16 + $0xb0] sm:$0xf]
        %v2755 = vld [vmem:[%s16 + $0xb4] sm:$0xf]
        %v2756 = vld [vmem:[%s16 + $0xb8] sm:$0xf]
        %v2757 = vld [vmem:[%s16 + $0xbc] sm:$0xf]
        %v2758 = vld [vmem:[%s16 + $0xc0] sm:$0xf]
        %v2759 = vld [vmem:[%s16 + $0xc4] sm:$0xf]
        %v2760 = vld [vmem:[%s16 + $0xc8] sm:$0xf]
        %v2761 = vld [vmem:[%s16 + $0xcc] sm:$0xf]
        %v2762 = vld [vmem:[%s16 + $0xd0] sm:$0xf]
        %v2763 = vld [vmem:[%s16 + $0xd4] sm:$0xf]
        %v2764 = vld [vmem:[%s16 + $0xd8] sm:$0xf]
        %v2765 = vld [vmem:[%s16 + $0xdc] sm:$0xf]
        %v2766 = vld [vmem:[%s16 + $0xe0] sm:$0xf]
        %v2767 = vld [vmem:[%s16 + $0xe4] sm:$0xf]
        %v2768 = vld [vmem:[%s16 + $0xe8] sm:$0xf]
        %v2769 = vld [vmem:[%s16 + $0xec] sm:$0xf]
        %v2770 = vld [vmem:[%s16 + $0xf0] sm:$0xf]
        %v2771 = vld [vmem:[%s16 + $0xf4] sm:$0xf]
        %v2772 = vld [vmem:[%s16 + $0xf8] sm:$0xf]
        %v2773 = vld [vmem:[%s16 + $0xfc] sm:$0xf]
        %v2774 = vld [vmem:[%s17] sm:$0x1]
        %2775 = vmatprep.subr.bf16.mxu0 0
        %2776 = vmatpush1.bf16.xpose.msra.mxu0 0
        %2777 = vmatprep.subr.bf16.mxu0 0
        %2778 = vmatpush1.bf16.xpose.msra.mxu0 0
        %2779 = vmatprep.subr.bf16.mxu0 0
        %2780 = vmatpush1.bf16.xpose.msra.mxu0 0
        %2781 = vmatprep.subr.bf16.mxu0 0
        %2782 = vmatpush1.bf16.xpose.msra.mxu0 0
        %2783 = vmatprep.subr.bf16.mxu0 0
        %2784 = vmatpush1.bf16.xpose.msra.mxu0 0
        %2785 = vmatprep.subr.bf16.mxu0 0
        %2786 = vmatpush1.bf16.xpose.msra.mxu0 0
        %2787 = vmatprep.subr.bf16.mxu0 0
        %2788 = vmatpush1.bf16.xpose.msra.mxu0 0
        %2789 = vmatprep.subr.bf16.mxu0 0
        %2790 = vmatpush1.bf16.xpose.msra.mxu0 %v2702
        %2791 = vmatprep.subr.bf16.mxu0 0
        %2792 = vmatpush2.bf16.xpose.msra.mxu0 0
        %2793 = vmatprep.subr.bf16.mxu0 0
        %2794 = vmatpush2.bf16.xpose.msra.mxu0 0
        %2795 = vmatprep.subr.bf16.mxu0 0
        %2796 = vmatpush2.bf16.xpose.msra.mxu0 0
        %2797 = vmatprep.subr.bf16.mxu0 0
        %2798 = vmatpush2.bf16.xpose.msra.mxu0 0
        %2799 = vmatprep.subr.bf16.mxu0 0
        %2800 = vmatpush2.bf16.xpose.msra.mxu0 0
        %2801 = vmatprep.subr.bf16.mxu0 0
        %2802 = vmatpush2.bf16.xpose.msra.mxu0 0
        %2803 = vmatprep.subr.bf16.mxu0 0
        %2804 = vmatpush2.bf16.xpose.msra.mxu0 0
        %2805 = vmatprep.subr.bf16.mxu0 0
        %2806 = vmatpush2.bf16.xpose.msra.mxu0 0
        %2807 = vmatprep.mubr.bf16.mxu0 0
        %2808 = vmatmul.mubr.bf16.gmra.mxu0 %v2698
        %v2809 = vpop.f32.mrf.mxu0
        %v2810 = vadd.f32 0.0, %v2809
        %v2811 = vpop.f32.mrf.mxu0
        %v2812 = vpop.f32.mrf.mxu0
        %v2813 = vpop.f32.mrf.mxu0
        %2814 = vdwg.mxu0
        %2815 = vmatprep.subr.bf16.mxu0 0
        %2816 = vmatpush1.bf16.xpose.msra.mxu0 0
        %2817 = vmatprep.subr.bf16.mxu0 0
        %2818 = vmatpush1.bf16.xpose.msra.mxu0 0
        %2819 = vmatprep.subr.bf16.mxu0 0
        %2820 = vmatpush1.bf16.xpose.msra.mxu0 0
        %2821 = vmatprep.subr.bf16.mxu0 0
        %2822 = vmatpush1.bf16.xpose.msra.mxu0 0
        %2823 = vmatprep.subr.bf16.mxu0 0
        %2824 = vmatpush1.bf16.xpose.msra.mxu0 0
        %2825 = vmatprep.subr.bf16.mxu0 0
        %2826 = vmatpush1.bf16.xpose.msra.mxu0 0
        %2827 = vmatprep.subr.bf16.mxu0 0
        %2828 = vmatpush1.bf16.xpose.msra.mxu0 0
        %2829 = vmatprep.subr.bf16.mxu0 0
        %2830 = vmatpush1.bf16.xpose.msra.mxu0 %v2703
        %2831 = vmatprep.subr.bf16.mxu0 0
        %2832 = vmatpush2.bf16.xpose.msra.mxu0 0
        %2833 = vmatprep.subr.bf16.mxu0 0
        %2834 = vmatpush2.bf16.xpose.msra.mxu0 0
        %2835 = vmatprep.subr.bf16.mxu0 0
        %2836 = vmatpush2.bf16.xpose.msra.mxu0 0
        %2837 = vmatprep.subr.bf16.mxu0 0
        %2838 = vmatpush2.bf16.xpose.msra.mxu0 0
        %2839 = vmatprep.subr.bf16.mxu0 0
        %2840 = vmatpush2.bf16.xpose.msra.mxu0 0
        %2841 = vmatprep.subr.bf16.mxu0 0
        %2842 = vmatpush2.bf16.xpose.msra.mxu0 0
        %2843 = vmatprep.subr.bf16.mxu0 0
        %2844 = vmatpush2.bf16.xpose.msra.mxu0 0
        %2845 = vmatprep.subr.bf16.mxu0 0
        %2846 = vmatpush2.bf16.xpose.msra.mxu0 0
        %2847 = vmatprep.mubr.bf16.mxu0 0
        %2848 = vmatmul.mubr.bf16.gmra.mxu0 %v2699
        %v2849 = vpop.f32.mrf.mxu0
        %v2850 = vadd.f32 0.0, %v2849
        %v2851 = vpop.f32.mrf.mxu0
        %v2852 = vpop.f32.mrf.mxu0
        %v2853 = vpop.f32.mrf.mxu0
        %2854 = vdwg.mxu0
        %2855 = vmatprep.subr.bf16.mxu0 0
        %2856 = vmatpush1.bf16.xpose.msra.mxu0 0
        %2857 = vmatprep.subr.bf16.mxu0 0
        %2858 = vmatpush1.bf16.xpose.msra.mxu0 0
        %2859 = vmatprep.subr.bf16.mxu0 0
        %2860 = vmatpush1.bf16.xpose.msra.mxu0 0
        %2861 = vmatprep.subr.bf16.mxu0 0
        %2862 = vmatpush1.bf16.xpose.msra.mxu0 0
        %2863 = vmatprep.subr.bf16.mxu0 0
        %2864 = vmatpush1.bf16.xpose.msra.mxu0 0
        %2865 = vmatprep.subr.bf16.mxu0 0
        %2866 = vmatpush1.bf16.xpose.msra.mxu0 0
        %2867 = vmatprep.subr.bf16.mxu0 0
        %2868 = vmatpush1.bf16.xpose.msra.mxu0 0
        %2869 = vmatprep.subr.bf16.mxu0 0
        %2870 = vmatpush1.bf16.xpose.msra.mxu0 %v2704
        %2871 = vmatprep.subr.bf16.mxu0 0
        %2872 = vmatpush2.bf16.xpose.msra.mxu0 0
        %2873 = vmatprep.subr.bf16.mxu0 0
        %2874 = vmatpush2.bf16.xpose.msra.mxu0 0
        %2875 = vmatprep.subr.bf16.mxu0 0
        %2876 = vmatpush2.bf16.xpose.msra.mxu0 0
        %2877 = vmatprep.subr.bf16.mxu0 0
        %2878 = vmatpush2.bf16.xpose.msra.mxu0 0
        %2879 = vmatprep.subr.bf16.mxu0 0
        %2880 = vmatpush2.bf16.xpose.msra.mxu0 0
        %2881 = vmatprep.subr.bf16.mxu0 0
        %2882 = vmatpush2.bf16.xpose.msra.mxu0 0
        %2883 = vmatprep.subr.bf16.mxu0 0
        %2884 = vmatpush2.bf16.xpose.msra.mxu0 0
        %2885 = vmatprep.subr.bf16.mxu0 0
        %2886 = vmatpush2.bf16.xpose.msra.mxu0 0
        %2887 = vmatprep.mubr.bf16.mxu0 0
        %2888 = vmatmul.mubr.bf16.gmra.mxu0 %v2700
        %v2889 = vpop.f32.mrf.mxu0
        %v2890 = vadd.f32 0.0, %v2889
        %v2891 = vpop.f32.mrf.mxu0
        %v2892 = vpop.f32.mrf.mxu0
        %v2893 = vpop.f32.mrf.mxu0
        %2894 = vdwg.mxu0
        %2895 = vmatprep.subr.bf16.mxu0 0
        %2896 = vmatpush1.bf16.xpose.msra.mxu0 0
        %2897 = vmatprep.subr.bf16.mxu0 0
        %2898 = vmatpush1.bf16.xpose.msra.mxu0 0
        %2899 = vmatprep.subr.bf16.mxu0 0
        %2900 = vmatpush1.bf16.xpose.msra.mxu0 0
        %2901 = vmatprep.subr.bf16.mxu0 0
        %2902 = vmatpush1.bf16.xpose.msra.mxu0 0
        %2903 = vmatprep.subr.bf16.mxu0 0
        %2904 = vmatpush1.bf16.xpose.msra.mxu0 0
        %2905 = vmatprep.subr.bf16.mxu0 0
        %2906 = vmatpush1.bf16.xpose.msra.mxu0 0
        %2907 = vmatprep.subr.bf16.mxu0 0
        %2908 = vmatpush1.bf16.xpose.msra.mxu0 0
        %2909 = vmatprep.subr.bf16.mxu0 0
        %2910 = vmatpush1.bf16.xpose.msra.mxu0 %v2705
        %2911 = vmatprep.subr.bf16.mxu0 0
        %2912 = vmatpush2.bf16.xpose.msra.mxu0 0
        %2913 = vmatprep.subr.bf16.mxu0 0
        %2914 = vmatpush2.bf16.xpose.msra.mxu0 0
        %2915 = vmatprep.subr.bf16.mxu0 0
        %2916 = vmatpush2.bf16.xpose.msra.mxu0 0
        %2917 = vmatprep.subr.bf16.mxu0 0
        %2918 = vmatpush2.bf16.xpose.msra.mxu0 0
        %2919 = vmatprep.subr.bf16.mxu0 0
        %2920 = vmatpush2.bf16.xpose.msra.mxu0 0
        %2921 = vmatprep.subr.bf16.mxu0 0
        %2922 = vmatpush2.bf16.xpose.msra.mxu0 0
        %2923 = vmatprep.subr.bf16.mxu0 0
        %2924 = vmatpush2.bf16.xpose.msra.mxu0 0
        %2925 = vmatprep.subr.bf16.mxu0 0
        %2926 = vmatpush2.bf16.xpose.msra.mxu0 0
        %2927 = vmatprep.mubr.bf16.mxu0 0
        %2928 = vmatmul.mubr.bf16.gmra.mxu0 %v2701
        %v2929 = vpop.f32.mrf.mxu0
        %v2930 = vadd.f32 0.0, %v2929
        %v2931 = vpop.f32.mrf.mxu0
        %v2932 = vpop.f32.mrf.mxu0
        %v2933 = vpop.f32.mrf.mxu0
        %2934 = vdwg.mxu0
        %v2935 = vsel %vm1990, %v2810, -inf
        %2936 = vmax.xlane.f32.xlu0 %v2935
        %v2937 = vpop.xlane.xlu0 %2936
        %v2938 = vsel %vm1990, %v2850, -inf
        %2939 = vmax.xlane.f32.xlu0 %v2938
        %v2940 = vpop.xlane.xlu0 %2939
        %v2941 = vsel %vm1990, %v2890, -inf
        %2942 = vmax.xlane.f32.xlu0 %v2941
        %v2943 = vpop.xlane.xlu0 %2942
        %v2944 = vsel %vm1990, %v2930, -inf
        %2945 = vmax.xlane.f32.xlu0 %v2944
        %v2946 = vpop.xlane.xlu0 %2945
        %v2947 = vsub.f32 %v2810, %v2937
        %v2948 = vsub.f32 %v2850, %v2940
        %v2949 = vsub.f32 %v2890, %v2943
        %v2950 = vsub.f32 %v2930, %v2946
        %v2951 = vmul.f32 %v2947, 1.442695
        %v2952 = vpow.pop %v2951
        %v2953 = vmul.f32 %v2948, 1.442695
        %v2954 = vpow.pop %v2953
        %v2955 = vmul.f32 %v2949, 1.442695
        %v2956 = vpow.pop %v2955
        %v2957 = vmul.f32 %v2950, 1.442695
        %v2958 = vpow.pop %v2957
        %v2959 = vsel %vm1990, %v2952, 0.0
        %2960 = vadd.xlane.f32.xlu0 %v2959
        %v2961 = vpop.xlane.xlu0 %2960
        %v2962 = vsel %vm1990, %v2954, 0.0
        %2963 = vadd.xlane.f32.xlu0 %v2962
        %v2964 = vpop.xlane.xlu0 %2963
        %v2965 = vsel %vm1990, %v2956, 0.0
        %2966 = vadd.xlane.f32.xlu0 %v2965
        %v2967 = vpop.xlane.xlu0 %2966
        %v2968 = vsel %vm1990, %v2958, 0.0
        %2969 = vadd.xlane.f32.xlu0 %v2968
        %v2970 = vpop.xlane.xlu0 %2969
        %v2971 = vrcp.pop %v2961
        %v2972 = vrcp.pop %v2964
        %v2973 = vrcp.pop %v2967
        %v2974 = vrcp.pop %v2970
        %v2975 = vmul.f32 %v2952, %v2971
        %v2976 = vmul.f32 %v2954, %v2972
        %v2977 = vmul.f32 %v2956, %v2973
        %v2978 = vmul.f32 %v2958, %v2974
        %v2979 = vpack.c.bf16 %v2975, %v2975
        %v2980 = vpack.c.bf16 %v2976, %v2976
        %v2981 = vpack.c.bf16 %v2977, %v2977
        %v2982 = vpack.c.bf16 %v2978, %v2978
        %2983 = vst.msk [vmem:[%s917] sm:$0xf] %vm2039, %v2979
        %2984 = vst.msk [vmem:[%s917 + $0x4] sm:$0xf] %vm2039, %v2980
        %2985 = vst.msk [vmem:[%s917 + $0x8] sm:$0xf] %vm2039, %v2981
        %2986 = vst.msk [vmem:[%s917 + $0xc] sm:$0xf] %vm2039, %v2982
        %v2988 = vsel %vm1990, %v2979, 0
        %v2991 = vsel %vm2047, %v2706, 0
        %2993 = vmatprep.subr.bf16.mxu0 0
        %2994 = vmatpush1.bf16.msra.mxu0 0
        %2995 = vmatprep.subr.bf16.mxu0 0
        %2996 = vmatpush1.bf16.msra.mxu0 0
        %2997 = vmatprep.subr.bf16.mxu0 0
        %2998 = vmatpush1.bf16.msra.mxu0 0
        %2999 = vmatprep.subr.bf16.mxu0 0
        %3000 = vmatpush1.bf16.msra.mxu0 0
        %3001 = vmatprep.subr.bf16.mxu0 0
        %3002 = vmatpush1.bf16.msra.mxu0 0
        %3003 = vmatprep.subr.bf16.mxu0 0
        %3004 = vmatpush1.bf16.msra.mxu0 0
        %3005 = vmatprep.subr.bf16.mxu0 0
        %3006 = vmatpush1.bf16.msra.mxu0 0
        %3007 = vmatprep.subr.bf16.mxu0 0
        %3008 = vmatpush1.bf16.msra.mxu0 %v2991
        %3009 = vmatprep.subr.bf16.mxu0 0
        %3010 = vmatpush2.bf16.msra.mxu0 0
        %3011 = vmatprep.subr.bf16.mxu0 0
        %3012 = vmatpush2.bf16.msra.mxu0 0
        %3013 = vmatprep.subr.bf16.mxu0 0
        %3014 = vmatpush2.bf16.msra.mxu0 0
        %3015 = vmatprep.subr.bf16.mxu0 0
        %3016 = vmatpush2.bf16.msra.mxu0 0
        %3017 = vmatprep.subr.bf16.mxu0 0
        %3018 = vmatpush2.bf16.msra.mxu0 0
        %3019 = vmatprep.subr.bf16.mxu0 0
        %3020 = vmatpush2.bf16.msra.mxu0 0
        %3021 = vmatprep.subr.bf16.mxu0 0
        %3022 = vmatpush2.bf16.msra.mxu0 0
        %3023 = vmatprep.subr.bf16.mxu0 0
        %3024 = vmatpush2.bf16.msra.mxu0 0
        %3025 = vmatprep.mubr.bf16.mxu0 0
        %3026 = vmatmul.mubr.bf16.gmra.mxu0 %v2988
        %v3027 = vpop.f32.mrf.mxu0
        %v3028 = vadd.f32 0.0, %v3027
        %v3029 = vpop.f32.mrf.mxu0
        %v3030 = vpop.f32.mrf.mxu0
        %v3031 = vpop.f32.mrf.mxu0
        %3032 = vdwg.mxu0
        %v3034 = vsel %vm1990, %v2980, 0
        %v3037 = vsel %vm2047, %v2707, 0
        %3039 = vmatprep.subr.bf16.mxu0 0
        %3040 = vmatpush1.bf16.msra.mxu0 0
        %3041 = vmatprep.subr.bf16.mxu0 0
        %3042 = vmatpush1.bf16.msra.mxu0 0
        %3043 = vmatprep.subr.bf16.mxu0 0
        %3044 = vmatpush1.bf16.msra.mxu0 0
        %3045 = vmatprep.subr.bf16.mxu0 0
        %3046 = vmatpush1.bf16.msra.mxu0 0
        %3047 = vmatprep.subr.bf16.mxu0 0
        %3048 = vmatpush1.bf16.msra.mxu0 0
        %3049 = vmatprep.subr.bf16.mxu0 0
        %3050 = vmatpush1.bf16.msra.mxu0 0
        %3051 = vmatprep.subr.bf16.mxu0 0
        %3052 = vmatpush1.bf16.msra.mxu0 0
        %3053 = vmatprep.subr.bf16.mxu0 0
        %3054 = vmatpush1.bf16.msra.mxu0 %v3037
        %3055 = vmatprep.subr.bf16.mxu0 0
        %3056 = vmatpush2.bf16.msra.mxu0 0
        %3057 = vmatprep.subr.bf16.mxu0 0
        %3058 = vmatpush2.bf16.msra.mxu0 0
        %3059 = vmatprep.subr.bf16.mxu0 0
        %3060 = vmatpush2.bf16.msra.mxu0 0
        %3061 = vmatprep.subr.bf16.mxu0 0
        %3062 = vmatpush2.bf16.msra.mxu0 0
        %3063 = vmatprep.subr.bf16.mxu0 0
        %3064 = vmatpush2.bf16.msra.mxu0 0
        %3065 = vmatprep.subr.bf16.mxu0 0
        %3066 = vmatpush2.bf16.msra.mxu0 0
        %3067 = vmatprep.subr.bf16.mxu0 0
        %3068 = vmatpush2.bf16.msra.mxu0 0
        %3069 = vmatprep.subr.bf16.mxu0 0
        %3070 = vmatpush2.bf16.msra.mxu0 0
        %3071 = vmatprep.mubr.bf16.mxu0 0
        %3072 = vmatmul.mubr.bf16.gmra.mxu0 %v3034
        %v3073 = vpop.f32.mrf.mxu0
        %v3074 = vadd.f32 0.0, %v3073
        %v3075 = vpop.f32.mrf.mxu0
        %v3076 = vpop.f32.mrf.mxu0
        %v3077 = vpop.f32.mrf.mxu0
        %3078 = vdwg.mxu0
        %v3080 = vsel %vm1990, %v2981, 0
        %v3083 = vsel %vm2047, %v2708, 0
        %3085 = vmatprep.subr.bf16.mxu0 0
        %3086 = vmatpush1.bf16.msra.mxu0 0
        %3087 = vmatprep.subr.bf16.mxu0 0
        %3088 = vmatpush1.bf16.msra.mxu0 0
        %3089 = vmatprep.subr.bf16.mxu0 0
        %3090 = vmatpush1.bf16.msra.mxu0 0
        %3091 = vmatprep.subr.bf16.mxu0 0
        %3092 = vmatpush1.bf16.msra.mxu0 0
        %3093 = vmatprep.subr.bf16.mxu0 0
        %3094 = vmatpush1.bf16.msra.mxu0 0
        %3095 = vmatprep.subr.bf16.mxu0 0
        %3096 = vmatpush1.bf16.msra.mxu0 0
        %3097 = vmatprep.subr.bf16.mxu0 0
        %3098 = vmatpush1.bf16.msra.mxu0 0
        %3099 = vmatprep.subr.bf16.mxu0 0
        %3100 = vmatpush1.bf16.msra.mxu0 %v3083
        %3101 = vmatprep.subr.bf16.mxu0 0
        %3102 = vmatpush2.bf16.msra.mxu0 0
        %3103 = vmatprep.subr.bf16.mxu0 0
        %3104 = vmatpush2.bf16.msra.mxu0 0
        %3105 = vmatprep.subr.bf16.mxu0 0
        %3106 = vmatpush2.bf16.msra.mxu0 0
        %3107 = vmatprep.subr.bf16.mxu0 0
        %3108 = vmatpush2.bf16.msra.mxu0 0
        %3109 = vmatprep.subr.bf16.mxu0 0
        %3110 = vmatpush2.bf16.msra.mxu0 0
        %3111 = vmatprep.subr.bf16.mxu0 0
        %3112 = vmatpush2.bf16.msra.mxu0 0
        %3113 = vmatprep.subr.bf16.mxu0 0
        %3114 = vmatpush2.bf16.msra.mxu0 0
        %3115 = vmatprep.subr.bf16.mxu0 0
        %3116 = vmatpush2.bf16.msra.mxu0 0
        %3117 = vmatprep.mubr.bf16.mxu0 0
        %3118 = vmatmul.mubr.bf16.gmra.mxu0 %v3080
        %v3119 = vpop.f32.mrf.mxu0
        %v3120 = vadd.f32 0.0, %v3119
        %v3121 = vpop.f32.mrf.mxu0
        %v3122 = vpop.f32.mrf.mxu0
        %v3123 = vpop.f32.mrf.mxu0
        %3124 = vdwg.mxu0
        %v3126 = vsel %vm1990, %v2982, 0
        %v3129 = vsel %vm2047, %v2709, 0
        %3131 = vmatprep.subr.bf16.mxu0 0
        %3132 = vmatpush1.bf16.msra.mxu0 0
        %3133 = vmatprep.subr.bf16.mxu0 0
        %3134 = vmatpush1.bf16.msra.mxu0 0
        %3135 = vmatprep.subr.bf16.mxu0 0
        %3136 = vmatpush1.bf16.msra.mxu0 0
        %3137 = vmatprep.subr.bf16.mxu0 0
        %3138 = vmatpush1.bf16.msra.mxu0 0
        %3139 = vmatprep.subr.bf16.mxu0 0
        %3140 = vmatpush1.bf16.msra.mxu0 0
        %3141 = vmatprep.subr.bf16.mxu0 0
        %3142 = vmatpush1.bf16.msra.mxu0 0
        %3143 = vmatprep.subr.bf16.mxu0 0
        %3144 = vmatpush1.bf16.msra.mxu0 0
        %3145 = vmatprep.subr.bf16.mxu0 0
        %3146 = vmatpush1.bf16.msra.mxu0 %v3129
        %3147 = vmatprep.subr.bf16.mxu0 0
        %3148 = vmatpush2.bf16.msra.mxu0 0
        %3149 = vmatprep.subr.bf16.mxu0 0
        %3150 = vmatpush2.bf16.msra.mxu0 0
        %3151 = vmatprep.subr.bf16.mxu0 0
        %3152 = vmatpush2.bf16.msra.mxu0 0
        %3153 = vmatprep.subr.bf16.mxu0 0
        %3154 = vmatpush2.bf16.msra.mxu0 0
        %3155 = vmatprep.subr.bf16.mxu0 0
        %3156 = vmatpush2.bf16.msra.mxu0 0
        %3157 = vmatprep.subr.bf16.mxu0 0
        %3158 = vmatpush2.bf16.msra.mxu0 0
        %3159 = vmatprep.subr.bf16.mxu0 0
        %3160 = vmatpush2.bf16.msra.mxu0 0
        %3161 = vmatprep.subr.bf16.mxu0 0
        %3162 = vmatpush2.bf16.msra.mxu0 0
        %3163 = vmatprep.mubr.bf16.mxu0 0
        %3164 = vmatmul.mubr.bf16.gmra.mxu0 %v3126
        %v3165 = vpop.f32.mrf.mxu0
        %v3166 = vadd.f32 0.0, %v3165
        %v3167 = vpop.f32.mrf.mxu0
        %v3168 = vpop.f32.mrf.mxu0
        %v3169 = vpop.f32.mrf.mxu0
        %3170 = vdwg.mxu0
        %v3171 = vpack.c.bf16 %v3028, %v3028
        %v3172 = vpack.c.bf16 %v3074, %v3074
        %v3173 = vpack.c.bf16 %v3120, %v3120
        %v3174 = vpack.c.bf16 %v3166, %v3166
        %v3176 = vlaneseq
        %v3177 = vshrl.u32 %v3176, 7
        %v3178 = vsub.s32 0, %v3177
        %v3179 = vrot.slane %v2774, %v3178
        %v3245 = vunpack.c.l.b16 %v2710
        %v3246 = vunpack.c.l.b16 %v2711
        %v3247 = vunpack.c.l.b16 %v2712
        %v3248 = vunpack.c.l.b16 %v2713
        %v3249 = vunpack.c.l.b16 %v2714
        %v3250 = vunpack.c.l.b16 %v2715
        %v3251 = vunpack.c.l.b16 %v2716
        %v3252 = vunpack.c.l.b16 %v2717
        %v3253 = vunpack.c.l.b16 %v2718
        %v3254 = vunpack.c.l.b16 %v2719
        %v3255 = vunpack.c.l.b16 %v2720
        %v3256 = vunpack.c.l.b16 %v2721
        %v3257 = vunpack.c.l.b16 %v2722
        %v3258 = vunpack.c.l.b16 %v2723
        %v3259 = vunpack.c.l.b16 %v2724
        %v3260 = vunpack.c.l.b16 %v2725
        %v3261 = vunpack.c.l.b16 %v2726
        %v3262 = vunpack.c.l.b16 %v2727
        %v3263 = vunpack.c.l.b16 %v2728
        %v3264 = vunpack.c.l.b16 %v2729
        %v3265 = vunpack.c.l.b16 %v2730
        %v3266 = vunpack.c.l.b16 %v2731
        %v3267 = vunpack.c.l.b16 %v2732
        %v3268 = vunpack.c.l.b16 %v2733
        %v3269 = vunpack.c.l.b16 %v2734
        %v3270 = vunpack.c.l.b16 %v2735
        %v3271 = vunpack.c.l.b16 %v2736
        %v3272 = vunpack.c.l.b16 %v2737
        %v3273 = vunpack.c.l.b16 %v2738
        %v3274 = vunpack.c.l.b16 %v2739
        %v3275 = vunpack.c.l.b16 %v2740
        %v3276 = vunpack.c.l.b16 %v2741
        %v3277 = vunpack.c.l.b16 %v2742
        %v3278 = vunpack.c.l.b16 %v2743
        %v3279 = vunpack.c.l.b16 %v2744
        %v3280 = vunpack.c.l.b16 %v2745
        %v3281 = vunpack.c.l.b16 %v2746
        %v3282 = vunpack.c.l.b16 %v2747
        %v3283 = vunpack.c.l.b16 %v2748
        %v3284 = vunpack.c.l.b16 %v2749
        %v3285 = vunpack.c.l.b16 %v2750
        %v3286 = vunpack.c.l.b16 %v2751
        %v3287 = vunpack.c.l.b16 %v2752
        %v3288 = vunpack.c.l.b16 %v2753
        %v3289 = vunpack.c.l.b16 %v2754
        %v3290 = vunpack.c.l.b16 %v2755
        %v3291 = vunpack.c.l.b16 %v2756
        %v3292 = vunpack.c.l.b16 %v2757
        %v3293 = vunpack.c.l.b16 %v2758
        %v3294 = vunpack.c.l.b16 %v2759
        %v3295 = vunpack.c.l.b16 %v2760
        %v3296 = vunpack.c.l.b16 %v2761
        %v3297 = vunpack.c.l.b16 %v2762
        %v3298 = vunpack.c.l.b16 %v2763
        %v3299 = vunpack.c.l.b16 %v2764
        %v3300 = vunpack.c.l.b16 %v2765
        %v3301 = vunpack.c.l.b16 %v2766
        %v3302 = vunpack.c.l.b16 %v2767
        %v3303 = vunpack.c.l.b16 %v2768
        %v3304 = vunpack.c.l.b16 %v2769
        %v3305 = vunpack.c.l.b16 %v2770
        %v3306 = vunpack.c.l.b16 %v2771
        %v3307 = vunpack.c.l.b16 %v2772
        %v3308 = vunpack.c.l.b16 %v2773
        %v3309 = vpack.c.b16 %v3246, %v3245
        %v3310 = vpack.c.b16 %v3248, %v3247
        %v3311 = vpack.c.b16 %v3250, %v3249
        %v3312 = vpack.c.b16 %v3252, %v3251
        %v3313 = vpack.c.b16 %v3254, %v3253
        %v3314 = vpack.c.b16 %v3256, %v3255
        %v3315 = vpack.c.b16 %v3258, %v3257
        %v3316 = vpack.c.b16 %v3260, %v3259
        %v3317 = vpack.c.b16 %v3262, %v3261
        %v3318 = vpack.c.b16 %v3264, %v3263
        %v3319 = vpack.c.b16 %v3266, %v3265
        %v3320 = vpack.c.b16 %v3268, %v3267
        %v3321 = vpack.c.b16 %v3270, %v3269
        %v3322 = vpack.c.b16 %v3272, %v3271
        %v3323 = vpack.c.b16 %v3274, %v3273
        %v3324 = vpack.c.b16 %v3276, %v3275
        %v3325 = vpack.c.b16 %v3278, %v3277
        %v3326 = vpack.c.b16 %v3280, %v3279
        %v3327 = vpack.c.b16 %v3282, %v3281
        %v3328 = vpack.c.b16 %v3284, %v3283
        %v3329 = vpack.c.b16 %v3286, %v3285
        %v3330 = vpack.c.b16 %v3288, %v3287
        %v3331 = vpack.c.b16 %v3290, %v3289
        %v3332 = vpack.c.b16 %v3292, %v3291
        %v3333 = vpack.c.b16 %v3294, %v3293
        %v3334 = vpack.c.b16 %v3296, %v3295
        %v3335 = vpack.c.b16 %v3298, %v3297
        %v3336 = vpack.c.b16 %v3300, %v3299
        %v3337 = vpack.c.b16 %v3302, %v3301
        %v3338 = vpack.c.b16 %v3304, %v3303
        %v3339 = vpack.c.b16 %v3306, %v3305
        %v3340 = vpack.c.b16 %v3308, %v3307
        %3373 = vmatprep.subr.bf16.mxu0 0
        %3374 = vmatpush1.bf16.msra.mxu0 %v3316
        %3375 = vmatprep.subr.bf16.mxu0 0
        %3376 = vmatpush1.bf16.msra.mxu0 %v3315
        %3377 = vmatprep.subr.bf16.mxu0 0
        %3378 = vmatpush1.bf16.msra.mxu0 %v3314
        %3379 = vmatprep.subr.bf16.mxu0 0
        %3380 = vmatpush1.bf16.msra.mxu0 %v3313
        %3381 = vmatprep.subr.bf16.mxu0 0
        %3382 = vmatpush1.bf16.msra.mxu0 %v3312
        %3383 = vmatprep.subr.bf16.mxu0 0
        %3384 = vmatpush1.bf16.msra.mxu0 %v3311
        %3385 = vmatprep.subr.bf16.mxu0 0
        %3386 = vmatpush1.bf16.msra.mxu0 %v3310
        %3387 = vmatprep.subr.bf16.mxu0 0
        %3388 = vmatpush1.bf16.msra.mxu0 %v3309
        %3389 = vmatprep.subr.bf16.mxu0 0
        %3390 = vmatpush2.bf16.msra.mxu0 %v3324
        %3391 = vmatprep.subr.bf16.mxu0 0
        %3392 = vmatpush2.bf16.msra.mxu0 %v3323
        %3393 = vmatprep.subr.bf16.mxu0 0
        %3394 = vmatpush2.bf16.msra.mxu0 %v3322
        %3395 = vmatprep.subr.bf16.mxu0 0
        %3396 = vmatpush2.bf16.msra.mxu0 %v3321
        %3397 = vmatprep.subr.bf16.mxu0 0
        %3398 = vmatpush2.bf16.msra.mxu0 %v3320
        %3399 = vmatprep.subr.bf16.mxu0 0
        %3400 = vmatpush2.bf16.msra.mxu0 %v3319
        %3401 = vmatprep.subr.bf16.mxu0 0
        %3402 = vmatpush2.bf16.msra.mxu0 %v3318
        %3403 = vmatprep.subr.bf16.mxu0 0
        %3404 = vmatpush2.bf16.msra.mxu0 %v3317
        %3405 = vmatprep.mubr.bf16.mxu0 %v3172
        %3406 = vmatmul.mubr.bf16.gmra.mxu0 %v3171
        %v3407 = vpop.f32.mrf.mxu0
        %v3408 = vadd.f32 %v3179, %v3407
        %v3409 = vpop.f32.mrf.mxu0
        %v3410 = vpop.f32.mrf.mxu0
        %v3411 = vpop.f32.mrf.mxu0
        %3412 = vdwg.mxu0
        %3413 = vmatprep.subr.bf16.mxu0 0
        %3414 = vmatpush1.bf16.msra.mxu0 %v3332
        %3415 = vmatprep.subr.bf16.mxu0 0
        %3416 = vmatpush1.bf16.msra.mxu0 %v3331
        %3417 = vmatprep.subr.bf16.mxu0 0
        %3418 = vmatpush1.bf16.msra.mxu0 %v3330
        %3419 = vmatprep.subr.bf16.mxu0 0
        %3420 = vmatpush1.bf16.msra.mxu0 %v3329
        %3421 = vmatprep.subr.bf16.mxu0 0
        %3422 = vmatpush1.bf16.msra.mxu0 %v3328
        %3423 = vmatprep.subr.bf16.mxu0 0
        %3424 = vmatpush1.bf16.msra.mxu0 %v3327
        %3425 = vmatprep.subr.bf16.mxu0 0
        %3426 = vmatpush1.bf16.msra.mxu0 %v3326
        %3427 = vmatprep.subr.bf16.mxu0 0
        %3428 = vmatpush1.bf16.msra.mxu0 %v3325
        %3429 = vmatprep.subr.bf16.mxu0 0
        %3430 = vmatpush2.bf16.msra.mxu0 %v3340
        %3431 = vmatprep.subr.bf16.mxu0 0
        %3432 = vmatpush2.bf16.msra.mxu0 %v3339
        %3433 = vmatprep.subr.bf16.mxu0 0
        %3434 = vmatpush2.bf16.msra.mxu0 %v3338
        %3435 = vmatprep.subr.bf16.mxu0 0
        %3436 = vmatpush2.bf16.msra.mxu0 %v3337
        %3437 = vmatprep.subr.bf16.mxu0 0
        %3438 = vmatpush2.bf16.msra.mxu0 %v3336
        %3439 = vmatprep.subr.bf16.mxu0 0
        %3440 = vmatpush2.bf16.msra.mxu0 %v3335
        %3441 = vmatprep.subr.bf16.mxu0 0
        %3442 = vmatpush2.bf16.msra.mxu0 %v3334
        %3443 = vmatprep.subr.bf16.mxu0 0
        %3444 = vmatpush2.bf16.msra.mxu0 %v3333
        %3445 = vmatprep.mubr.bf16.mxu0 %v3174
        %3446 = vmatmul.mubr.bf16.gmra.mxu0 %v3173
        %v3447 = vpop.f32.mrf.mxu0
        %v3448 = vadd.f32 %v3408, %v3447
        %v3449 = vpop.f32.mrf.mxu0
        %v3450 = vpop.f32.mrf.mxu0
        %v3451 = vpop.f32.mrf.mxu0
        %3452 = vdwg.mxu0
        %v3453 = vadd.f32 %v3448, %v2541
        %v3454 = vld [vmem:[%s18] sm:$0x1]
        %v3455 = vld [vmem:[%s19] sm:$0x1]
        %v3456 = vsel %vm1661, %v3453, 0.0
        %3457 = vadd.xlane.f32.xlu0 %v3456
        %v3458 = vpop.xlane.xlu0 %3457
        %v3459 = vmul.f32 %v3458, %v2517
        %v3460 = vsub.f32 %v3453, %v3459
        %v3461 = vmul.f32 %v3460, %v3460
        %v3462 = vsel %vm1661, %v3461, 0.0
        %3463 = vadd.xlane.f32.xlu0 %v3462
        %v3464 = vpop.xlane.xlu0 %3463
        %v3465 = vmul.f32 %v3464, %v2517
        %v3466 = vadd.f32 %v3465, 1e-12
        %v3467 = vrsqrt.pop %v3466
        %v3468 = vmul.f32 %v3460, %v3467
        %v3470 = vlaneseq
        %v3471 = vshrl.u32 %v3470, 7
        %v3472 = vsub.s32 0, %v3471
        %v3473 = vrot.slane %v3454, %v3472
        %v3475 = vmul.f32 %v3468, %v3473
        %v3477 = vlaneseq
        %v3478 = vshrl.u32 %v3477, 7
        %v3479 = vsub.s32 0, %v3478
        %v3480 = vrot.slane %v3455, %v3479
        %v3482 = vadd.f32 %v3475, %v3480
        %v3483 = vpack.c.bf16 %v3482, %v3482
        %v3484 = vld [vmem:[%s20] sm:$0xf]
        %v3485 = vld [vmem:[%s20 + $0x4] sm:$0xf]
        %v3486 = vld [vmem:[%s20 + $0x8] sm:$0xf]
        %v3487 = vld [vmem:[%s20 + $0xc] sm:$0xf]
        %v3488 = vld [vmem:[%s21] sm:$0x1]
        %v3490 = vlaneseq
        %v3491 = vshrl.u32 %v3490, 7
        %v3492 = vsub.s32 0, %v3491
        %v3493 = vrot.slane %v3488, %v3492
        %v3499 = vunpack.c.l.b16 %v3484
        %v3500 = vunpack.c.l.b16 %v3485
        %v3501 = vunpack.c.l.b16 %v3486
        %v3502 = vunpack.c.l.b16 %v3487
        %v3503 = vpack.c.b16 %v3500, %v3499
        %v3504 = vpack.c.b16 %v3502, %v3501
        %v3508 = vsel %vm1661, %v3483, 0
        %3510 = vmatprep.subr.bf16.mxu0 0
        %3511 = vmatpush1.bf16.msra.mxu0 0
        %3512 = vmatprep.subr.bf16.mxu0 0
        %3513 = vmatpush1.bf16.msra.mxu0 0
        %3514 = vmatprep.subr.bf16.mxu0 0
        %3515 = vmatpush1.bf16.msra.mxu0 0
        %3516 = vmatprep.subr.bf16.mxu0 0
        %3517 = vmatpush1.bf16.msra.mxu0 0
        %3518 = vmatprep.subr.bf16.mxu0 0
        %3519 = vmatpush1.bf16.msra.mxu0 0
        %3520 = vmatprep.subr.bf16.mxu0 0
        %3521 = vmatpush1.bf16.msra.mxu0 0
        %3522 = vmatprep.subr.bf16.mxu0 0
        %3523 = vmatpush1.bf16.msra.mxu0 %v3504
        %3524 = vmatprep.subr.bf16.mxu0 0
        %3525 = vmatpush1.bf16.msra.mxu0 %v3503
        %3526 = vmatprep.subr.bf16.mxu0 0
        %3527 = vmatpush2.bf16.msra.mxu0 0
        %3528 = vmatprep.subr.bf16.mxu0 0
        %3529 = vmatpush2.bf16.msra.mxu0 0
        %3530 = vmatprep.subr.bf16.mxu0 0
        %3531 = vmatpush2.bf16.msra.mxu0 0
        %3532 = vmatprep.subr.bf16.mxu0 0
        %3533 = vmatpush2.bf16.msra.mxu0 0
        %3534 = vmatprep.subr.bf16.mxu0 0
        %3535 = vmatpush2.bf16.msra.mxu0 0
        %3536 = vmatprep.subr.bf16.mxu0 0
        %3537 = vmatpush2.bf16.msra.mxu0 0
        %3538 = vmatprep.subr.bf16.mxu0 0
        %3539 = vmatpush2.bf16.msra.mxu0 0
        %3540 = vmatprep.subr.bf16.mxu0 0
        %3541 = vmatpush2.bf16.msra.mxu0 0
        %3542 = vmatprep.mubr.bf16.mxu0 0
        %3543 = vmatmul.mubr.bf16.gmra.mxu0 %v3508
        %v3544 = vpop.f32.mrf.mxu0
        %v3545 = vadd.f32 %v3493, %v3544
        %v3546 = vpop.f32.mrf.mxu0
        %v3547 = vpop.f32.mrf.mxu0
        %v3548 = vpop.f32.mrf.mxu0
        %3549 = vdwg.mxu0
        %v3550 = vmul.f32 %v3545, 0.5
        %v3551 = vmul.f32 %v3545, 0.70710677
        %v3552 = verf.f32.pop %v3551
        %v3553 = vadd.f32 %v3552, 1.0
        %v3554 = vmul.f32 %v3550, %v3553
        %v3555 = vpack.c.bf16 %v3554, %v3554
        %v3556 = vld [vmem:[%s22] sm:$0xf]
        %v3557 = vld [vmem:[%s22 + $0x4] sm:$0xf]
        %v3558 = vld [vmem:[%s22 + $0x8] sm:$0xf]
        %v3559 = vld [vmem:[%s22 + $0xc] sm:$0xf]
        %v3560 = vld [vmem:[%s22 + $0x10] sm:$0xf]
        %v3561 = vld [vmem:[%s22 + $0x14] sm:$0xf]
        %v3562 = vld [vmem:[%s22 + $0x18] sm:$0xf]
        %v3563 = vld [vmem:[%s22 + $0x1c] sm:$0xf]
        %v3564 = vld [vmem:[%s23] sm:$0x1]
        %v3566 = vlaneseq
        %v3567 = vshrl.u32 %v3566, 7
        %v3568 = vsub.s32 0, %v3567
        %v3569 = vrot.slane %v3564, %v3568
        %v3579 = vunpack.c.l.b16 %v3556
        %v3580 = vunpack.c.l.b16 %v3557
        %v3581 = vunpack.c.l.b16 %v3558
        %v3582 = vunpack.c.l.b16 %v3559
        %v3583 = vunpack.c.l.b16 %v3560
        %v3584 = vunpack.c.l.b16 %v3561
        %v3585 = vunpack.c.l.b16 %v3562
        %v3586 = vunpack.c.l.b16 %v3563
        %v3587 = vpack.c.b16 %v3580, %v3579
        %v3588 = vpack.c.b16 %v3582, %v3581
        %v3589 = vpack.c.b16 %v3584, %v3583
        %v3590 = vpack.c.b16 %v3586, %v3585
        %vm3595 = vcmask 523264
        %v3597 = vsel %vm3595, %v3555, 0
        %3599 = vmatprep.subr.bf16.mxu0 0
        %3600 = vmatpush1.bf16.msra.mxu0 0
        %3601 = vmatprep.subr.bf16.mxu0 0
        %3602 = vmatpush1.bf16.msra.mxu0 0
        %3603 = vmatprep.subr.bf16.mxu0 0
        %3604 = vmatpush1.bf16.msra.mxu0 0
        %3605 = vmatprep.subr.bf16.mxu0 0
        %3606 = vmatpush1.bf16.msra.mxu0 0
        %3607 = vmatprep.subr.bf16.mxu0 0
        %3608 = vmatpush1.bf16.msra.mxu0 %v3590
        %3609 = vmatprep.subr.bf16.mxu0 0
        %3610 = vmatpush1.bf16.msra.mxu0 %v3589
        %3611 = vmatprep.subr.bf16.mxu0 0
        %3612 = vmatpush1.bf16.msra.mxu0 %v3588
        %3613 = vmatprep.subr.bf16.mxu0 0
        %3614 = vmatpush1.bf16.msra.mxu0 %v3587
        %3615 = vmatprep.subr.bf16.mxu0 0
        %3616 = vmatpush2.bf16.msra.mxu0 0
        %3617 = vmatprep.subr.bf16.mxu0 0
        %3618 = vmatpush2.bf16.msra.mxu0 0
        %3619 = vmatprep.subr.bf16.mxu0 0
        %3620 = vmatpush2.bf16.msra.mxu0 0
        %3621 = vmatprep.subr.bf16.mxu0 0
        %3622 = vmatpush2.bf16.msra.mxu0 0
        %3623 = vmatprep.subr.bf16.mxu0 0
        %3624 = vmatpush2.bf16.msra.mxu0 0
        %3625 = vmatprep.subr.bf16.mxu0 0
        %3626 = vmatpush2.bf16.msra.mxu0 0
        %3627 = vmatprep.subr.bf16.mxu0 0
        %3628 = vmatpush2.bf16.msra.mxu0 0
        %3629 = vmatprep.subr.bf16.mxu0 0
        %3630 = vmatpush2.bf16.msra.mxu0 0
        %3631 = vmatprep.mubr.bf16.mxu0 0
        %3632 = vmatmul.mubr.bf16.gmra.mxu0 %v3597
        %v3633 = vpop.f32.mrf.mxu0
        %v3634 = vadd.f32 %v3569, %v3633
        %v3635 = vpop.f32.mrf.mxu0
        %v3636 = vpop.f32.mrf.mxu0
        %v3637 = vpop.f32.mrf.mxu0
        %3638 = vdwg.mxu0
        %v3639 = vadd.f32 %v3634, %v3482
        %v3640 = vld [vmem:[%s24] sm:$0x1]
        %v3641 = vld [vmem:[%s25] sm:$0x1]
        %v3642 = vsel %vm1661, %v3639, 0.0
        %3643 = vadd.xlane.f32.xlu0 %v3642
        %v3644 = vpop.xlane.xlu0 %3643
        %v3645 = vmul.f32 %v3644, %v2517
        %v3646 = vsub.f32 %v3639, %v3645
        %v3647 = vmul.f32 %v3646, %v3646
        %v3648 = vsel %vm1661, %v3647, 0.0
        %3649 = vadd.xlane.f32.xlu0 %v3648
        %v3650 = vpop.xlane.xlu0 %3649
        %v3651 = vmul.f32 %v3650, %v2517
        %v3652 = vadd.f32 %v3651, 1e-12
        %v3653 = vrsqrt.pop %v3652
        %v3654 = vmul.f32 %v3646, %v3653
        %v3656 = vlaneseq
        %v3657 = vshrl.u32 %v3656, 7
        %v3658 = vsub.s32 0, %v3657
        %v3659 = vrot.slane %v3640, %v3658
        %v3661 = vmul.f32 %v3654, %v3659
        %v3663 = vlaneseq
        %v3664 = vshrl.u32 %v3663, 7
        %v3665 = vsub.s32 0, %v3664
        %v3666 = vrot.slane %v3641, %v3665
        %v3668 = vadd.f32 %v3661, %v3666
        %3669 = vst.msk [vmem:[%s903] sm:$0xff] %vm1661, %v3668
        %s3670 = sand.u32 %s636, 1
        %s3671 = scalar_lea.sflag [#allocation5], %s3670
        %s3672 = sand.u32 %s636, 1
        %s3673 = smul.addr %s3672, 8
        %s3674 = scalar_lea.vmem [#allocation4], %s3673
        %s3675 = sand.u32 %s46, 1
        %s3676 = scalar_lea.sflag [#allocation7], %s3675
        %s3677 = sand.u32 %s664, 1
        %s3678 = smul.addr %s3677, 16
        %s3679 = scalar_lea.vmem [#allocation6], %s3678
        %s3680 = sand.u32 %s46, 1
        %s3681 = scalar_lea.sflag [#allocation7], %s3680
        %s3682 = sand.u32 %s692, 1
        %s3683 = smul.addr %s3682, 16
        %s3684 = scalar_lea.vmem [#allocation8], %s3683
        // Predicated region
        $region129: #{tpu_custom_call.1} parent=123 // pred_check
          %p3685 = pneg %p646
        $region130: #{tpu_custom_call.1} parent=123 // pred_check_branch
          %3687 = sbr.rel (%p3685) target = $region132
        $region131: #{tpu_custom_call.1} parent=123 // pred_region
          %s3689 = ssub.s32 128, 128
          %3690 = vsyncadd %s3671, %s3689
          %s3691 = sadd.s32 %s51, %s50
          %s3692 = smul.addr %s3691, 128
          %s3693 = scalar_lea.hbm %s26, %s3692
          %s3695 = sshll.u32 %s3674, 4
          %s3696 = int_to_ptr.vmem [resolvable:$true] %s3695
          %3698 = dma.vmem_to_hbm [thread:$0]  %s3696, 128, %s3693, %s3671
        $region132: #{tpu_custom_call.1} parent=123 // pred_fallthru
          _
        // Predicated region
        $region133: #{tpu_custom_call.1} parent=123 // pred_check
          %p3699 = pneg %p674
        $region134: #{tpu_custom_call.1} parent=123 // pred_check_branch
          %3701 = sbr.rel (%p3699) target = $region136
        $region135: #{tpu_custom_call.1} parent=123 // pred_region
          %s3703 = ssub.s32 256, 256
          %3704 = vsyncadd %s3676, %s3703
          %s3705 = smul.addr %s50, 4
          %s3706 = sadd.s32 %s51, %s3705
          %s3707 = smul.addr %s3706, 64
          %s3708 = scalar_lea.hbm %s27, %s3707
          %s3709 = sshll.u32 %s3679, 4
          %s3710 = int_to_ptr.vmem [resolvable:$true] %s3709
          %3715 = dma.vmem_to_hbm [thread:$0]  %s3710, 256, %s3708, %s3676, 64, 64, 4
        $region136: #{tpu_custom_call.1} parent=123 // pred_fallthru
          _
        // Predicated region
        $region137: #{tpu_custom_call.1} parent=123 // pred_check
          %p3716 = pneg %p702
        $region138: #{tpu_custom_call.1} parent=123 // pred_check_branch
          %3718 = sbr.rel (%p3716) target = $region140
        $region139: #{tpu_custom_call.1} parent=123 // pred_region
          %s3720 = ssub.s32 256, 256
          %3721 = vsyncadd %s3681, %s3720
          %s3722 = smul.addr %s50, 4
          %s3723 = sadd.s32 %s51, %s3722
          %s3724 = smul.addr %s3723, 64
          %s3725 = scalar_lea.hbm %s28, %s3724
          %s3726 = sshll.u32 %s3684, 4
          %s3727 = int_to_ptr.vmem [resolvable:$true] %s3726
          %3732 = dma.vmem_to_hbm [thread:$0]  %s3727, 256, %s3725, %s3681, 64, 64, 4
        $region140: #{tpu_custom_call.1} parent=123 // pred_fallthru
          _
      $region124: #{tpu_custom_call.1} parent=5 // pred_fallthru
        _
      %p3733 = scmp.le.s32.totalorder 2, %s41
      // Predicated region
      $region141: #{tpu_custom_call.1} parent=5 // pred_check
        %p3734 = pneg %p3733
      $region142: #{tpu_custom_call.1} parent=5 // pred_check_branch
        %3736 = sbr.rel (%p3734) target = $region144
      $region143: #{tpu_custom_call.1} parent=5 // pred_region
        %s3737 = ssub.s32 %s41, 2
        // Predicated region
        $region145: #{tpu_custom_call.1} parent=143 // pred_check
          %p3738 = pneg %p652
        $region146: #{tpu_custom_call.1} parent=143 // pred_check_branch
          %3740 = sbr.rel (%p3738) target = $region148
        $region147: #{tpu_custom_call.1} parent=143 // pred_region
          %s3741 = sand.u32 %s637, 1
          %s3742 = scalar_lea.sflag [#allocation5], %s3741
          %s3743 = sand.u32 %s637, 1
          %s3744 = smul.addr %s3743, 8
          %s3745 = scalar_lea.vmem [#allocation4], %s3744
          %3746 = dma.done %s3742, 128
        $region148: #{tpu_custom_call.1} parent=143 // pred_fallthru
          _
        // Predicated region
        $region149: #{tpu_custom_call.1} parent=143 // pred_check
          %p3747 = pneg %p680
        $region150: #{tpu_custom_call.1} parent=143 // pred_check_branch
          %3749 = sbr.rel (%p3747) target = $region152
        $region151: #{tpu_custom_call.1} parent=143 // pred_region
          %s3750 = sand.u32 %s47, 1
          %s3751 = scalar_lea.sflag [#allocation7], %s3750
          %s3752 = sand.u32 %s665, 1
          %s3753 = smul.addr %s3752, 16
          %s3754 = scalar_lea.vmem [#allocation6], %s3753
          %3755 = dma.done %s3751, 256
        $region152: #{tpu_custom_call.1} parent=143 // pred_fallthru
          _
        // Predicated region
        $region153: #{tpu_custom_call.1} parent=143 // pred_check
          %p3756 = pneg %p708
        $region154: #{tpu_custom_call.1} parent=143 // pred_check_branch
          %3758 = sbr.rel (%p3756) target = $region156
        $region155: #{tpu_custom_call.1} parent=143 // pred_region
          %s3759 = sand.u32 %s47, 1
          %s3760 = scalar_lea.sflag [#allocation7], %s3759
          %s3761 = sand.u32 %s693, 1
          %s3762 = smul.addr %s3761, 16
          %s3763 = scalar_lea.vmem [#allocation8], %s3762
          %3764 = dma.done %s3760, 256
        $region156: #{tpu_custom_call.1} parent=143 // pred_fallthru
          _
      $region144: #{tpu_custom_call.1} parent=5 // pred_fallthru
        _
    $region6: #{tpu_custom_call.1} parent=1 // loop_footer
      %s45 = sadd.s32 1, %s41
    $region7: #{tpu_custom_call.1} parent=1 // loop_footer_branch
      %40 = sbr.rel target = $region3
    $region8: #{tpu_custom_call.1} parent=1 // loop_exit
      _
    %3765 = vsyncpa [#allocation5], 1
    %s3766 = scalar_lea.sflag [#allocation5], 1
    %3767 = vsyncpa %s3766, 1
    %3768 = vsyncpa [#allocation7], 1
    %s3769 = scalar_lea.sflag [#allocation7], 1
    %3770 = vsyncpa %s3769, 1

</llo_original>
